<compile_context>
chip_gen: v5e
topology: v5e:2x2
jax: 0.10.0
libtpu: 0.0.40
codegen_flags: <defaults>
</compile_context>

<pallas_src>
import functools

import jax
import jax.numpy as jnp
import numpy as np
from jax.experimental import pallas as pl
from jax.experimental.pallas import tpu as pltpu

# ---- module hyper-parameters (small, consistent with CConvSA) ----
OBS = 8          # observation_space
HIDDEN = 32      # hidden_size (kept small for the test)
ACT = 1          # action_space

K1, S1 = 4, 2    # Conv1d(1, C, kernel_size=4, stride=2)
K2 = 3           # Conv1d(C, C, kernel_size=3, stride=1)
POOL = 2         # MaxPool1d(kernel_size=2, stride=2)

H2 = HIDDEN * 2                   # 64
C = HIDDEN                        # 32
L1 = (HIDDEN - K1) // S1 + 1      # 15
L2 = L1 - K2 + 1                  # 13
L3 = L2 // POOL                   # 6
CONV_OUT = C * L3                 # 192 (== _get_seq_out(conv, hidden_size))

# lane-aligned padded widths used by the kernel
L1C_PAD = 512                     # L1*C = 480 -> 512   (conv1 output slab)
HALF = 256                        # L3*C = 192 -> 256   (one pooled half)
O2_PAD = 2 * HALF                 # 512                 (conv2 slab: [even|odd])
OUT_PAD = 128                     # fc3 output padded to one full lane tile

NEG_SLOPE = 0.01
TB = 128                          # batch tile (sweep 128/256/512); multiple of 8
CONV_DTYPE = jnp.bfloat16         # MXU input dtype for the two big conv matmuls


def _leaky(x):
    return jnp.where(x > 0, x, NEG_SLOPE * x)


def _round_up(x, m):
    return ((x + m - 1) // m) * m


# ------------------------------ Pallas kernel ------------------------------
def cconvsa_kernel(sa_ref,
                   w1_ref, b1_ref,
                   w2a_ref, w2b_ref, b2_ref,
                   wc1u_ref, bc1u_ref,
                   wc2u_ref, bc2u_ref,
                   w3_ref, b3_ref,
                   out_ref):
    sa = sa_ref[...]                       # (TB, OBS+ACT): single input DMA
    state = sa[:, :OBS]                    # (TB, OBS)
    action = sa[:, OBS:]                   # (TB, ACT), ACT == 1

    # fc1 + LeakyReLU
    h1 = _leaky(jnp.dot(state, w1_ref[...],
                        preferred_element_type=jnp.float32) + b1_ref[...])

    # cat((h1, action), dim=1) @ W2.T == h1 @ W2a + action * w2b   (ACT == 1,
    # so the degenerate K=1 matmul becomes a VPU broadcast multiply).
    h2 = _leaky(jnp.dot(h1, w2a_ref[...], preferred_element_type=jnp.float32)
                + action * w2b_ref[...]
                + b2_ref[...])                                    # (TB, C)

    # conv1 as ONE lane-dense matmul against the Toeplitz-unrolled weight,
    # position-major / channel-minor slab padded to 512 lanes.  bf16 MXU
    # inputs, f32 accumulation; padded columns stay exactly zero.
    o1 = _leaky(jnp.dot(h2.astype(wc1u_ref.dtype), wc1u_ref[...],
                        preferred_element_type=jnp.float32) + bc1u_ref[...])
    # (BatchNorm1d #1 is folded into wc2u/bc2u; Dropout is identity in eval.)

    # conv2 as ONE unrolled matmul.  Output columns: [even pool positions
    # (padded to 256) | odd pool positions (padded to 256)]; the never-pooled
    # last conv2 position is not computed at all.                (TB, 512)
    o2 = jnp.dot(o1.astype(wc2u_ref.dtype), wc2u_ref[...],
                 preferred_element_type=jnp.float32) + bc2u_ref[...]

    # MaxPool1d(2,2) == element-wise max of the two lane-aligned halves,
    # then LeakyReLU.  Pad lanes are 0 on both sides -> stay 0.
    pooled = _leaky(jnp.maximum(o2[:, :HALF], o2[:, HALF:]))      # (TB, 256)
    # (BatchNorm1d #2 is folded into w3/b3.)

    # fc3 on the pooled slab; weight is zero-padded to 128 output columns so
    # the store below is a full-lane unmasked vst.
    out_ref[...] = jnp.dot(pooled, w3_ref[...],
                           preferred_element_type=jnp.float32) + b3_ref[...]


# --------------------------- parameter construction ---------------------------
def make_raw_params(key):
    """Parameters in PyTorch layouts (used directly by the reference)."""
    ks = jax.random.split(key, 14)

    def u(k, shape, scale):
        return jax.random.uniform(k, shape, jnp.float32, -scale, scale)

    return dict(
        w1=u(ks[0], (H2, OBS), OBS ** -0.5),           # Linear: (out, in)
        b1=u(ks[1], (H2,), OBS ** -0.5),
        w2=u(ks[2], (HIDDEN, H2 + ACT), (H2 + ACT) ** -0.5),
        b2=u(ks[3], (HIDDEN,), (H2 + ACT) ** -0.5),
        wc1=u(ks[4], (C, 1, K1), (1 * K1) ** -0.5),    # Conv1d: (out, in, k)
        bc1=u(ks[5], (C,), (1 * K1) ** -0.5),
        wc2=u(ks[6], (C, C, K2), (C * K2) ** -0.5),
        bc2=u(ks[7], (C,), (C * K2) ** -0.5),
        g1=1.0 + 0.1 * u(ks[8], (C,), 1.0),
        be1=0.1 * u(ks[9], (C,), 1.0),
        g2=1.0 + 0.1 * u(ks[10], (C,), 1.0),
        be2=0.1 * u(ks[11], (C,), 1.0),
        w3=u(ks[12], (1, CONV_OUT), CONV_OUT ** -0.5),
        b3=u(ks[13], (1,), CONV_OUT ** -0.5),
        rm1=jnp.zeros((C,)), rv1=jnp.ones((C,)),       # BN running stats
        rm2=jnp.zeros((C,)), rv2=jnp.ones((C,)),
    )


def fold_params(p, conv_dtype=CONV_DTYPE):
    """Wrapper-side precompute: BN folding, conv unrolling, lane padding."""
    eps = 1e-5
    g1 = np.asarray(p["g1"], np.float32); rv1 = np.asarray(p["rv1"], np.float32)
    g2 = np.asarray(p["g2"], np.float32); rv2 = np.asarray(p["rv2"], np.float32)
    s1 = g1 / np.sqrt(rv1 + eps)
    t1 = np.asarray(p["be1"], np.float32) - np.asarray(p["rm1"], np.float32) * s1
    s2 = g2 / np.sqrt(rv2 + eps)
    t2 = np.asarray(p["be2"], np.float32) - np.asarray(p["rm2"], np.float32) * s2

    # fc1 / fc2 in feature-last layout.
    w1 = jnp.transpose(p["w1"])                # (OBS, H2)
    b1 = p["b1"][None, :]                      # (1, H2)
    w2 = jnp.transpose(p["w2"])                # (H2+ACT, HIDDEN)
    w2a, w2b = w2[:H2], w2[H2:]                # (H2, C), (ACT, C)
    b2 = p["b2"][None, :]

    # ---- conv1 -> Toeplitz-unrolled (HIDDEN, 512), position-major columns ----
    wc1_kc = np.asarray(p["wc1"], np.float32)[:, 0, :].T          # (K1, C)
    wc1u = np.zeros((HIDDEN, L1C_PAD), np.float32)
    for j in range(L1):
        wc1u[S1 * j:S1 * j + K1, j * C:(j + 1) * C] = wc1_kc
    bc1u = np.zeros((1, L1C_PAD), np.float32)
    bc1u[0, :L1 * C] = np.tile(np.asarray(p["bc1"], np.float32), L1)

    # ---- conv2 with BN1 folded, unrolled to (512, 512) ----
    wc2_kio = np.transpose(np.asarray(p["wc2"], np.float32), (2, 1, 0))  # (K2,Cin,Cout)
    wc2_f = wc2_kio * s1[None, :, None]                            # scale input ch.
    bc2_f = (np.asarray(p["bc2"], np.float32)
             + sum(t1 @ wc2_kio[k] for k in range(K2))).astype(np.float32)

    # Column layout: [even conv2 positions (cols 0:192, pad to 256) |
    #                 odd conv2 positions (cols 256:448, pad to 512)].
    # The last conv2 position (never used by MaxPool) is dropped; pad rows/cols
    # stay zero so padded o1 lanes contribute nothing.
    wc2u = np.zeros((L1C_PAD, O2_PAD), np.float32)
    bc2u = np.zeros((1, O2_PAD), np.float32)
    for half, parity in enumerate((0, 1)):
        for idx in range(L3):
            pos = 2 * idx + parity
            col0 = half * HALF + idx * C
            for k in range(K2):
                wc2u[(pos + k) * C:(pos + k + 1) * C, col0:col0 + C] = wc2_f[k]
            bc2u[0, col0:col0 + C] = bc2_f

    # ---- fc3 with BN2 folded; PyTorch flattens (B, C, L3) channel-major, our
    #      slab is position-major channel-minor -> reorder; pad to (256, 128)
    #      so the kernel's output store is lane-dense. ----
    w3_cm = np.asarray(p["w3"], np.float32).reshape(C, L3)         # (C, L3)
    w3u = np.zeros((HALF, OUT_PAD), np.float32)
    w3u[:L3 * C, 0] = (w3_cm.T * s2[None, :]).reshape(L3 * C)
    b3u = np.zeros((1, OUT_PAD), np.float32)
    b3u[0, 0] = float(np.asarray(p["b3"], np.float32)[0]
                      + np.sum(t2[:, None] * w3_cm, dtype=np.float64))

    return dict(w1=w1, b1=b1, w2a=w2a, w2b=w2b, b2=b2,
                wc1u=jnp.asarray(wc1u, conv_dtype), bc1u=jnp.asarray(bc1u),
                wc2u=jnp.asarray(wc2u, conv_dtype), bc2u=jnp.asarray(bc2u),
                w3=jnp.asarray(w3u), b3=jnp.asarray(b3u))


# ------------------------------ wrapper / launch ------------------------------
@functools.partial(jax.jit, static_argnames=("batch_tile",))
def cconvsa_forward(state, action, fp, batch_tile=TB):
    assert batch_tile % 8 == 0
    bsz = state.shape[0]

    # Single concatenated input -> one per-step input DMA instead of two.
    sa = jnp.concatenate([state, action], axis=1)          # (B, OBS+ACT)

    # Effective tile: never larger than the (8-rounded) batch, so small batches
    # don't pay for a zero-padded 128-row tile; stays a multiple of 8.  Pick
    # batch sizes divisible by batch_tile to skip the ragged-pad copy entirely.
    eff_tb = min(batch_tile, _round_up(bsz, 8))
    n_tiles = pl.cdiv(bsz, eff_tb)
    padded = n_tiles * eff_tb
    if padded != bsz:
        sa = jnp.pad(sa, ((0, padded - bsz), (0, 0)))

    weights = (fp["w1"], fp["b1"], fp["w2a"], fp["w2b"], fp["b2"],
               fp["wc1u"], fp["bc1u"], fp["wc2u"], fp["bc2u"],
               fp["w3"], fp["b3"])

    def full_spec(arr):                   # resident weight (constant index map)
        return pl.BlockSpec(arr.shape, lambda i: (0, 0))

    out = pl.pallas_call(
        cconvsa_kernel,
        out_shape=jax.ShapeDtypeStruct((padded, OUT_PAD), jnp.float32),
        grid_spec=pltpu.PrefetchScalarGridSpec(
            num_scalar_prefetch=0,
            grid=(n_tiles,),
            in_specs=[pl.BlockSpec((eff_tb, OBS + ACT), lambda i: (i, 0))]
                     + [full_spec(w) for w in weights],
            out_specs=pl.BlockSpec((eff_tb, OUT_PAD), lambda i: (i, 0)),
        ),
        compiler_params=pltpu.CompilerParams(
            dimension_semantics=("parallel",),      # shards batch across TCs on v7x
            vmem_limit_bytes=32 * 1024 * 1024,      # raises v5e's 16 MiB default
        ),
    )(sa, *weights)
    return out[:bsz, :1]                 # only column 0 is the real fc3 output


# ------------------------- pure-JAX reference check -------------------------
def cconvsa_ref(state, action, p):
    """Un-fused reference implementing the original module order (eval mode)."""
    eps = 1e-5
    h1 = _leaky(state @ p["w1"].T + p["b1"])
    h2 = _leaky(jnp.concatenate([h1, action], axis=1) @ p["w2"].T + p["b2"])
    x = h2[:, None, :]                                        # (B, 1, HIDDEN)
    # Conv1d(1, C, k=4, s=2) -> LeakyReLU -> BN1 (eval) -> Dropout(id)
    o1 = jnp.stack(
        [jnp.einsum("bw,cw->bc", x[:, 0, S1 * j:S1 * j + K1], p["wc1"][:, 0, :])
         for j in range(L1)], axis=2) + p["bc1"][None, :, None]   # (B, C, L1)
    o1 = _leaky(o1)
    s1 = p["g1"] / jnp.sqrt(p["rv1"] + eps)
    o1 = o1 * s1[None, :, None] + (p["be1"] - p["rm1"] * s1)[None, :, None]
    # Conv1d(C, C, k=3, s=1)
    o2 = jnp.stack(
        [jnp.einsum("bcw,dcw->bd", o1[:, :, j:j + K2], p["wc2"])
         for j in range(L2)], axis=2) + p["bc2"][None, :, None]   # (B, C, L2)
    # MaxPool1d(2,2) -> LeakyReLU -> BN2 (eval) -> Dropout(id)
    pooled = jnp.maximum(o2[:, :, 0:2 * L3:2], o2[:, :, 1:2 * L3:2])
    pooled = _leaky(pooled)
    s2 = p["g2"] / jnp.sqrt(p["rv2"] + eps)
    pooled = pooled * s2[None, :, None] + (p["be2"] - p["rm2"] * s2)[None, :, None]
    flat = pooled.reshape(pooled.shape[0], -1)                    # channel-major
    return flat @ p["w3"].T + p["b3"][None, :]


if __name__ == "__main__":
    key = jax.random.PRNGKey(0)
    k_s, k_a, k_p = jax.random.split(key, 3)

    raw = make_raw_params(k_p)
    fp = fold_params(raw)

    # Main check: batch fills the 128-row tile and yields 2 grid steps
    # (keeps both v7x TensorCores busy), with no ragged padding.
    BATCH = 256
    state = jax.random.normal(k_s, (BATCH, OBS), jnp.float32)
    action = jax.random.normal(k_a, (BATCH, ACT), jnp.float32)

    out = cconvsa_forward(state, action, fp)
    jax.block_until_ready(out)

    ref = cconvsa_ref(state, action, raw)
    assert out.shape == (BATCH, 1), out.shape
    assert jnp.allclose(out, ref, atol=5e-2, rtol=5e-2), \
        float(jnp.max(jnp.abs(out - ref)))

    # Secondary check: small ragged batch exercises the shrunken-tile path.
    out_small = cconvsa_forward(state[:20], action[:20], fp)
    jax.block_until_ready(out_small)
    assert jnp.allclose(out_small, ref[:20], atol=5e-2, rtol=5e-2), \
        float(jnp.max(jnp.abs(out_small - ref[:20])))

    print("KERNEL_OK")
</pallas_src>

<mosaic_0001>
module attributes {stable_mosaic.version = 11 : i64} {
  func.func @cconvsa_kernel(%arg0: i32, %arg1: memref<128x9xf32, #tpu.memory_space<vmem>>, %arg2: memref<8x64xf32, #tpu.memory_space<vmem>>, %arg3: memref<1x64xf32, #tpu.memory_space<vmem>>, %arg4: memref<64x32xf32, #tpu.memory_space<vmem>>, %arg5: memref<1x32xf32, #tpu.memory_space<vmem>>, %arg6: memref<1x32xf32, #tpu.memory_space<vmem>>, %arg7: memref<32x512xbf16, #tpu.memory_space<vmem>>, %arg8: memref<1x512xf32, #tpu.memory_space<vmem>>, %arg9: memref<512x512xbf16, #tpu.memory_space<vmem>>, %arg10: memref<1x512xf32, #tpu.memory_space<vmem>>, %arg11: memref<256x128xf32, #tpu.memory_space<vmem>>, %arg12: memref<1x128xf32, #tpu.memory_space<vmem>>, %arg13: memref<128x128xf32, #tpu.memory_space<vmem>>) attributes {dimension_semantics = [#tpu.dimension_semantics<parallel>], iteration_bounds = array<i64: 2>, scalar_prefetch = 0 : i64, scratch_operands = 0 : i64, tpu.core_type = #tpu.core_type<tc>, window_params = [{transform_indices = @transform_0, window_bounds = array<i64: 128, 9>}, {pipeline_mode = #tpu.pipeline_mode<synchronous>, transform_indices = @transform_1, window_bounds = array<i64: 8, 64>}, {pipeline_mode = #tpu.pipeline_mode<synchronous>, transform_indices = @transform_2, window_bounds = array<i64: 1, 64>}, {pipeline_mode = #tpu.pipeline_mode<synchronous>, transform_indices = @transform_3, window_bounds = array<i64: 64, 32>}, {pipeline_mode = #tpu.pipeline_mode<synchronous>, transform_indices = @transform_4, window_bounds = array<i64: 1, 32>}, {pipeline_mode = #tpu.pipeline_mode<synchronous>, transform_indices = @transform_5, window_bounds = array<i64: 1, 32>}, {pipeline_mode = #tpu.pipeline_mode<synchronous>, transform_indices = @transform_6, window_bounds = array<i64: 32, 512>}, {pipeline_mode = #tpu.pipeline_mode<synchronous>, transform_indices = @transform_7, window_bounds = array<i64: 1, 512>}, {pipeline_mode = #tpu.pipeline_mode<synchronous>, transform_indices = @transform_8, window_bounds = array<i64: 512, 512>}, {pipeline_mode = #tpu.pipeline_mode<synchronous>, transform_indices = @transform_9, window_bounds = array<i64: 1, 512>}, {pipeline_mode = #tpu.pipeline_mode<synchronous>, transform_indices = @transform_10, window_bounds = array<i64: 256, 128>}, {pipeline_mode = #tpu.pipeline_mode<synchronous>, transform_indices = @transform_11, window_bounds = array<i64: 1, 128>}, {transform_indices = @transform_12, window_bounds = array<i64: 128, 128>}]} {
    %c0 = arith.constant 0 : index
    %c0_0 = arith.constant 0 : index
    %0 = vector.load %arg1[%c0, %c0_0] : memref<128x9xf32, #tpu.memory_space<vmem>>, vector<128x9xf32>
    %1 = vector.extract_strided_slice %0 {offsets = [0, 0], sizes = [128, 8], strides = [1, 1]} : vector<128x9xf32> to vector<128x8xf32>
    %2 = vector.extract_strided_slice %0 {offsets = [0, 8], sizes = [128, 1], strides = [1, 1]} : vector<128x9xf32> to vector<128x1xf32>
    %c0_1 = arith.constant 0 : index
    %c0_2 = arith.constant 0 : index
    %3 = vector.load %arg2[%c0_1, %c0_2] : memref<8x64xf32, #tpu.memory_space<vmem>>, vector<8x64xf32>
    %cst = arith.constant dense<0.000000e+00> : vector<128x64xf32>
    %4 = tpu.matmul %1, %3, %cst {dimension_numbers = #tpu.dot_dimension_numbers<[1], [0], [0], [1], [0, 0, 1, 1], [], []>} : vector<128x8xf32>, vector<8x64xf32>, vector<128x64xf32> -> vector<128x64xf32>
    %c0_3 = arith.constant 0 : index
    %c0_4 = arith.constant 0 : index
    %5 = vector.load %arg3[%c0_3, %c0_4] : memref<1x64xf32, #tpu.memory_space<vmem>>, vector<1x64xf32>
    %6 = vector.broadcast %5 : vector<1x64xf32> to vector<128x64xf32>
    %7 = arith.addf %4, %6 : vector<128x64xf32>
    %cst_5 = arith.constant 0.000000e+00 : f32
    %8 = vector.broadcast %cst_5 : f32 to vector<128x64xf32>
    %9 = arith.cmpf ogt, %7, %8 : vector<128x64xf32>
    %cst_6 = arith.constant 0.00999999977 : f32
    %10 = vector.broadcast %cst_6 : f32 to vector<128x64xf32>
    %11 = arith.mulf %10, %7 : vector<128x64xf32>
    %12 = arith.select %9, %7, %11 : vector<128x64xi1>, vector<128x64xf32>
    %c0_7 = arith.constant 0 : index
    %c0_8 = arith.constant 0 : index
    %13 = vector.load %arg4[%c0_7, %c0_8] : memref<64x32xf32, #tpu.memory_space<vmem>>, vector<64x32xf32>
    %cst_9 = arith.constant dense<0.000000e+00> : vector<128x32xf32>
    %14 = tpu.matmul %12, %13, %cst_9 {dimension_numbers = #tpu.dot_dimension_numbers<[1], [0], [0], [1], [0, 0, 1, 1], [], []>} : vector<128x64xf32>, vector<64x32xf32>, vector<128x32xf32> -> vector<128x32xf32>
    %c0_10 = arith.constant 0 : index
    %c0_11 = arith.constant 0 : index
    %15 = vector.load %arg5[%c0_10, %c0_11] : memref<1x32xf32, #tpu.memory_space<vmem>>, vector<1x32xf32>
    %16 = vector.broadcast %2 : vector<128x1xf32> to vector<128x32xf32>
    %17 = vector.broadcast %15 : vector<1x32xf32> to vector<128x32xf32>
    %18 = arith.mulf %16, %17 : vector<128x32xf32>
    %19 = arith.addf %14, %18 : vector<128x32xf32>
    %c0_12 = arith.constant 0 : index
    %c0_13 = arith.constant 0 : index
    %20 = vector.load %arg6[%c0_12, %c0_13] : memref<1x32xf32, #tpu.memory_space<vmem>>, vector<1x32xf32>
    %21 = vector.broadcast %20 : vector<1x32xf32> to vector<128x32xf32>
    %22 = arith.addf %19, %21 : vector<128x32xf32>
    %cst_14 = arith.constant 0.000000e+00 : f32
    %23 = vector.broadcast %cst_14 : f32 to vector<128x32xf32>
    %24 = arith.cmpf ogt, %22, %23 : vector<128x32xf32>
    %cst_15 = arith.constant 0.00999999977 : f32
    %25 = vector.broadcast %cst_15 : f32 to vector<128x32xf32>
    %26 = arith.mulf %25, %22 : vector<128x32xf32>
    %27 = arith.select %24, %22, %26 : vector<128x32xi1>, vector<128x32xf32>
    %28 = arith.truncf %27 : vector<128x32xf32> to vector<128x32xbf16>
    %c0_16 = arith.constant 0 : index
    %c0_17 = arith.constant 0 : index
    %29 = vector.load %arg7[%c0_16, %c0_17] : memref<32x512xbf16, #tpu.memory_space<vmem>>, vector<32x512xbf16>
    %cst_18 = arith.constant dense<0.000000e+00> : vector<128x512xf32>
    %30 = tpu.matmul %28, %29, %cst_18 {dimension_numbers = #tpu.dot_dimension_numbers<[1], [0], [0], [1], [0, 0, 1, 1], [], []>} : vector<128x32xbf16>, vector<32x512xbf16>, vector<128x512xf32> -> vector<128x512xf32>
    %c0_19 = arith.constant 0 : index
    %c0_20 = arith.constant 0 : index
    %31 = vector.load %arg8[%c0_19, %c0_20] : memref<1x512xf32, #tpu.memory_space<vmem>>, vector<1x512xf32>
    %32 = vector.broadcast %31 : vector<1x512xf32> to vector<128x512xf32>
    %33 = arith.addf %30, %32 : vector<128x512xf32>
    %cst_21 = arith.constant 0.000000e+00 : f32
    %34 = vector.broadcast %cst_21 : f32 to vector<128x512xf32>
    %35 = arith.cmpf ogt, %33, %34 : vector<128x512xf32>
    %cst_22 = arith.constant 0.00999999977 : f32
    %36 = vector.broadcast %cst_22 : f32 to vector<128x512xf32>
    %37 = arith.mulf %36, %33 : vector<128x512xf32>
    %38 = arith.select %35, %33, %37 : vector<128x512xi1>, vector<128x512xf32>
    %39 = arith.truncf %38 : vector<128x512xf32> to vector<128x512xbf16>
    %c0_23 = arith.constant 0 : index
    %c0_24 = arith.constant 0 : index
    %40 = vector.load %arg9[%c0_23, %c0_24] : memref<512x512xbf16, #tpu.memory_space<vmem>>, vector<512x512xbf16>
    %cst_25 = arith.constant dense<0.000000e+00> : vector<128x512xf32>
    %41 = tpu.matmul %39, %40, %cst_25 {dimension_numbers = #tpu.dot_dimension_numbers<[1], [0], [0], [1], [0, 0, 1, 1], [], []>} : vector<128x512xbf16>, vector<512x512xbf16>, vector<128x512xf32> -> vector<128x512xf32>
    %c0_26 = arith.constant 0 : index
    %c0_27 = arith.constant 0 : index
    %42 = vector.load %arg10[%c0_26, %c0_27] : memref<1x512xf32, #tpu.memory_space<vmem>>, vector<1x512xf32>
    %43 = vector.broadcast %42 : vector<1x512xf32> to vector<128x512xf32>
    %44 = arith.addf %41, %43 : vector<128x512xf32>
    %45 = vector.extract_strided_slice %44 {offsets = [0, 0], sizes = [128, 256], strides = [1, 1]} : vector<128x512xf32> to vector<128x256xf32>
    %46 = vector.extract_strided_slice %44 {offsets = [0, 256], sizes = [128, 256], strides = [1, 1]} : vector<128x512xf32> to vector<128x256xf32>
    %47 = arith.maximumf %45, %46 : vector<128x256xf32>
    %cst_28 = arith.constant 0.000000e+00 : f32
    %48 = vector.broadcast %cst_28 : f32 to vector<128x256xf32>
    %49 = arith.cmpf ogt, %47, %48 : vector<128x256xf32>
    %cst_29 = arith.constant 0.00999999977 : f32
    %50 = vector.broadcast %cst_29 : f32 to vector<128x256xf32>
    %51 = arith.mulf %50, %47 : vector<128x256xf32>
    %52 = arith.select %49, %47, %51 : vector<128x256xi1>, vector<128x256xf32>
    %c0_30 = arith.constant 0 : index
    %c0_31 = arith.constant 0 : index
    %53 = vector.load %arg11[%c0_30, %c0_31] : memref<256x128xf32, #tpu.memory_space<vmem>>, vector<256x128xf32>
    %cst_32 = arith.constant dense<0.000000e+00> : vector<128x128xf32>
    %54 = tpu.matmul %52, %53, %cst_32 {dimension_numbers = #tpu.dot_dimension_numbers<[1], [0], [0], [1], [0, 0, 1, 1], [], []>} : vector<128x256xf32>, vector<256x128xf32>, vector<128x128xf32> -> vector<128x128xf32>
    %c0_33 = arith.constant 0 : index
    %c0_34 = arith.constant 0 : index
    %55 = vector.load %arg12[%c0_33, %c0_34] : memref<1x128xf32, #tpu.memory_space<vmem>>, vector<1x128xf32>
    %56 = vector.broadcast %55 : vector<1x128xf32> to vector<128x128xf32>
    %57 = arith.addf %54, %56 : vector<128x128xf32>
    %c0_35 = arith.constant 0 : index
    %c0_36 = arith.constant 0 : index
    %58 = vector.load %arg13[%c0_35, %c0_36] : memref<128x128xf32, #tpu.memory_space<vmem>>, vector<128x128xf32>
    tpu.vector_store %arg13[%c0_35, %c0_36], %57 {strides = array<i32>} : memref<128x128xf32, #tpu.memory_space<vmem>>, vector<128x128xf32>,
    return
  }
  func.func @transform_0(%arg0: i32) -> (i32, i32) {
    %c0_i32 = arith.constant 0 : i32
    %c0_i32_0 = arith.constant 0 : i32
    return %arg0, %c0_i32 : i32, i32
  }
  func.func @transform_1(%arg0: i32) -> (i32, i32) {
    %c0_i32 = arith.constant 0 : i32
    %c0_i32_0 = arith.constant 0 : i32
    %c0_i32_1 = arith.constant 0 : i32
    return %c0_i32, %c0_i32_0 : i32, i32
  }
  func.func @transform_2(%arg0: i32) -> (i32, i32) {
    %c0_i32 = arith.constant 0 : i32
    %c0_i32_0 = arith.constant 0 : i32
    %c0_i32_1 = arith.constant 0 : i32
    return %c0_i32, %c0_i32_0 : i32, i32
  }
  func.func @transform_3(%arg0: i32) -> (i32, i32) {
    %c0_i32 = arith.constant 0 : i32
    %c0_i32_0 = arith.constant 0 : i32
    %c0_i32_1 = arith.constant 0 : i32
    return %c0_i32, %c0_i32_0 : i32, i32
  }
  func.func @transform_4(%arg0: i32) -> (i32, i32) {
    %c0_i32 = arith.constant 0 : i32
    %c0_i32_0 = arith.constant 0 : i32
    %c0_i32_1 = arith.constant 0 : i32
    return %c0_i32, %c0_i32_0 : i32, i32
  }
  func.func @transform_5(%arg0: i32) -> (i32, i32) {
    %c0_i32 = arith.constant 0 : i32
    %c0_i32_0 = arith.constant 0 : i32
    %c0_i32_1 = arith.constant 0 : i32
    return %c0_i32, %c0_i32_0 : i32, i32
  }
  func.func @transform_6(%arg0: i32) -> (i32, i32) {
    %c0_i32 = arith.constant 0 : i32
    %c0_i32_0 = arith.constant 0 : i32
    %c0_i32_1 = arith.constant 0 : i32
    return %c0_i32, %c0_i32_0 : i32, i32
  }
  func.func @transform_7(%arg0: i32) -> (i32, i32) {
    %c0_i32 = arith.constant 0 : i32
    %c0_i32_0 = arith.constant 0 : i32
    %c0_i32_1 = arith.constant 0 : i32
    return %c0_i32, %c0_i32_0 : i32, i32
  }
  func.func @transform_8(%arg0: i32) -> (i32, i32) {
    %c0_i32 = arith.constant 0 : i32
    %c0_i32_0 = arith.constant 0 : i32
    %c0_i32_1 = arith.constant 0 : i32
    return %c0_i32, %c0_i32_0 : i32, i32
  }
  func.func @transform_9(%arg0: i32) -> (i32, i32) {
    %c0_i32 = arith.constant 0 : i32
    %c0_i32_0 = arith.constant 0 : i32
    %c0_i32_1 = arith.constant 0 : i32
    return %c0_i32, %c0_i32_0 : i32, i32
  }
  func.func @transform_10(%arg0: i32) -> (i32, i32) {
    %c0_i32 = arith.constant 0 : i32
    %c0_i32_0 = arith.constant 0 : i32
    %c0_i32_1 = arith.constant 0 : i32
    return %c0_i32, %c0_i32_0 : i32, i32
  }
  func.func @transform_11(%arg0: i32) -> (i32, i32) {
    %c0_i32 = arith.constant 0 : i32
    %c0_i32_0 = arith.constant 0 : i32
    %c0_i32_1 = arith.constant 0 : i32
    return %c0_i32, %c0_i32_0 : i32, i32
  }
  func.func @transform_12(%arg0: i32) -> (i32, i32) {
    %c0_i32 = arith.constant 0 : i32
    %c0_i32_0 = arith.constant 0 : i32
    return %arg0, %c0_i32 : i32, i32
  }
}

</mosaic_0001>

<llo_original>
// kernel: cconvsa_forward.1
$region0: #{cconvsa_forward.1}
  #allocation0 [shape = 'u32[]', space=smem, size = 0x4, offset = 0x4, fixed_abs, tag = 'smem constant byte address 0x4 - core index']
  #allocation1 [shape = 'u32[72,128]{1,0:T(1,128)}', space=vmem, size = 0x9000, scoped, tag = 'internal scratch']
  %s0 = inlined_call_operand.vmem [shape: f32[256,9], index: 0, kind: input, shape index: {}]
  %s1 = inlined_call_operand.vmem [shape: f32[8,64], index: 1, kind: input, shape index: {}]
  %s2 = inlined_call_operand.vmem [shape: f32[1,64], index: 2, kind: input, shape index: {}]
  %s3 = inlined_call_operand.vmem [shape: f32[64,32], index: 3, kind: input, shape index: {}]
  %s4 = inlined_call_operand.vmem [shape: f32[1,32], index: 4, kind: input, shape index: {}]
  %s5 = inlined_call_operand.vmem [shape: f32[1,32], index: 5, kind: input, shape index: {}]
  %s6 = inlined_call_operand.vmem [shape: bf16[32,512], index: 6, kind: input, shape index: {}]
  %s7 = inlined_call_operand.vmem [shape: f32[1,512], index: 7, kind: input, shape index: {}]
  %s8 = inlined_call_operand.hbm [shape: bf16[512,512], index: 8, kind: input, shape index: {}]
  %s9 = inlined_call_operand.vmem [shape: f32[1,512], index: 9, kind: input, shape index: {}]
  %s10 = inlined_call_operand.vmem [shape: f32[256,128], index: 10, kind: input, shape index: {}]
  %s11 = inlined_call_operand.vmem [shape: f32[1,128], index: 11, kind: input, shape index: {}]
  %s12 = inlined_call_operand.vmem [shape: f32[256,128], index: 12, kind: output, shape index: {}]
  %s13 = sld [smem:[#allocation0]]
  $region85: #{cconvsa_forward.1} parent=0
    _
  %s15 = ssub.s32 1, %s13
  %s16 = scalar_select 0, %s15, %s13
  $region1: #{cconvsa_forward.1} parent=0
    #allocation2 [shape = 'u8[524288]{0}', space=vmem, size = 0x80000, scoped, tag = 'input window, operand 8, single buffered']
    #allocation3 [shape = 's32[2]{0}', space=sflag, size = 0x8, scoped, tag = 'scoped memory for cconvsa_forward.1']
    %17 = vsyncpa [#allocation3], 0
    loop: start=0, step=1, limit=4
    $region2: #{cconvsa_forward.1} parent=1 // loop_pre_header
      _
    $region3: #{cconvsa_forward.1} parent=1 // loop_header
      %s19 = sphi 0, %s23
      %p20 = scmp.ge.s32.totalorder %s19, 4
      %s29 = sphi 0, %s31
      %s32 = sphi 0, %s29
      %s33 = sphi 0, %s32
      %s49 = sphi 0, %s33
      %s53 = sphi 0, %s53
      %s55 = sphi 0, %s53
      %s56 = sphi 0, %s55
      %s70 = sphi 0, %s56
      %s74 = sphi 0, %s74
      %s76 = sphi 0, %s74
      %s77 = sphi 0, %s76
      %s91 = sphi 0, %s77
      %s95 = sphi 0, %s95
      %s97 = sphi 0, %s95
      %s98 = sphi 0, %s97
      %s112 = sphi 0, %s98
      %s116 = sphi 0, %s116
      %s118 = sphi 0, %s116
      %s119 = sphi 0, %s118
      %s133 = sphi 0, %s119
      %s137 = sphi 0, %s137
      %s139 = sphi 0, %s137
      %s140 = sphi 0, %s139
      %s154 = sphi 0, %s140
      %s158 = sphi 0, %s158
      %s160 = sphi 0, %s158
      %s161 = sphi 0, %s160
      %s175 = sphi 0, %s161
      %s179 = sphi 0, %s179
      %s181 = sphi 0, %s179
      %s182 = sphi 0, %s181
      %s196 = sphi 0, %s182
      %s200 = sphi 0, %s200
      %s202 = sphi 0, %s200
      %s203 = sphi 0, %s202
      %s217 = sphi 0, %s203
      %s221 = sphi 0, %s221
      %s223 = sphi 0, %s221
      %s224 = sphi 0, %s223
      %s238 = sphi 0, %s224
      %s242 = sphi 0, %s242
      %s244 = sphi 0, %s242
      %s245 = sphi 0, %s244
      %s259 = sphi 0, %s245
      %s263 = sphi 0, %s263
      %s265 = sphi 0, %s263
      %s266 = sphi 0, %s265
      %s280 = sphi 0, %s266
      %s286 = sphi 0, %s288
      %s289 = sphi 0, %s286
      %s290 = sphi 0, %s289
      %s306 = sphi 0, %s290
    $region4: #{cconvsa_forward.1} parent=1 // loop_header_branch
      %22 = sbr.rel (%p20) target = $region8
    $region5: #{cconvsa_forward.1} parent=1 // loop_body
      %s24 = ssub.s32 %s19, 1
      %s25 = ssub.s32 %s19, 2
      %s26 = sadd.s32 %s19, 1
      %s27 = ssub.s32 %s19, %s26
      %p28 = scmp.eq.s32.totalorder %s27, 0
      %s30 = sadd.s32 %s29, 1
      %s31 = scalar_select %p28, %s29, %s30
      %p34 = pneg %p28
      %p35 = scmp.eq.s32.totalorder %s19, 1
      %p36 = por %p34, %p35
      %p37 = scmp.ne.s32.totalorder %s29, %s32
      %p38 = scmp.eq.s32.totalorder %s19, 0
      %p39 = por %p37, %p38
      %p40 = scmp.ne.s32.totalorder %s29, %s32
      %p41 = scmp.eq.s32.totalorder %s24, 1
      %p42 = por %p40, %p41
      %p43 = scmp.ne.s32.totalorder %s32, %s33
      %p44 = scmp.eq.s32.totalorder %s24, 0
      %p45 = por %p43, %p44
      %p46 = scmp.ne.s32.totalorder %s32, %s33
      %p47 = scmp.eq.s32.totalorder %s25, 1
      %p48 = por %p46, %p47
      %p50 = scmp.ne.s32.totalorder %s33, %s49
      %p51 = scmp.eq.s32.totalorder %s25, 0
      %p52 = por %p50, %p51
      %s54 = sadd.s32 %s53, 1
      %p57 = scmp.eq.s32.totalorder %s19, 1
      %p58 = scmp.ne.s32.totalorder %s53, %s55
      %p59 = scmp.eq.s32.totalorder %s19, 0
      %p60 = por %p58, %p59
      %p61 = scmp.ne.s32.totalorder %s53, %s55
      %p62 = scmp.eq.s32.totalorder %s24, 1
      %p63 = por %p61, %p62
      %p64 = scmp.ne.s32.totalorder %s55, %s56
      %p65 = scmp.eq.s32.totalorder %s24, 0
      %p66 = por %p64, %p65
      %p67 = scmp.ne.s32.totalorder %s55, %s56
      %p68 = scmp.eq.s32.totalorder %s25, 1
      %p69 = por %p67, %p68
      %p71 = scmp.ne.s32.totalorder %s56, %s70
      %p72 = scmp.eq.s32.totalorder %s25, 0
      %p73 = por %p71, %p72
      %s75 = sadd.s32 %s74, 1
      %p78 = scmp.eq.s32.totalorder %s19, 1
      %p79 = scmp.ne.s32.totalorder %s74, %s76
      %p80 = scmp.eq.s32.totalorder %s19, 0
      %p81 = por %p79, %p80
      %p82 = scmp.ne.s32.totalorder %s74, %s76
      %p83 = scmp.eq.s32.totalorder %s24, 1
      %p84 = por %p82, %p83
      %p85 = scmp.ne.s32.totalorder %s76, %s77
      %p86 = scmp.eq.s32.totalorder %s24, 0
      %p87 = por %p85, %p86
      %p88 = scmp.ne.s32.totalorder %s76, %s77
      %p89 = scmp.eq.s32.totalorder %s25, 1
      %p90 = por %p88, %p89
      %p92 = scmp.ne.s32.totalorder %s77, %s91
      %p93 = scmp.eq.s32.totalorder %s25, 0
      %p94 = por %p92, %p93
      %s96 = sadd.s32 %s95, 1
      %p99 = scmp.eq.s32.totalorder %s19, 1
      %p100 = scmp.ne.s32.totalorder %s95, %s97
      %p101 = scmp.eq.s32.totalorder %s19, 0
      %p102 = por %p100, %p101
      %p103 = scmp.ne.s32.totalorder %s95, %s97
      %p104 = scmp.eq.s32.totalorder %s24, 1
      %p105 = por %p103, %p104
      %p106 = scmp.ne.s32.totalorder %s97, %s98
      %p107 = scmp.eq.s32.totalorder %s24, 0
      %p108 = por %p106, %p107
      %p109 = scmp.ne.s32.totalorder %s97, %s98
      %p110 = scmp.eq.s32.totalorder %s25, 1
      %p111 = por %p109, %p110
      %p113 = scmp.ne.s32.totalorder %s98, %s112
      %p114 = scmp.eq.s32.totalorder %s25, 0
      %p115 = por %p113, %p114
      %s117 = sadd.s32 %s116, 1
      %p120 = scmp.eq.s32.totalorder %s19, 1
      %p121 = scmp.ne.s32.totalorder %s116, %s118
      %p122 = scmp.eq.s32.totalorder %s19, 0
      %p123 = por %p121, %p122
      %p124 = scmp.ne.s32.totalorder %s116, %s118
      %p125 = scmp.eq.s32.totalorder %s24, 1
      %p126 = por %p124, %p125
      %p127 = scmp.ne.s32.totalorder %s118, %s119
      %p128 = scmp.eq.s32.totalorder %s24, 0
      %p129 = por %p127, %p128
      %p130 = scmp.ne.s32.totalorder %s118, %s119
      %p131 = scmp.eq.s32.totalorder %s25, 1
      %p132 = por %p130, %p131
      %p134 = scmp.ne.s32.totalorder %s119, %s133
      %p135 = scmp.eq.s32.totalorder %s25, 0
      %p136 = por %p134, %p135
      %s138 = sadd.s32 %s137, 1
      %p141 = scmp.eq.s32.totalorder %s19, 1
      %p142 = scmp.ne.s32.totalorder %s137, %s139
      %p143 = scmp.eq.s32.totalorder %s19, 0
      %p144 = por %p142, %p143
      %p145 = scmp.ne.s32.totalorder %s137, %s139
      %p146 = scmp.eq.s32.totalorder %s24, 1
      %p147 = por %p145, %p146
      %p148 = scmp.ne.s32.totalorder %s139, %s140
      %p149 = scmp.eq.s32.totalorder %s24, 0
      %p150 = por %p148, %p149
      %p151 = scmp.ne.s32.totalorder %s139, %s140
      %p152 = scmp.eq.s32.totalorder %s25, 1
      %p153 = por %p151, %p152
      %p155 = scmp.ne.s32.totalorder %s140, %s154
      %p156 = scmp.eq.s32.totalorder %s25, 0
      %p157 = por %p155, %p156
      %s159 = sadd.s32 %s158, 1
      %p162 = scmp.eq.s32.totalorder %s19, 1
      %p163 = scmp.ne.s32.totalorder %s158, %s160
      %p164 = scmp.eq.s32.totalorder %s19, 0
      %p165 = por %p163, %p164
      %p166 = scmp.ne.s32.totalorder %s158, %s160
      %p167 = scmp.eq.s32.totalorder %s24, 1
      %p168 = por %p166, %p167
      %p169 = scmp.ne.s32.totalorder %s160, %s161
      %p170 = scmp.eq.s32.totalorder %s24, 0
      %p171 = por %p169, %p170
      %p172 = scmp.ne.s32.totalorder %s160, %s161
      %p173 = scmp.eq.s32.totalorder %s25, 1
      %p174 = por %p172, %p173
      %p176 = scmp.ne.s32.totalorder %s161, %s175
      %p177 = scmp.eq.s32.totalorder %s25, 0
      %p178 = por %p176, %p177
      %s180 = sadd.s32 %s179, 1
      %p183 = scmp.eq.s32.totalorder %s19, 1
      %p184 = scmp.ne.s32.totalorder %s179, %s181
      %p185 = scmp.eq.s32.totalorder %s19, 0
      %p186 = por %p184, %p185
      %p187 = scmp.ne.s32.totalorder %s179, %s181
      %p188 = scmp.eq.s32.totalorder %s24, 1
      %p189 = por %p187, %p188
      %p190 = scmp.ne.s32.totalorder %s181, %s182
      %p191 = scmp.eq.s32.totalorder %s24, 0
      %p192 = por %p190, %p191
      %p193 = scmp.ne.s32.totalorder %s181, %s182
      %p194 = scmp.eq.s32.totalorder %s25, 1
      %p195 = por %p193, %p194
      %p197 = scmp.ne.s32.totalorder %s182, %s196
      %p198 = scmp.eq.s32.totalorder %s25, 0
      %p199 = por %p197, %p198
      %s201 = sadd.s32 %s200, 1
      %p204 = scmp.eq.s32.totalorder %s19, 1
      %p205 = scmp.ne.s32.totalorder %s200, %s202
      %p206 = scmp.eq.s32.totalorder %s19, 0
      %p207 = por %p205, %p206
      %p208 = scmp.ne.s32.totalorder %s200, %s202
      %p209 = scmp.eq.s32.totalorder %s24, 1
      %p210 = por %p208, %p209
      %p211 = scmp.ne.s32.totalorder %s202, %s203
      %p212 = scmp.eq.s32.totalorder %s24, 0
      %p213 = por %p211, %p212
      %p214 = scmp.ne.s32.totalorder %s202, %s203
      %p215 = scmp.eq.s32.totalorder %s25, 1
      %p216 = por %p214, %p215
      %p218 = scmp.ne.s32.totalorder %s203, %s217
      %p219 = scmp.eq.s32.totalorder %s25, 0
      %p220 = por %p218, %p219
      %s222 = sadd.s32 %s221, 1
      %p225 = scmp.eq.s32.totalorder %s19, 1
      %p226 = scmp.ne.s32.totalorder %s221, %s223
      %p227 = scmp.eq.s32.totalorder %s19, 0
      %p228 = por %p226, %p227
      %p229 = scmp.ne.s32.totalorder %s221, %s223
      %p230 = scmp.eq.s32.totalorder %s24, 1
      %p231 = por %p229, %p230
      %p232 = scmp.ne.s32.totalorder %s223, %s224
      %p233 = scmp.eq.s32.totalorder %s24, 0
      %p234 = por %p232, %p233
      %p235 = scmp.ne.s32.totalorder %s223, %s224
      %p236 = scmp.eq.s32.totalorder %s25, 1
      %p237 = por %p235, %p236
      %p239 = scmp.ne.s32.totalorder %s224, %s238
      %p240 = scmp.eq.s32.totalorder %s25, 0
      %p241 = por %p239, %p240
      %s243 = sadd.s32 %s242, 1
      %p246 = scmp.eq.s32.totalorder %s19, 1
      %p247 = scmp.ne.s32.totalorder %s242, %s244
      %p248 = scmp.eq.s32.totalorder %s19, 0
      %p249 = por %p247, %p248
      %p250 = scmp.ne.s32.totalorder %s242, %s244
      %p251 = scmp.eq.s32.totalorder %s24, 1
      %p252 = por %p250, %p251
      %p253 = scmp.ne.s32.totalorder %s244, %s245
      %p254 = scmp.eq.s32.totalorder %s24, 0
      %p255 = por %p253, %p254
      %p256 = scmp.ne.s32.totalorder %s244, %s245
      %p257 = scmp.eq.s32.totalorder %s25, 1
      %p258 = por %p256, %p257
      %p260 = scmp.ne.s32.totalorder %s245, %s259
      %p261 = scmp.eq.s32.totalorder %s25, 0
      %p262 = por %p260, %p261
      %s264 = sadd.s32 %s263, 1
      %p267 = scmp.eq.s32.totalorder %s19, 1
      %p268 = scmp.ne.s32.totalorder %s263, %s265
      %p269 = scmp.eq.s32.totalorder %s19, 0
      %p270 = por %p268, %p269
      %p271 = scmp.ne.s32.totalorder %s263, %s265
      %p272 = scmp.eq.s32.totalorder %s24, 1
      %p273 = por %p271, %p272
      %p274 = scmp.ne.s32.totalorder %s265, %s266
      %p275 = scmp.eq.s32.totalorder %s24, 0
      %p276 = por %p274, %p275
      %p277 = scmp.ne.s32.totalorder %s265, %s266
      %p278 = scmp.eq.s32.totalorder %s25, 1
      %p279 = por %p277, %p278
      %p281 = scmp.ne.s32.totalorder %s266, %s280
      %p282 = scmp.eq.s32.totalorder %s25, 0
      %p283 = por %p281, %p282
      %s284 = ssub.s32 %s19, %s26
      %p285 = scmp.eq.s32.totalorder %s284, 0
      %s287 = sadd.s32 %s286, 1
      %s288 = scalar_select %p285, %s286, %s287
      %p291 = pneg %p285
      %p292 = scmp.eq.s32.totalorder %s19, 1
      %p293 = por %p291, %p292
      %p294 = scmp.ne.s32.totalorder %s286, %s289
      %p295 = scmp.eq.s32.totalorder %s19, 0
      %p296 = por %p294, %p295
      %p297 = scmp.ne.s32.totalorder %s286, %s289
      %p298 = scmp.eq.s32.totalorder %s24, 1
      %p299 = por %p297, %p298
      %p300 = scmp.ne.s32.totalorder %s289, %s290
      %p301 = scmp.eq.s32.totalorder %s24, 0
      %p302 = por %p300, %p301
      %p303 = scmp.ne.s32.totalorder %s289, %s290
      %p304 = scmp.eq.s32.totalorder %s25, 1
      %p305 = por %p303, %p304
      %p307 = scmp.ne.s32.totalorder %s290, %s306
      %p308 = scmp.eq.s32.totalorder %s25, 0
      %p309 = por %p307, %p308
      %p310 = scmp.le.s32.totalorder 1, %s19
      %p311 = scmp.lt.s32.totalorder %s19, 3
      %p312 = pnand %p310, %p311
      %p313 = pneg %p312
      // Predicated region
      $region9: #{cconvsa_forward.1} parent=5 // pred_check
        _
      $region10: #{cconvsa_forward.1} parent=5 // pred_check_branch
        %315 = sbr.rel (%p312) target = $region12
      $region11: #{cconvsa_forward.1} parent=5 // pred_region
        %s316 = ssub.s32 %s19, 1
        // Predicated region
        $region13: #{cconvsa_forward.1} parent=11 // pred_check
          %p317 = pneg %p66
        $region14: #{cconvsa_forward.1} parent=11 // pred_check_branch
          %319 = sbr.rel (%p317) target = $region16
        $region15: #{cconvsa_forward.1} parent=11 // pred_region
          _
        $region16: #{cconvsa_forward.1} parent=11 // pred_fallthru
          _
        // Predicated region
        $region17: #{cconvsa_forward.1} parent=11 // pred_check
          %p320 = pneg %p87
        $region18: #{cconvsa_forward.1} parent=11 // pred_check_branch
          %322 = sbr.rel (%p320) target = $region20
        $region19: #{cconvsa_forward.1} parent=11 // pred_region
          _
        $region20: #{cconvsa_forward.1} parent=11 // pred_fallthru
          _
        // Predicated region
        $region21: #{cconvsa_forward.1} parent=11 // pred_check
          %p323 = pneg %p108
        $region22: #{cconvsa_forward.1} parent=11 // pred_check_branch
          %325 = sbr.rel (%p323) target = $region24
        $region23: #{cconvsa_forward.1} parent=11 // pred_region
          _
        $region24: #{cconvsa_forward.1} parent=11 // pred_fallthru
          _
        // Predicated region
        $region25: #{cconvsa_forward.1} parent=11 // pred_check
          %p326 = pneg %p129
        $region26: #{cconvsa_forward.1} parent=11 // pred_check_branch
          %328 = sbr.rel (%p326) target = $region28
        $region27: #{cconvsa_forward.1} parent=11 // pred_region
          _
        $region28: #{cconvsa_forward.1} parent=11 // pred_fallthru
          _
        // Predicated region
        $region29: #{cconvsa_forward.1} parent=11 // pred_check
          %p329 = pneg %p150
        $region30: #{cconvsa_forward.1} parent=11 // pred_check_branch
          %331 = sbr.rel (%p329) target = $region32
        $region31: #{cconvsa_forward.1} parent=11 // pred_region
          _
        $region32: #{cconvsa_forward.1} parent=11 // pred_fallthru
          _
        // Predicated region
        $region33: #{cconvsa_forward.1} parent=11 // pred_check
          %p332 = pneg %p171
        $region34: #{cconvsa_forward.1} parent=11 // pred_check_branch
          %334 = sbr.rel (%p332) target = $region36
        $region35: #{cconvsa_forward.1} parent=11 // pred_region
          _
        $region36: #{cconvsa_forward.1} parent=11 // pred_fallthru
          _
        // Predicated region
        $region37: #{cconvsa_forward.1} parent=11 // pred_check
          %p335 = pneg %p192
        $region38: #{cconvsa_forward.1} parent=11 // pred_check_branch
          %337 = sbr.rel (%p335) target = $region40
        $region39: #{cconvsa_forward.1} parent=11 // pred_region
          _
        $region40: #{cconvsa_forward.1} parent=11 // pred_fallthru
          _
        // Predicated region
        $region41: #{cconvsa_forward.1} parent=11 // pred_check
          %p338 = pneg %p213
        $region42: #{cconvsa_forward.1} parent=11 // pred_check_branch
          %340 = sbr.rel (%p338) target = $region44
        $region43: #{cconvsa_forward.1} parent=11 // pred_region
          %342 = vsyncadd [#allocation3], 0
          %s343 = sshll.u32 %s8, 4
          %s344 = int_to_ptr.hbm [resolvable:$true] %s343
          %s345 = sshll.u32 [#allocation2], 4
          %s346 = int_to_ptr.vmem [resolvable:$true] %s345
          %351 = dma.hbm_to_vmem [thread:$0]  %s344, 16384, %s346, [#allocation3], 256, 256, 16
        $region44: #{cconvsa_forward.1} parent=11 // pred_fallthru
          _
        // Predicated region
        $region45: #{cconvsa_forward.1} parent=11 // pred_check
          %p352 = pneg %p234
        $region46: #{cconvsa_forward.1} parent=11 // pred_check_branch
          %354 = sbr.rel (%p352) target = $region48
        $region47: #{cconvsa_forward.1} parent=11 // pred_region
          _
        $region48: #{cconvsa_forward.1} parent=11 // pred_fallthru
          _
        // Predicated region
        $region49: #{cconvsa_forward.1} parent=11 // pred_check
          %p355 = pneg %p255
        $region50: #{cconvsa_forward.1} parent=11 // pred_check_branch
          %357 = sbr.rel (%p355) target = $region52
        $region51: #{cconvsa_forward.1} parent=11 // pred_region
          _
        $region52: #{cconvsa_forward.1} parent=11 // pred_fallthru
          _
        // Predicated region
        $region53: #{cconvsa_forward.1} parent=11 // pred_check
          %p358 = pneg %p276
        $region54: #{cconvsa_forward.1} parent=11 // pred_check_branch
          %360 = sbr.rel (%p358) target = $region56
        $region55: #{cconvsa_forward.1} parent=11 // pred_region
          _
        $region56: #{cconvsa_forward.1} parent=11 // pred_fallthru
          _
      $region12: #{cconvsa_forward.1} parent=5 // pred_fallthru
        _
      %p361 = scmp.lt.s32.totalorder %s19, 2
      // Predicated region
      $region57: #{cconvsa_forward.1} parent=5 // pred_check
        %p362 = pneg %p361
      $region58: #{cconvsa_forward.1} parent=5 // pred_check_branch
        %364 = sbr.rel (%p362) target = $region60
      $region59: #{cconvsa_forward.1} parent=5 // pred_region
        // Predicated region
        $region61: #{cconvsa_forward.1} parent=59 // pred_check
          %p365 = pneg %p39
        $region62: #{cconvsa_forward.1} parent=59 // pred_check_branch
          %367 = sbr.rel (%p365) target = $region64
        $region63: #{cconvsa_forward.1} parent=59 // pred_region
          %s368 = smul.u32 16, %s19
          %p369 = scmp.lt.s32.totalorder %s368, 31
          %s370 = scalar_select %p369, %s368, 31
          %s371 = smul.addr %s370, 8
          %s372 = scalar_lea.vmem %s0, %s371
          %s373 = smul.u32 16, %s19
        $region64: #{cconvsa_forward.1} parent=59 // pred_fallthru
          _
      $region60: #{cconvsa_forward.1} parent=5 // pred_fallthru
        _
      %p374 = scmp.le.s32.totalorder 1, %s19
      %p375 = scmp.lt.s32.totalorder %s19, 3
      %p376 = pnand %p374, %p375
      %p377 = pneg %p376
      // Predicated region
      $region65: #{cconvsa_forward.1} parent=5 // pred_check
        _
      $region66: #{cconvsa_forward.1} parent=5 // pred_check_branch
        %379 = sbr.rel (%p376) target = $region68
      $region67: #{cconvsa_forward.1} parent=5 // pred_region
        %s380 = ssub.s32 %s19, 1
        // Predicated region
        $region69: #{cconvsa_forward.1} parent=67 // pred_check
          %p381 = pneg %p213
        $region70: #{cconvsa_forward.1} parent=67 // pred_check_branch
          %383 = sbr.rel (%p381) target = $region72
        $region71: #{cconvsa_forward.1} parent=67 // pred_region
          %385 = dma.done [#allocation3], 16384
        $region72: #{cconvsa_forward.1} parent=67 // pred_fallthru
          _
        %s386 = smul.u32 16, %s24
        %p387 = scmp.lt.s32.totalorder %s386, 31
        %s388 = scalar_select %p387, %s386, 31
        %s389 = smul.addr %s388, 8
        %s390 = scalar_lea.vmem %s0, %s389
        %p391 = pneg %p45
        %p392 = pneg %p42
        %p393 = pneg %p66
        %p394 = pneg %p63
        %p395 = pneg %p87
        %p396 = pneg %p84
        %p397 = pneg %p108
        %p398 = pneg %p105
        %p399 = pneg %p129
        %p400 = pneg %p126
        %p401 = pneg %p150
        %p402 = pneg %p147
        %p403 = pneg %p171
        %p404 = pneg %p168
        %p405 = pneg %p192
        %p406 = pneg %p189
        %p407 = pneg %p213
        %p408 = pneg %p210
        %p409 = pneg %p234
        %p410 = pneg %p231
        %p411 = pneg %p255
        %p412 = pneg %p252
        %p413 = pneg %p276
        %p414 = pneg %p273
        %p415 = pneg %p302
        %p416 = pneg %p299
        %s417 = smul.u32 16, %s24
        %p418 = scmp.lt.s32.totalorder %s417, 31
        %s419 = scalar_select %p418, %s417, 31
        %s420 = smul.addr %s419, 8
        %s421 = scalar_lea.vmem %s12, %s420
        %s422 = smul.u32 16, %s24
        %p423 = scmp.lt.s32.totalorder %s422, 31
        %s424 = scalar_select %p423, %s422, 31
        %s425 = smul.addr %s424, 8
        %s426 = scalar_lea.vmem %s0, %s425
        %s427 = smul.u32 16, %s24
        %s428 = smul.u32 16, %s24
        %p429 = scmp.lt.s32.totalorder %s428, 31
        %s430 = scalar_select %p429, %s428, 31
        %s431 = smul.addr %s430, 8
        %s432 = scalar_lea.vmem %s12, %s431
        %s433 = smul.u32 16, %s24
        %v435 = vld [vmem:[%s426] sm:$0xff]
        %v436 = vld [vmem:[%s426 + $0x8] sm:$0xff]
        %v437 = vld [vmem:[%s426 + $0x10] sm:$0xff]
        %v438 = vld [vmem:[%s426 + $0x18] sm:$0xff]
        %v439 = vld [vmem:[%s426 + $0x20] sm:$0xff]
        %v440 = vld [vmem:[%s426 + $0x28] sm:$0xff]
        %v441 = vld [vmem:[%s426 + $0x30] sm:$0xff]
        %v442 = vld [vmem:[%s426 + $0x38] sm:$0xff]
        %v443 = vld [vmem:[%s426 + $0x40] sm:$0xff]
        %v444 = vld [vmem:[%s426 + $0x48] sm:$0xff]
        %v445 = vld [vmem:[%s426 + $0x50] sm:$0xff]
        %v446 = vld [vmem:[%s426 + $0x58] sm:$0xff]
        %v447 = vld [vmem:[%s426 + $0x60] sm:$0xff]
        %v448 = vld [vmem:[%s426 + $0x68] sm:$0xff]
        %v449 = vld [vmem:[%s426 + $0x70] sm:$0xff]
        %v450 = vld [vmem:[%s426 + $0x78] sm:$0xff]
        %v451 = vld [vmem:[%s1] sm:$0xff]
        %v452 = vld [vmem:[%s2] sm:$0x1]
        %v454 = vperm.slane %v452, 0
        %vm456 = vcmask 64512
        %v458 = vsel %vm456, %v435, 0
        %v461 = vsel %vm456, %v436, 0
        %v464 = vsel %vm456, %v437, 0
        %v467 = vsel %vm456, %v438, 0
        %v470 = vsel %vm456, %v439, 0
        %v473 = vsel %vm456, %v440, 0
        %v476 = vsel %vm456, %v441, 0
        %v479 = vsel %vm456, %v442, 0
        %v482 = vsel %vm456, %v443, 0
        %v485 = vsel %vm456, %v444, 0
        %v488 = vsel %vm456, %v445, 0
        %v491 = vsel %vm456, %v446, 0
        %v494 = vsel %vm456, %v447, 0
        %v497 = vsel %vm456, %v448, 0
        %v500 = vsel %vm456, %v449, 0
        %v503 = vsel %vm456, %v450, 0
        %505 = vmatpush.msra.mxu0 0.0
        %506 = vmatpush.msra.mxu0 0.0
        %507 = vmatpush.msra.mxu0 0.0
        %508 = vmatpush.msra.mxu0 0.0
        %509 = vmatpush.msra.mxu0 0.0
        %510 = vmatpush.msra.mxu0 0.0
        %511 = vmatpush.msra.mxu0 0.0
        %512 = vmatpush.msra.mxu0 0.0
        %513 = vmatpush.msra.mxu0 0.0
        %514 = vmatpush.msra.mxu0 0.0
        %515 = vmatpush.msra.mxu0 0.0
        %516 = vmatpush.msra.mxu0 0.0
        %517 = vmatpush.msra.mxu0 0.0
        %518 = vmatpush.msra.mxu0 0.0
        %519 = vmatpush.msra.mxu0 0.0
        %520 = vmatpush.msra.mxu0 %v451
        %521 = vmatmul.f32.gmra.mxu0 %v458
        %v522 = vpop.f32.mrf.mxu0
        %v523 = vadd.f32 %v454, %v522
        %524 = vmatmul.f32.gmra.mxu0 %v461
        %v525 = vpop.f32.mrf.mxu0
        %v526 = vadd.f32 %v454, %v525
        %527 = vmatmul.f32.gmra.mxu0 %v464
        %v528 = vpop.f32.mrf.mxu0
        %v529 = vadd.f32 %v454, %v528
        %530 = vmatmul.f32.gmra.mxu0 %v467
        %v531 = vpop.f32.mrf.mxu0
        %v532 = vadd.f32 %v454, %v531
        %533 = vmatmul.f32.gmra.mxu0 %v470
        %v534 = vpop.f32.mrf.mxu0
        %v535 = vadd.f32 %v454, %v534
        %536 = vmatmul.f32.gmra.mxu0 %v473
        %v537 = vpop.f32.mrf.mxu0
        %v538 = vadd.f32 %v454, %v537
        %539 = vmatmul.f32.gmra.mxu0 %v476
        %v540 = vpop.f32.mrf.mxu0
        %v541 = vadd.f32 %v454, %v540
        %542 = vmatmul.f32.gmra.mxu0 %v479
        %v543 = vpop.f32.mrf.mxu0
        %v544 = vadd.f32 %v454, %v543
        %545 = vmatmul.f32.gmra.mxu0 %v482
        %v546 = vpop.f32.mrf.mxu0
        %v547 = vadd.f32 %v454, %v546
        %548 = vmatmul.f32.gmra.mxu0 %v485
        %v549 = vpop.f32.mrf.mxu0
        %v550 = vadd.f32 %v454, %v549
        %551 = vmatmul.f32.gmra.mxu0 %v488
        %v552 = vpop.f32.mrf.mxu0
        %v553 = vadd.f32 %v454, %v552
        %554 = vmatmul.f32.gmra.mxu0 %v491
        %v555 = vpop.f32.mrf.mxu0
        %v556 = vadd.f32 %v454, %v555
        %557 = vmatmul.f32.gmra.mxu0 %v494
        %v558 = vpop.f32.mrf.mxu0
        %v559 = vadd.f32 %v454, %v558
        %560 = vmatmul.f32.gmra.mxu0 %v497
        %v561 = vpop.f32.mrf.mxu0
        %v562 = vadd.f32 %v454, %v561
        %563 = vmatmul.f32.gmra.mxu0 %v500
        %v564 = vpop.f32.mrf.mxu0
        %v565 = vadd.f32 %v454, %v564
        %566 = vmatmul.f32.gmra.mxu0 %v503
        %v567 = vpop.f32.mrf.mxu0
        %v568 = vadd.f32 %v454, %v567
        %569 = vdwg.mxu0
        %vm570 = vcmp.gt.f32.partialorder %v523, 0.0
        %vm571 = vcmp.gt.f32.partialorder %v526, 0.0
        %vm572 = vcmp.gt.f32.partialorder %v529, 0.0
        %vm573 = vcmp.gt.f32.partialorder %v532, 0.0
        %vm574 = vcmp.gt.f32.partialorder %v535, 0.0
        %vm575 = vcmp.gt.f32.partialorder %v538, 0.0
        %vm576 = vcmp.gt.f32.partialorder %v541, 0.0
        %vm577 = vcmp.gt.f32.partialorder %v544, 0.0
        %vm578 = vcmp.gt.f32.partialorder %v547, 0.0
        %vm579 = vcmp.gt.f32.partialorder %v550, 0.0
        %vm580 = vcmp.gt.f32.partialorder %v553, 0.0
        %vm581 = vcmp.gt.f32.partialorder %v556, 0.0
        %vm582 = vcmp.gt.f32.partialorder %v559, 0.0
        %vm583 = vcmp.gt.f32.partialorder %v562, 0.0
        %vm584 = vcmp.gt.f32.partialorder %v565, 0.0
        %vm585 = vcmp.gt.f32.partialorder %v568, 0.0
        %v586 = vmul.f32 %v523, 0.01
        %v587 = vmul.f32 %v526, 0.01
        %v588 = vmul.f32 %v529, 0.01
        %v589 = vmul.f32 %v532, 0.01
        %v590 = vmul.f32 %v535, 0.01
        %v591 = vmul.f32 %v538, 0.01
        %v592 = vmul.f32 %v541, 0.01
        %v593 = vmul.f32 %v544, 0.01
        %v594 = vmul.f32 %v547, 0.01
        %v595 = vmul.f32 %v550, 0.01
        %v596 = vmul.f32 %v553, 0.01
        %v597 = vmul.f32 %v556, 0.01
        %v598 = vmul.f32 %v559, 0.01
        %v599 = vmul.f32 %v562, 0.01
        %v600 = vmul.f32 %v565, 0.01
        %v601 = vmul.f32 %v568, 0.01
        %v602 = vsel %vm570, %v523, %v586
        %v603 = vsel %vm571, %v526, %v587
        %v604 = vsel %vm572, %v529, %v588
        %v605 = vsel %vm573, %v532, %v589
        %v606 = vsel %vm574, %v535, %v590
        %v607 = vsel %vm575, %v538, %v591
        %v608 = vsel %vm576, %v541, %v592
        %v609 = vsel %vm577, %v544, %v593
        %v610 = vsel %vm578, %v547, %v594
        %v611 = vsel %vm579, %v550, %v595
        %v612 = vsel %vm580, %v553, %v596
        %v613 = vsel %vm581, %v556, %v597
        %v614 = vsel %vm582, %v559, %v598
        %v615 = vsel %vm583, %v562, %v599
        %v616 = vsel %vm584, %v565, %v600
        %v617 = vsel %vm585, %v568, %v601
        %v618 = vld [vmem:[%s3] sm:$0xff]
        %v619 = vld [vmem:[%s3 + $0x8] sm:$0xff]
        %v620 = vld [vmem:[%s3 + $0x10] sm:$0xff]
        %v621 = vld [vmem:[%s3 + $0x18] sm:$0xff]
        %v622 = vld [vmem:[%s3 + $0x20] sm:$0xff]
        %v623 = vld [vmem:[%s3 + $0x28] sm:$0xff]
        %v624 = vld [vmem:[%s3 + $0x30] sm:$0xff]
        %v625 = vld [vmem:[%s3 + $0x38] sm:$0xff]
        %v626 = vld [vmem:[%s4] sm:$0x1]
        %627 = vset.pattern.permute.xlu0 8
        %628 = vperm.xlu0 %627, %v435
        %v629 = vpop.permute.xlu0 %628
        %631 = vset.pattern.permute.xlu0 8
        %632 = vperm.xlu0 %631, %v436
        %v633 = vpop.permute.xlu0 %632
        %635 = vset.pattern.permute.xlu0 8
        %636 = vperm.xlu0 %635, %v437
        %v637 = vpop.permute.xlu0 %636
        %639 = vset.pattern.permute.xlu0 8
        %640 = vperm.xlu0 %639, %v438
        %v641 = vpop.permute.xlu0 %640
        %643 = vset.pattern.permute.xlu0 8
        %644 = vperm.xlu0 %643, %v439
        %v645 = vpop.permute.xlu0 %644
        %647 = vset.pattern.permute.xlu0 8
        %648 = vperm.xlu0 %647, %v440
        %v649 = vpop.permute.xlu0 %648
        %651 = vset.pattern.permute.xlu0 8
        %652 = vperm.xlu0 %651, %v441
        %v653 = vpop.permute.xlu0 %652
        %655 = vset.pattern.permute.xlu0 8
        %656 = vperm.xlu0 %655, %v442
        %v657 = vpop.permute.xlu0 %656
        %659 = vset.pattern.permute.xlu0 8
        %660 = vperm.xlu0 %659, %v443
        %v661 = vpop.permute.xlu0 %660
        %663 = vset.pattern.permute.xlu0 8
        %664 = vperm.xlu0 %663, %v444
        %v665 = vpop.permute.xlu0 %664
        %667 = vset.pattern.permute.xlu0 8
        %668 = vperm.xlu0 %667, %v445
        %v669 = vpop.permute.xlu0 %668
        %671 = vset.pattern.permute.xlu0 8
        %672 = vperm.xlu0 %671, %v446
        %v673 = vpop.permute.xlu0 %672
        %675 = vset.pattern.permute.xlu0 8
        %676 = vperm.xlu0 %675, %v447
        %v677 = vpop.permute.xlu0 %676
        %679 = vset.pattern.permute.xlu0 8
        %680 = vperm.xlu0 %679, %v448
        %v681 = vpop.permute.xlu0 %680
        %683 = vset.pattern.permute.xlu0 8
        %684 = vperm.xlu0 %683, %v449
        %v685 = vpop.permute.xlu0 %684
        %687 = vset.pattern.permute.xlu0 8
        %688 = vperm.xlu0 %687, %v450
        %v689 = vpop.permute.xlu0 %688
        %v692 = vperm.slane %v626, 0
        %v694 = vmul.f32 %v629, %v692
        %v695 = vmul.f32 %v633, %v692
        %v696 = vmul.f32 %v637, %v692
        %v697 = vmul.f32 %v641, %v692
        %v698 = vmul.f32 %v645, %v692
        %v699 = vmul.f32 %v649, %v692
        %v700 = vmul.f32 %v653, %v692
        %v701 = vmul.f32 %v657, %v692
        %v702 = vmul.f32 %v661, %v692
        %v703 = vmul.f32 %v665, %v692
        %v704 = vmul.f32 %v669, %v692
        %v705 = vmul.f32 %v673, %v692
        %v706 = vmul.f32 %v677, %v692
        %v707 = vmul.f32 %v681, %v692
        %v708 = vmul.f32 %v685, %v692
        %v709 = vmul.f32 %v689, %v692
        %vm710 = vcmask 523264
        %v712 = vsel %vm710, %v602, 0
        %v715 = vsel %vm710, %v603, 0
        %v718 = vsel %vm710, %v604, 0
        %v721 = vsel %vm710, %v605, 0
        %v724 = vsel %vm710, %v606, 0
        %v727 = vsel %vm710, %v607, 0
        %v730 = vsel %vm710, %v608, 0
        %v733 = vsel %vm710, %v609, 0
        %v736 = vsel %vm710, %v610, 0
        %v739 = vsel %vm710, %v611, 0
        %v742 = vsel %vm710, %v612, 0
        %v745 = vsel %vm710, %v613, 0
        %v748 = vsel %vm710, %v614, 0
        %v751 = vsel %vm710, %v615, 0
        %v754 = vsel %vm710, %v616, 0
        %v757 = vsel %vm710, %v617, 0
        %759 = vmatpush.msra.mxu0 0.0
        %760 = vmatpush.msra.mxu0 0.0
        %761 = vmatpush.msra.mxu0 0.0
        %762 = vmatpush.msra.mxu0 0.0
        %763 = vmatpush.msra.mxu0 0.0
        %764 = vmatpush.msra.mxu0 0.0
        %765 = vmatpush.msra.mxu0 0.0
        %766 = vmatpush.msra.mxu0 0.0
        %767 = vmatpush.msra.mxu0 %v625
        %768 = vmatpush.msra.mxu0 %v624
        %769 = vmatpush.msra.mxu0 %v623
        %770 = vmatpush.msra.mxu0 %v622
        %771 = vmatpush.msra.mxu0 %v621
        %772 = vmatpush.msra.mxu0 %v620
        %773 = vmatpush.msra.mxu0 %v619
        %774 = vmatpush.msra.mxu0 %v618
        %775 = vmatmul.f32.gmra.mxu0 %v712
        %v776 = vpop.f32.mrf.mxu0
        %v777 = vadd.f32 %v694, %v776
        %778 = vmatmul.f32.gmra.mxu0 %v715
        %v779 = vpop.f32.mrf.mxu0
        %v780 = vadd.f32 %v695, %v779
        %781 = vmatmul.f32.gmra.mxu0 %v718
        %v782 = vpop.f32.mrf.mxu0
        %v783 = vadd.f32 %v696, %v782
        %784 = vmatmul.f32.gmra.mxu0 %v721
        %v785 = vpop.f32.mrf.mxu0
        %v786 = vadd.f32 %v697, %v785
        %787 = vmatmul.f32.gmra.mxu0 %v724
        %v788 = vpop.f32.mrf.mxu0
        %v789 = vadd.f32 %v698, %v788
        %790 = vmatmul.f32.gmra.mxu0 %v727
        %v791 = vpop.f32.mrf.mxu0
        %v792 = vadd.f32 %v699, %v791
        %793 = vmatmul.f32.gmra.mxu0 %v730
        %v794 = vpop.f32.mrf.mxu0
        %v795 = vadd.f32 %v700, %v794
        %796 = vmatmul.f32.gmra.mxu0 %v733
        %v797 = vpop.f32.mrf.mxu0
        %v798 = vadd.f32 %v701, %v797
        %799 = vmatmul.f32.gmra.mxu0 %v736
        %v800 = vpop.f32.mrf.mxu0
        %v801 = vadd.f32 %v702, %v800
        %802 = vmatmul.f32.gmra.mxu0 %v739
        %v803 = vpop.f32.mrf.mxu0
        %v804 = vadd.f32 %v703, %v803
        %805 = vmatmul.f32.gmra.mxu0 %v742
        %v806 = vpop.f32.mrf.mxu0
        %v807 = vadd.f32 %v704, %v806
        %808 = vmatmul.f32.gmra.mxu0 %v745
        %v809 = vpop.f32.mrf.mxu0
        %v810 = vadd.f32 %v705, %v809
        %811 = vmatmul.f32.gmra.mxu0 %v748
        %v812 = vpop.f32.mrf.mxu0
        %v813 = vadd.f32 %v706, %v812
        %814 = vmatmul.f32.gmra.mxu0 %v751
        %v815 = vpop.f32.mrf.mxu0
        %v816 = vadd.f32 %v707, %v815
        %817 = vmatmul.f32.gmra.mxu0 %v754
        %v818 = vpop.f32.mrf.mxu0
        %v819 = vadd.f32 %v708, %v818
        %820 = vmatmul.f32.gmra.mxu0 %v757
        %v821 = vpop.f32.mrf.mxu0
        %v822 = vadd.f32 %v709, %v821
        %823 = vdwg.mxu0
        %v824 = vld [vmem:[%s5] sm:$0x1]
        %v826 = vperm.slane %v824, 0
        %v828 = vadd.f32 %v777, %v826
        %v829 = vadd.f32 %v780, %v826
        %v830 = vadd.f32 %v783, %v826
        %v831 = vadd.f32 %v786, %v826
        %v832 = vadd.f32 %v789, %v826
        %v833 = vadd.f32 %v792, %v826
        %v834 = vadd.f32 %v795, %v826
        %v835 = vadd.f32 %v798, %v826
        %v836 = vadd.f32 %v801, %v826
        %v837 = vadd.f32 %v804, %v826
        %v838 = vadd.f32 %v807, %v826
        %v839 = vadd.f32 %v810, %v826
        %v840 = vadd.f32 %v813, %v826
        %v841 = vadd.f32 %v816, %v826
        %v842 = vadd.f32 %v819, %v826
        %v843 = vadd.f32 %v822, %v826
        %vm844 = vcmp.gt.f32.partialorder %v828, 0.0
        %vm845 = vcmp.gt.f32.partialorder %v829, 0.0
        %vm846 = vcmp.gt.f32.partialorder %v830, 0.0
        %vm847 = vcmp.gt.f32.partialorder %v831, 0.0
        %vm848 = vcmp.gt.f32.partialorder %v832, 0.0
        %vm849 = vcmp.gt.f32.partialorder %v833, 0.0
        %vm850 = vcmp.gt.f32.partialorder %v834, 0.0
        %vm851 = vcmp.gt.f32.partialorder %v835, 0.0
        %vm852 = vcmp.gt.f32.partialorder %v836, 0.0
        %vm853 = vcmp.gt.f32.partialorder %v837, 0.0
        %vm854 = vcmp.gt.f32.partialorder %v838, 0.0
        %vm855 = vcmp.gt.f32.partialorder %v839, 0.0
        %vm856 = vcmp.gt.f32.partialorder %v840, 0.0
        %vm857 = vcmp.gt.f32.partialorder %v841, 0.0
        %vm858 = vcmp.gt.f32.partialorder %v842, 0.0
        %vm859 = vcmp.gt.f32.partialorder %v843, 0.0
        %v860 = vmul.f32 %v828, 0.01
        %v861 = vmul.f32 %v829, 0.01
        %v862 = vmul.f32 %v830, 0.01
        %v863 = vmul.f32 %v831, 0.01
        %v864 = vmul.f32 %v832, 0.01
        %v865 = vmul.f32 %v833, 0.01
        %v866 = vmul.f32 %v834, 0.01
        %v867 = vmul.f32 %v835, 0.01
        %v868 = vmul.f32 %v836, 0.01
        %v869 = vmul.f32 %v837, 0.01
        %v870 = vmul.f32 %v838, 0.01
        %v871 = vmul.f32 %v839, 0.01
        %v872 = vmul.f32 %v840, 0.01
        %v873 = vmul.f32 %v841, 0.01
        %v874 = vmul.f32 %v842, 0.01
        %v875 = vmul.f32 %v843, 0.01
        %v876 = vsel %vm844, %v828, %v860
        %v877 = vsel %vm845, %v829, %v861
        %v878 = vsel %vm846, %v830, %v862
        %v879 = vsel %vm847, %v831, %v863
        %v880 = vsel %vm848, %v832, %v864
        %v881 = vsel %vm849, %v833, %v865
        %v882 = vsel %vm850, %v834, %v866
        %v883 = vsel %vm851, %v835, %v867
        %v884 = vsel %vm852, %v836, %v868
        %v885 = vsel %vm853, %v837, %v869
        %v886 = vsel %vm854, %v838, %v870
        %v887 = vsel %vm855, %v839, %v871
        %v888 = vsel %vm856, %v840, %v872
        %v889 = vsel %vm857, %v841, %v873
        %v890 = vsel %vm858, %v842, %v874
        %v891 = vsel %vm859, %v843, %v875
        %v892 = vpack.c.bf16 %v877, %v876
        %v893 = vpack.c.bf16 %v879, %v878
        %v894 = vpack.c.bf16 %v881, %v880
        %v895 = vpack.c.bf16 %v883, %v882
        %v896 = vpack.c.bf16 %v885, %v884
        %v897 = vpack.c.bf16 %v887, %v886
        %v898 = vpack.c.bf16 %v889, %v888
        %v899 = vpack.c.bf16 %v891, %v890
        %v900 = vld [vmem:[%s6] sm:$0xff]
        %v901 = vld [vmem:[%s6 + $0x8] sm:$0xff]
        %v902 = vld [vmem:[%s6 + $0x10] sm:$0xff]
        %v903 = vld [vmem:[%s6 + $0x18] sm:$0xff]
        %v904 = vld [vmem:[%s6 + $0x20] sm:$0xff]
        %v905 = vld [vmem:[%s6 + $0x28] sm:$0xff]
        %v906 = vld [vmem:[%s6 + $0x30] sm:$0xff]
        %v907 = vld [vmem:[%s6 + $0x38] sm:$0xff]
        %v908 = vld [vmem:[%s7] sm:$0xf]
        %v910 = vperm.slane %v908, 0
        %v911 = vperm.slane %v908, 1
        %v912 = vperm.slane %v908, 2
        %v913 = vperm.slane %v908, 3
        %v926 = vunpack.c.l.b16 %v900
        %v927 = vunpack.c.h.b16 %v900
        %v928 = vunpack.c.l.b16 %v901
        %v929 = vunpack.c.h.b16 %v901
        %v930 = vunpack.c.l.b16 %v902
        %v931 = vunpack.c.h.b16 %v902
        %v932 = vunpack.c.l.b16 %v903
        %v933 = vunpack.c.h.b16 %v903
        %v934 = vunpack.c.l.b16 %v904
        %v935 = vunpack.c.h.b16 %v904
        %v936 = vunpack.c.l.b16 %v905
        %v937 = vunpack.c.h.b16 %v905
        %v938 = vunpack.c.l.b16 %v906
        %v939 = vunpack.c.h.b16 %v906
        %v940 = vunpack.c.l.b16 %v907
        %v941 = vunpack.c.h.b16 %v907
        %v942 = vpack.c.b16 %v930, %v926
        %v943 = vpack.c.b16 %v931, %v927
        %v944 = vpack.c.b16 %v932, %v928
        %v945 = vpack.c.b16 %v933, %v929
        %v946 = vpack.c.b16 %v938, %v934
        %v947 = vpack.c.b16 %v939, %v935
        %v948 = vpack.c.b16 %v940, %v936
        %v949 = vpack.c.b16 %v941, %v937
        %vm958 = vcmask 261120
        %v960 = vsel %vm958, %v892, 0
        %v963 = vsel %vm958, %v893, 0
        %v966 = vsel %vm958, %v894, 0
        %v969 = vsel %vm958, %v895, 0
        %v972 = vsel %vm958, %v896, 0
        %v975 = vsel %vm958, %v897, 0
        %v978 = vsel %vm958, %v898, 0
        %v981 = vsel %vm958, %v899, 0
        %983 = vmatpush.bf16.msra.mxu0 0
        %984 = vmatpush.bf16.msra.mxu0 0
        %985 = vmatpush.bf16.msra.mxu0 0
        %986 = vmatpush.bf16.msra.mxu0 0
        %987 = vmatpush.bf16.msra.mxu0 0
        %988 = vmatpush.bf16.msra.mxu0 0
        %989 = vmatpush.bf16.msra.mxu0 %v946
        %990 = vmatpush.bf16.msra.mxu0 %v942
        %991 = vmatmul.bf16.gmra.mxu0 %v960
        %v992 = vpop.f32.mrf.mxu0
        %v993 = vadd.f32 %v910, %v992
        %v994 = vpop.f32.mrf.mxu0
        %v995 = vadd.f32 %v910, %v994
        %996 = vmatmul.bf16.gmra.mxu0 %v963
        %v997 = vpop.f32.mrf.mxu0
        %v998 = vadd.f32 %v910, %v997
        %v999 = vpop.f32.mrf.mxu0
        %v1000 = vadd.f32 %v910, %v999
        %1001 = vmatmul.bf16.gmra.mxu0 %v966
        %v1002 = vpop.f32.mrf.mxu0
        %v1003 = vadd.f32 %v910, %v1002
        %v1004 = vpop.f32.mrf.mxu0
        %v1005 = vadd.f32 %v910, %v1004
        %1006 = vmatmul.bf16.gmra.mxu0 %v969
        %v1007 = vpop.f32.mrf.mxu0
        %v1008 = vadd.f32 %v910, %v1007
        %v1009 = vpop.f32.mrf.mxu0
        %v1010 = vadd.f32 %v910, %v1009
        %1011 = vmatmul.bf16.gmra.mxu0 %v972
        %v1012 = vpop.f32.mrf.mxu0
        %v1013 = vadd.f32 %v910, %v1012
        %v1014 = vpop.f32.mrf.mxu0
        %v1015 = vadd.f32 %v910, %v1014
        %1016 = vmatmul.bf16.gmra.mxu0 %v975
        %v1017 = vpop.f32.mrf.mxu0
        %v1018 = vadd.f32 %v910, %v1017
        %v1019 = vpop.f32.mrf.mxu0
        %v1020 = vadd.f32 %v910, %v1019
        %1021 = vmatmul.bf16.gmra.mxu0 %v978
        %v1022 = vpop.f32.mrf.mxu0
        %v1023 = vadd.f32 %v910, %v1022
        %v1024 = vpop.f32.mrf.mxu0
        %v1025 = vadd.f32 %v910, %v1024
        %1026 = vmatmul.bf16.gmra.mxu0 %v981
        %v1027 = vpop.f32.mrf.mxu0
        %v1028 = vadd.f32 %v910, %v1027
        %v1029 = vpop.f32.mrf.mxu0
        %v1030 = vadd.f32 %v910, %v1029
        %1031 = vdwg.mxu0
        %1032 = vmatpush.bf16.msra.mxu0 0
        %1033 = vmatpush.bf16.msra.mxu0 0
        %1034 = vmatpush.bf16.msra.mxu0 0
        %1035 = vmatpush.bf16.msra.mxu0 0
        %1036 = vmatpush.bf16.msra.mxu0 0
        %1037 = vmatpush.bf16.msra.mxu0 0
        %1038 = vmatpush.bf16.msra.mxu0 %v947
        %1039 = vmatpush.bf16.msra.mxu0 %v943
        %1040 = vmatmul.bf16.gmra.mxu0 %v960
        %v1041 = vpop.f32.mrf.mxu0
        %v1042 = vadd.f32 %v911, %v1041
        %v1043 = vpop.f32.mrf.mxu0
        %v1044 = vadd.f32 %v911, %v1043
        %1045 = vmatmul.bf16.gmra.mxu0 %v963
        %v1046 = vpop.f32.mrf.mxu0
        %v1047 = vadd.f32 %v911, %v1046
        %v1048 = vpop.f32.mrf.mxu0
        %v1049 = vadd.f32 %v911, %v1048
        %1050 = vmatmul.bf16.gmra.mxu0 %v966
        %v1051 = vpop.f32.mrf.mxu0
        %v1052 = vadd.f32 %v911, %v1051
        %v1053 = vpop.f32.mrf.mxu0
        %v1054 = vadd.f32 %v911, %v1053
        %1055 = vmatmul.bf16.gmra.mxu0 %v969
        %v1056 = vpop.f32.mrf.mxu0
        %v1057 = vadd.f32 %v911, %v1056
        %v1058 = vpop.f32.mrf.mxu0
        %v1059 = vadd.f32 %v911, %v1058
        %1060 = vmatmul.bf16.gmra.mxu0 %v972
        %v1061 = vpop.f32.mrf.mxu0
        %v1062 = vadd.f32 %v911, %v1061
        %v1063 = vpop.f32.mrf.mxu0
        %v1064 = vadd.f32 %v911, %v1063
        %1065 = vmatmul.bf16.gmra.mxu0 %v975
        %v1066 = vpop.f32.mrf.mxu0
        %v1067 = vadd.f32 %v911, %v1066
        %v1068 = vpop.f32.mrf.mxu0
        %v1069 = vadd.f32 %v911, %v1068
        %1070 = vmatmul.bf16.gmra.mxu0 %v978
        %v1071 = vpop.f32.mrf.mxu0
        %v1072 = vadd.f32 %v911, %v1071
        %v1073 = vpop.f32.mrf.mxu0
        %v1074 = vadd.f32 %v911, %v1073
        %1075 = vmatmul.bf16.gmra.mxu0 %v981
        %v1076 = vpop.f32.mrf.mxu0
        %v1077 = vadd.f32 %v911, %v1076
        %v1078 = vpop.f32.mrf.mxu0
        %v1079 = vadd.f32 %v911, %v1078
        %1080 = vdwg.mxu0
        %1081 = vmatpush.bf16.msra.mxu0 0
        %1082 = vmatpush.bf16.msra.mxu0 0
        %1083 = vmatpush.bf16.msra.mxu0 0
        %1084 = vmatpush.bf16.msra.mxu0 0
        %1085 = vmatpush.bf16.msra.mxu0 0
        %1086 = vmatpush.bf16.msra.mxu0 0
        %1087 = vmatpush.bf16.msra.mxu0 %v948
        %1088 = vmatpush.bf16.msra.mxu0 %v944
        %1089 = vmatmul.bf16.gmra.mxu0 %v960
        %v1090 = vpop.f32.mrf.mxu0
        %v1091 = vadd.f32 %v912, %v1090
        %v1092 = vpop.f32.mrf.mxu0
        %v1093 = vadd.f32 %v912, %v1092
        %1094 = vmatmul.bf16.gmra.mxu0 %v963
        %v1095 = vpop.f32.mrf.mxu0
        %v1096 = vadd.f32 %v912, %v1095
        %v1097 = vpop.f32.mrf.mxu0
        %v1098 = vadd.f32 %v912, %v1097
        %1099 = vmatmul.bf16.gmra.mxu0 %v966
        %v1100 = vpop.f32.mrf.mxu0
        %v1101 = vadd.f32 %v912, %v1100
        %v1102 = vpop.f32.mrf.mxu0
        %v1103 = vadd.f32 %v912, %v1102
        %1104 = vmatmul.bf16.gmra.mxu0 %v969
        %v1105 = vpop.f32.mrf.mxu0
        %v1106 = vadd.f32 %v912, %v1105
        %v1107 = vpop.f32.mrf.mxu0
        %v1108 = vadd.f32 %v912, %v1107
        %1109 = vmatmul.bf16.gmra.mxu0 %v972
        %v1110 = vpop.f32.mrf.mxu0
        %v1111 = vadd.f32 %v912, %v1110
        %v1112 = vpop.f32.mrf.mxu0
        %v1113 = vadd.f32 %v912, %v1112
        %1114 = vmatmul.bf16.gmra.mxu0 %v975
        %v1115 = vpop.f32.mrf.mxu0
        %v1116 = vadd.f32 %v912, %v1115
        %v1117 = vpop.f32.mrf.mxu0
        %v1118 = vadd.f32 %v912, %v1117
        %1119 = vmatmul.bf16.gmra.mxu0 %v978
        %v1120 = vpop.f32.mrf.mxu0
        %v1121 = vadd.f32 %v912, %v1120
        %v1122 = vpop.f32.mrf.mxu0
        %v1123 = vadd.f32 %v912, %v1122
        %1124 = vmatmul.bf16.gmra.mxu0 %v981
        %v1125 = vpop.f32.mrf.mxu0
        %v1126 = vadd.f32 %v912, %v1125
        %v1127 = vpop.f32.mrf.mxu0
        %v1128 = vadd.f32 %v912, %v1127
        %1129 = vdwg.mxu0
        %1130 = vmatpush.bf16.msra.mxu0 0
        %1131 = vmatpush.bf16.msra.mxu0 0
        %1132 = vmatpush.bf16.msra.mxu0 0
        %1133 = vmatpush.bf16.msra.mxu0 0
        %1134 = vmatpush.bf16.msra.mxu0 0
        %1135 = vmatpush.bf16.msra.mxu0 0
        %1136 = vmatpush.bf16.msra.mxu0 %v949
        %1137 = vmatpush.bf16.msra.mxu0 %v945
        %1138 = vmatmul.bf16.gmra.mxu0 %v960
        %v1139 = vpop.f32.mrf.mxu0
        %v1140 = vadd.f32 %v913, %v1139
        %v1141 = vpop.f32.mrf.mxu0
        %v1142 = vadd.f32 %v913, %v1141
        %1143 = vmatmul.bf16.gmra.mxu0 %v963
        %v1144 = vpop.f32.mrf.mxu0
        %v1145 = vadd.f32 %v913, %v1144
        %v1146 = vpop.f32.mrf.mxu0
        %v1147 = vadd.f32 %v913, %v1146
        %1148 = vmatmul.bf16.gmra.mxu0 %v966
        %v1149 = vpop.f32.mrf.mxu0
        %v1150 = vadd.f32 %v913, %v1149
        %v1151 = vpop.f32.mrf.mxu0
        %v1152 = vadd.f32 %v913, %v1151
        %1153 = vmatmul.bf16.gmra.mxu0 %v969
        %v1154 = vpop.f32.mrf.mxu0
        %v1155 = vadd.f32 %v913, %v1154
        %v1156 = vpop.f32.mrf.mxu0
        %v1157 = vadd.f32 %v913, %v1156
        %1158 = vmatmul.bf16.gmra.mxu0 %v972
        %v1159 = vpop.f32.mrf.mxu0
        %v1160 = vadd.f32 %v913, %v1159
        %v1161 = vpop.f32.mrf.mxu0
        %v1162 = vadd.f32 %v913, %v1161
        %1163 = vmatmul.bf16.gmra.mxu0 %v975
        %v1164 = vpop.f32.mrf.mxu0
        %v1165 = vadd.f32 %v913, %v1164
        %v1166 = vpop.f32.mrf.mxu0
        %v1167 = vadd.f32 %v913, %v1166
        %1168 = vmatmul.bf16.gmra.mxu0 %v978
        %v1169 = vpop.f32.mrf.mxu0
        %v1170 = vadd.f32 %v913, %v1169
        %v1171 = vpop.f32.mrf.mxu0
        %v1172 = vadd.f32 %v913, %v1171
        %1173 = vmatmul.bf16.gmra.mxu0 %v981
        %v1174 = vpop.f32.mrf.mxu0
        %v1175 = vadd.f32 %v913, %v1174
        %v1176 = vpop.f32.mrf.mxu0
        %v1177 = vadd.f32 %v913, %v1176
        %1178 = vdwg.mxu0
        %vm1179 = vcmp.gt.f32.partialorder %v993, 0.0
        %vm1180 = vcmp.gt.f32.partialorder %v1042, 0.0
        %vm1181 = vcmp.gt.f32.partialorder %v1091, 0.0
        %vm1182 = vcmp.gt.f32.partialorder %v1140, 0.0
        %vm1183 = vcmp.gt.f32.partialorder %v995, 0.0
        %vm1184 = vcmp.gt.f32.partialorder %v1044, 0.0
        %vm1185 = vcmp.gt.f32.partialorder %v1093, 0.0
        %vm1186 = vcmp.gt.f32.partialorder %v1142, 0.0
        %vm1187 = vcmp.gt.f32.partialorder %v998, 0.0
        %vm1188 = vcmp.gt.f32.partialorder %v1047, 0.0
        %vm1189 = vcmp.gt.f32.partialorder %v1096, 0.0
        %vm1190 = vcmp.gt.f32.partialorder %v1145, 0.0
        %vm1191 = vcmp.gt.f32.partialorder %v1000, 0.0
        %vm1192 = vcmp.gt.f32.partialorder %v1049, 0.0
        %vm1193 = vcmp.gt.f32.partialorder %v1098, 0.0
        %vm1194 = vcmp.gt.f32.partialorder %v1147, 0.0
        %vm1195 = vcmp.gt.f32.partialorder %v1003, 0.0
        %vm1196 = vcmp.gt.f32.partialorder %v1052, 0.0
        %vm1197 = vcmp.gt.f32.partialorder %v1101, 0.0
        %vm1198 = vcmp.gt.f32.partialorder %v1150, 0.0
        %vm1199 = vcmp.gt.f32.partialorder %v1005, 0.0
        %vm1200 = vcmp.gt.f32.partialorder %v1054, 0.0
        %vm1201 = vcmp.gt.f32.partialorder %v1103, 0.0
        %vm1202 = vcmp.gt.f32.partialorder %v1152, 0.0
        %vm1203 = vcmp.gt.f32.partialorder %v1008, 0.0
        %vm1204 = vcmp.gt.f32.partialorder %v1057, 0.0
        %vm1205 = vcmp.gt.f32.partialorder %v1106, 0.0
        %vm1206 = vcmp.gt.f32.partialorder %v1155, 0.0
        %vm1207 = vcmp.gt.f32.partialorder %v1010, 0.0
        %vm1208 = vcmp.gt.f32.partialorder %v1059, 0.0
        %vm1209 = vcmp.gt.f32.partialorder %v1108, 0.0
        %vm1210 = vcmp.gt.f32.partialorder %v1157, 0.0
        %vm1211 = vcmp.gt.f32.partialorder %v1013, 0.0
        %vm1212 = vcmp.gt.f32.partialorder %v1062, 0.0
        %vm1213 = vcmp.gt.f32.partialorder %v1111, 0.0
        %vm1214 = vcmp.gt.f32.partialorder %v1160, 0.0
        %vm1215 = vcmp.gt.f32.partialorder %v1015, 0.0
        %vm1216 = vcmp.gt.f32.partialorder %v1064, 0.0
        %vm1217 = vcmp.gt.f32.partialorder %v1113, 0.0
        %vm1218 = vcmp.gt.f32.partialorder %v1162, 0.0
        %vm1219 = vcmp.gt.f32.partialorder %v1018, 0.0
        %vm1220 = vcmp.gt.f32.partialorder %v1067, 0.0
        %vm1221 = vcmp.gt.f32.partialorder %v1116, 0.0
        %vm1222 = vcmp.gt.f32.partialorder %v1165, 0.0
        %vm1223 = vcmp.gt.f32.partialorder %v1020, 0.0
        %vm1224 = vcmp.gt.f32.partialorder %v1069, 0.0
        %vm1225 = vcmp.gt.f32.partialorder %v1118, 0.0
        %vm1226 = vcmp.gt.f32.partialorder %v1167, 0.0
        %vm1227 = vcmp.gt.f32.partialorder %v1023, 0.0
        %vm1228 = vcmp.gt.f32.partialorder %v1072, 0.0
        %vm1229 = vcmp.gt.f32.partialorder %v1121, 0.0
        %vm1230 = vcmp.gt.f32.partialorder %v1170, 0.0
        %vm1231 = vcmp.gt.f32.partialorder %v1025, 0.0
        %vm1232 = vcmp.gt.f32.partialorder %v1074, 0.0
        %vm1233 = vcmp.gt.f32.partialorder %v1123, 0.0
        %vm1234 = vcmp.gt.f32.partialorder %v1172, 0.0
        %vm1235 = vcmp.gt.f32.partialorder %v1028, 0.0
        %vm1236 = vcmp.gt.f32.partialorder %v1077, 0.0
        %vm1237 = vcmp.gt.f32.partialorder %v1126, 0.0
        %vm1238 = vcmp.gt.f32.partialorder %v1175, 0.0
        %vm1239 = vcmp.gt.f32.partialorder %v1030, 0.0
        %vm1240 = vcmp.gt.f32.partialorder %v1079, 0.0
        %vm1241 = vcmp.gt.f32.partialorder %v1128, 0.0
        %vm1242 = vcmp.gt.f32.partialorder %v1177, 0.0
        %v1243 = vmul.f32 %v993, 0.01
        %v1244 = vmul.f32 %v1042, 0.01
        %v1245 = vmul.f32 %v1091, 0.01
        %v1246 = vmul.f32 %v1140, 0.01
        %v1247 = vmul.f32 %v995, 0.01
        %v1248 = vmul.f32 %v1044, 0.01
        %v1249 = vmul.f32 %v1093, 0.01
        %v1250 = vmul.f32 %v1142, 0.01
        %v1251 = vmul.f32 %v998, 0.01
        %v1252 = vmul.f32 %v1047, 0.01
        %v1253 = vmul.f32 %v1096, 0.01
        %v1254 = vmul.f32 %v1145, 0.01
        %v1255 = vmul.f32 %v1000, 0.01
        %v1256 = vmul.f32 %v1049, 0.01
        %v1257 = vmul.f32 %v1098, 0.01
        %v1258 = vmul.f32 %v1147, 0.01
        %v1259 = vmul.f32 %v1003, 0.01
        %v1260 = vmul.f32 %v1052, 0.01
        %v1261 = vmul.f32 %v1101, 0.01
        %v1262 = vmul.f32 %v1150, 0.01
        %v1263 = vmul.f32 %v1005, 0.01
        %v1264 = vmul.f32 %v1054, 0.01
        %v1265 = vmul.f32 %v1103, 0.01
        %v1266 = vmul.f32 %v1152, 0.01
        %v1267 = vmul.f32 %v1008, 0.01
        %v1268 = vmul.f32 %v1057, 0.01
        %v1269 = vmul.f32 %v1106, 0.01
        %v1270 = vmul.f32 %v1155, 0.01
        %v1271 = vmul.f32 %v1010, 0.01
        %v1272 = vmul.f32 %v1059, 0.01
        %v1273 = vmul.f32 %v1108, 0.01
        %v1274 = vmul.f32 %v1157, 0.01
        %v1275 = vmul.f32 %v1013, 0.01
        %v1276 = vmul.f32 %v1062, 0.01
        %v1277 = vmul.f32 %v1111, 0.01
        %v1278 = vmul.f32 %v1160, 0.01
        %v1279 = vmul.f32 %v1015, 0.01
        %v1280 = vmul.f32 %v1064, 0.01
        %v1281 = vmul.f32 %v1113, 0.01
        %v1282 = vmul.f32 %v1162, 0.01
        %v1283 = vmul.f32 %v1018, 0.01
        %v1284 = vmul.f32 %v1067, 0.01
        %v1285 = vmul.f32 %v1116, 0.01
        %v1286 = vmul.f32 %v1165, 0.01
        %v1287 = vmul.f32 %v1020, 0.01
        %v1288 = vmul.f32 %v1069, 0.01
        %v1289 = vmul.f32 %v1118, 0.01
        %v1290 = vmul.f32 %v1167, 0.01
        %v1291 = vmul.f32 %v1023, 0.01
        %v1292 = vmul.f32 %v1072, 0.01
        %v1293 = vmul.f32 %v1121, 0.01
        %v1294 = vmul.f32 %v1170, 0.01
        %v1295 = vmul.f32 %v1025, 0.01
        %v1296 = vmul.f32 %v1074, 0.01
        %v1297 = vmul.f32 %v1123, 0.01
        %v1298 = vmul.f32 %v1172, 0.01
        %v1299 = vmul.f32 %v1028, 0.01
        %v1300 = vmul.f32 %v1077, 0.01
        %v1301 = vmul.f32 %v1126, 0.01
        %v1302 = vmul.f32 %v1175, 0.01
        %v1303 = vmul.f32 %v1030, 0.01
        %v1304 = vmul.f32 %v1079, 0.01
        %v1305 = vmul.f32 %v1128, 0.01
        %v1306 = vmul.f32 %v1177, 0.01
        %v1307 = vsel %vm1179, %v993, %v1243
        %v1308 = vsel %vm1180, %v1042, %v1244
        %v1309 = vsel %vm1181, %v1091, %v1245
        %v1310 = vsel %vm1182, %v1140, %v1246
        %v1311 = vsel %vm1183, %v995, %v1247
        %v1312 = vsel %vm1184, %v1044, %v1248
        %v1313 = vsel %vm1185, %v1093, %v1249
        %v1314 = vsel %vm1186, %v1142, %v1250
        %v1315 = vsel %vm1187, %v998, %v1251
        %v1316 = vsel %vm1188, %v1047, %v1252
        %v1317 = vsel %vm1189, %v1096, %v1253
        %v1318 = vsel %vm1190, %v1145, %v1254
        %v1319 = vsel %vm1191, %v1000, %v1255
        %v1320 = vsel %vm1192, %v1049, %v1256
        %v1321 = vsel %vm1193, %v1098, %v1257
        %v1322 = vsel %vm1194, %v1147, %v1258
        %v1323 = vsel %vm1195, %v1003, %v1259
        %v1324 = vsel %vm1196, %v1052, %v1260
        %v1325 = vsel %vm1197, %v1101, %v1261
        %v1326 = vsel %vm1198, %v1150, %v1262
        %v1327 = vsel %vm1199, %v1005, %v1263
        %v1328 = vsel %vm1200, %v1054, %v1264
        %v1329 = vsel %vm1201, %v1103, %v1265
        %v1330 = vsel %vm1202, %v1152, %v1266
        %v1331 = vsel %vm1203, %v1008, %v1267
        %v1332 = vsel %vm1204, %v1057, %v1268
        %v1333 = vsel %vm1205, %v1106, %v1269
        %v1334 = vsel %vm1206, %v1155, %v1270
        %v1335 = vsel %vm1207, %v1010, %v1271
        %v1336 = vsel %vm1208, %v1059, %v1272
        %v1337 = vsel %vm1209, %v1108, %v1273
        %v1338 = vsel %vm1210, %v1157, %v1274
        %v1339 = vsel %vm1211, %v1013, %v1275
        %v1340 = vsel %vm1212, %v1062, %v1276
        %v1341 = vsel %vm1213, %v1111, %v1277
        %v1342 = vsel %vm1214, %v1160, %v1278
        %v1343 = vsel %vm1215, %v1015, %v1279
        %v1344 = vsel %vm1216, %v1064, %v1280
        %v1345 = vsel %vm1217, %v1113, %v1281
        %v1346 = vsel %vm1218, %v1162, %v1282
        %v1347 = vsel %vm1219, %v1018, %v1283
        %v1348 = vsel %vm1220, %v1067, %v1284
        %v1349 = vsel %vm1221, %v1116, %v1285
        %v1350 = vsel %vm1222, %v1165, %v1286
        %v1351 = vsel %vm1223, %v1020, %v1287
        %v1352 = vsel %vm1224, %v1069, %v1288
        %v1353 = vsel %vm1225, %v1118, %v1289
        %v1354 = vsel %vm1226, %v1167, %v1290
        %v1355 = vsel %vm1227, %v1023, %v1291
        %v1356 = vsel %vm1228, %v1072, %v1292
        %v1357 = vsel %vm1229, %v1121, %v1293
        %v1358 = vsel %vm1230, %v1170, %v1294
        %v1359 = vsel %vm1231, %v1025, %v1295
        %v1360 = vsel %vm1232, %v1074, %v1296
        %v1361 = vsel %vm1233, %v1123, %v1297
        %v1362 = vsel %vm1234, %v1172, %v1298
        %v1363 = vsel %vm1235, %v1028, %v1299
        %v1364 = vsel %vm1236, %v1077, %v1300
        %v1365 = vsel %vm1237, %v1126, %v1301
        %v1366 = vsel %vm1238, %v1175, %v1302
        %v1367 = vsel %vm1239, %v1030, %v1303
        %v1368 = vsel %vm1240, %v1079, %v1304
        %v1369 = vsel %vm1241, %v1128, %v1305
        %v1370 = vsel %vm1242, %v1177, %v1306
        %v1371 = vpack.c.bf16 %v1311, %v1307
        %v1372 = vpack.c.bf16 %v1312, %v1308
        %v1373 = vpack.c.bf16 %v1313, %v1309
        %v1374 = vpack.c.bf16 %v1314, %v1310
        %v1375 = vpack.c.bf16 %v1319, %v1315
        %v1376 = vpack.c.bf16 %v1320, %v1316
        %v1377 = vpack.c.bf16 %v1321, %v1317
        %v1378 = vpack.c.bf16 %v1322, %v1318
        %v1379 = vpack.c.bf16 %v1327, %v1323
        %v1380 = vpack.c.bf16 %v1328, %v1324
        %v1381 = vpack.c.bf16 %v1329, %v1325
        %v1382 = vpack.c.bf16 %v1330, %v1326
        %v1383 = vpack.c.bf16 %v1335, %v1331
        %v1384 = vpack.c.bf16 %v1336, %v1332
        %v1385 = vpack.c.bf16 %v1337, %v1333
        %v1386 = vpack.c.bf16 %v1338, %v1334
        %v1387 = vpack.c.bf16 %v1343, %v1339
        %v1388 = vpack.c.bf16 %v1344, %v1340
        %v1389 = vpack.c.bf16 %v1345, %v1341
        %v1390 = vpack.c.bf16 %v1346, %v1342
        %v1391 = vpack.c.bf16 %v1351, %v1347
        %v1392 = vpack.c.bf16 %v1352, %v1348
        %v1393 = vpack.c.bf16 %v1353, %v1349
        %v1394 = vpack.c.bf16 %v1354, %v1350
        %v1395 = vpack.c.bf16 %v1359, %v1355
        %v1396 = vpack.c.bf16 %v1360, %v1356
        %v1397 = vpack.c.bf16 %v1361, %v1357
        %v1398 = vpack.c.bf16 %v1362, %v1358
        %v1399 = vpack.c.bf16 %v1367, %v1363
        %v1400 = vpack.c.bf16 %v1368, %v1364
        %v1401 = vpack.c.bf16 %v1369, %v1365
        %v1402 = vpack.c.bf16 %v1370, %v1366
        %v1403 = vld [vmem:[#allocation2] sm:$0xff]
        %v1404 = vld [vmem:[#allocation2 + $0x8] sm:$0xff]
        %v1405 = vld [vmem:[#allocation2 + $0x10] sm:$0xff]
        %v1406 = vld [vmem:[#allocation2 + $0x18] sm:$0xff]
        %v1407 = vld [vmem:[#allocation2 + $0x20] sm:$0xff]
        %v1408 = vld [vmem:[#allocation2 + $0x28] sm:$0xff]
        %v1409 = vld [vmem:[#allocation2 + $0x30] sm:$0xff]
        %v1410 = vld [vmem:[#allocation2 + $0x38] sm:$0xff]
        %v1411 = vld [vmem:[#allocation2 + $0x40] sm:$0xff]
        %v1412 = vld [vmem:[#allocation2 + $0x48] sm:$0xff]
        %v1413 = vld [vmem:[#allocation2 + $0x50] sm:$0xff]
        %v1414 = vld [vmem:[#allocation2 + $0x58] sm:$0xff]
        %v1415 = vld [vmem:[#allocation2 + $0x60] sm:$0xff]
        %v1416 = vld [vmem:[#allocation2 + $0x68] sm:$0xff]
        %v1417 = vld [vmem:[#allocation2 + $0x70] sm:$0xff]
        %v1418 = vld [vmem:[#allocation2 + $0x78] sm:$0xff]
        %v1419 = vld [vmem:[#allocation2 + $0x80] sm:$0xff]
        %v1420 = vld [vmem:[#allocation2 + $0x88] sm:$0xff]
        %v1421 = vld [vmem:[#allocation2 + $0x90] sm:$0xff]
        %v1422 = vld [vmem:[#allocation2 + $0x98] sm:$0xff]
        %v1423 = vld [vmem:[#allocation2 + $0xa0] sm:$0xff]
        %v1424 = vld [vmem:[#allocation2 + $0xa8] sm:$0xff]
        %v1425 = vld [vmem:[#allocation2 + $0xb0] sm:$0xff]
        %v1426 = vld [vmem:[#allocation2 + $0xb8] sm:$0xff]
        %v1427 = vld [vmem:[#allocation2 + $0xc0] sm:$0xff]
        %v1428 = vld [vmem:[#allocation2 + $0xc8] sm:$0xff]
        %v1429 = vld [vmem:[#allocation2 + $0xd0] sm:$0xff]
        %v1430 = vld [vmem:[#allocation2 + $0xd8] sm:$0xff]
        %v1431 = vld [vmem:[#allocation2 + $0xe0] sm:$0xff]
        %v1432 = vld [vmem:[#allocation2 + $0xe8] sm:$0xff]
        %v1433 = vld [vmem:[#allocation2 + $0xf0] sm:$0xff]
        %v1434 = vld [vmem:[#allocation2 + $0xf8] sm:$0xff]
        %v1435 = vld [vmem:[#allocation2 + $0x100] sm:$0xff]
        %v1436 = vld [vmem:[#allocation2 + $0x108] sm:$0xff]
        %v1437 = vld [vmem:[#allocation2 + $0x110] sm:$0xff]
        %v1438 = vld [vmem:[#allocation2 + $0x118] sm:$0xff]
        %v1439 = vld [vmem:[#allocation2 + $0x120] sm:$0xff]
        %v1440 = vld [vmem:[#allocation2 + $0x128] sm:$0xff]
        %v1441 = vld [vmem:[#allocation2 + $0x130] sm:$0xff]
        %v1442 = vld [vmem:[#allocation2 + $0x138] sm:$0xff]
        %v1443 = vld [vmem:[#allocation2 + $0x140] sm:$0xff]
        %v1444 = vld [vmem:[#allocation2 + $0x148] sm:$0xff]
        %v1445 = vld [vmem:[#allocation2 + $0x150] sm:$0xff]
        %v1446 = vld [vmem:[#allocation2 + $0x158] sm:$0xff]
        %v1447 = vld [vmem:[#allocation2 + $0x160] sm:$0xff]
        %v1448 = vld [vmem:[#allocation2 + $0x168] sm:$0xff]
        %v1449 = vld [vmem:[#allocation2 + $0x170] sm:$0xff]
        %v1450 = vld [vmem:[#allocation2 + $0x178] sm:$0xff]
        %v1451 = vld [vmem:[#allocation2 + $0x180] sm:$0xff]
        %v1452 = vld [vmem:[#allocation2 + $0x188] sm:$0xff]
        %v1453 = vld [vmem:[#allocation2 + $0x190] sm:$0xff]
        %v1454 = vld [vmem:[#allocation2 + $0x198] sm:$0xff]
        %v1455 = vld [vmem:[#allocation2 + $0x1a0] sm:$0xff]
        %v1456 = vld [vmem:[#allocation2 + $0x1a8] sm:$0xff]
        %v1457 = vld [vmem:[#allocation2 + $0x1b0] sm:$0xff]
        %v1458 = vld [vmem:[#allocation2 + $0x1b8] sm:$0xff]
        %v1459 = vld [vmem:[#allocation2 + $0x1c0] sm:$0xff]
        %v1460 = vld [vmem:[#allocation2 + $0x1c8] sm:$0xff]
        %v1461 = vld [vmem:[#allocation2 + $0x1d0] sm:$0xff]
        %v1462 = vld [vmem:[#allocation2 + $0x1d8] sm:$0xff]
        %v1463 = vld [vmem:[#allocation2 + $0x1e0] sm:$0xff]
        %v1464 = vld [vmem:[#allocation2 + $0x1e8] sm:$0xff]
        %v1465 = vld [vmem:[#allocation2 + $0x1f0] sm:$0xff]
        %v1466 = vld [vmem:[#allocation2 + $0x1f8] sm:$0xff]
        %v1467 = vld [vmem:[#allocation2 + $0x200] sm:$0xff]
        %v1468 = vld [vmem:[#allocation2 + $0x208] sm:$0xff]
        %v1469 = vld [vmem:[#allocation2 + $0x210] sm:$0xff]
        %v1470 = vld [vmem:[#allocation2 + $0x218] sm:$0xff]
        %v1471 = vld [vmem:[#allocation2 + $0x220] sm:$0xff]
        %v1472 = vld [vmem:[#allocation2 + $0x228] sm:$0xff]
        %v1473 = vld [vmem:[#allocation2 + $0x230] sm:$0xff]
        %v1474 = vld [vmem:[#allocation2 + $0x238] sm:$0xff]
        %v1475 = vld [vmem:[#allocation2 + $0x240] sm:$0xff]
        %v1476 = vld [vmem:[#allocation2 + $0x248] sm:$0xff]
        %v1477 = vld [vmem:[#allocation2 + $0x250] sm:$0xff]
        %v1478 = vld [vmem:[#allocation2 + $0x258] sm:$0xff]
        %v1479 = vld [vmem:[#allocation2 + $0x260] sm:$0xff]
        %v1480 = vld [vmem:[#allocation2 + $0x268] sm:$0xff]
        %v1481 = vld [vmem:[#allocation2 + $0x270] sm:$0xff]
        %v1482 = vld [vmem:[#allocation2 + $0x278] sm:$0xff]
        %v1483 = vld [vmem:[#allocation2 + $0x280] sm:$0xff]
        %v1484 = vld [vmem:[#allocation2 + $0x288] sm:$0xff]
        %v1485 = vld [vmem:[#allocation2 + $0x290] sm:$0xff]
        %v1486 = vld [vmem:[#allocation2 + $0x298] sm:$0xff]
        %v1487 = vld [vmem:[#allocation2 + $0x2a0] sm:$0xff]
        %v1488 = vld [vmem:[#allocation2 + $0x2a8] sm:$0xff]
        %v1489 = vld [vmem:[#allocation2 + $0x2b0] sm:$0xff]
        %v1490 = vld [vmem:[#allocation2 + $0x2b8] sm:$0xff]
        %v1491 = vld [vmem:[#allocation2 + $0x2c0] sm:$0xff]
        %v1492 = vld [vmem:[#allocation2 + $0x2c8] sm:$0xff]
        %v1493 = vld [vmem:[#allocation2 + $0x2d0] sm:$0xff]
        %v1494 = vld [vmem:[#allocation2 + $0x2d8] sm:$0xff]
        %v1495 = vld [vmem:[#allocation2 + $0x2e0] sm:$0xff]
        %v1496 = vld [vmem:[#allocation2 + $0x2e8] sm:$0xff]
        %v1497 = vld [vmem:[#allocation2 + $0x2f0] sm:$0xff]
        %v1498 = vld [vmem:[#allocation2 + $0x2f8] sm:$0xff]
        %v1499 = vld [vmem:[#allocation2 + $0x300] sm:$0xff]
        %v1500 = vld [vmem:[#allocation2 + $0x308] sm:$0xff]
        %v1501 = vld [vmem:[#allocation2 + $0x310] sm:$0xff]
        %v1502 = vld [vmem:[#allocation2 + $0x318] sm:$0xff]
        %v1503 = vld [vmem:[#allocation2 + $0x320] sm:$0xff]
        %v1504 = vld [vmem:[#allocation2 + $0x328] sm:$0xff]
        %v1505 = vld [vmem:[#allocation2 + $0x330] sm:$0xff]
        %v1506 = vld [vmem:[#allocation2 + $0x338] sm:$0xff]
        %v1507 = vld [vmem:[#allocation2 + $0x340] sm:$0xff]
        %v1508 = vld [vmem:[#allocation2 + $0x348] sm:$0xff]
        %v1509 = vld [vmem:[#allocation2 + $0x350] sm:$0xff]
        %v1510 = vld [vmem:[#allocation2 + $0x358] sm:$0xff]
        %v1511 = vld [vmem:[#allocation2 + $0x360] sm:$0xff]
        %v1512 = vld [vmem:[#allocation2 + $0x368] sm:$0xff]
        %v1513 = vld [vmem:[#allocation2 + $0x370] sm:$0xff]
        %v1514 = vld [vmem:[#allocation2 + $0x378] sm:$0xff]
        %v1515 = vld [vmem:[#allocation2 + $0x380] sm:$0xff]
        %v1516 = vld [vmem:[#allocation2 + $0x388] sm:$0xff]
        %v1517 = vld [vmem:[#allocation2 + $0x390] sm:$0xff]
        %v1518 = vld [vmem:[#allocation2 + $0x398] sm:$0xff]
        %v1519 = vld [vmem:[#allocation2 + $0x3a0] sm:$0xff]
        %v1520 = vld [vmem:[#allocation2 + $0x3a8] sm:$0xff]
        %v1521 = vld [vmem:[#allocation2 + $0x3b0] sm:$0xff]
        %v1522 = vld [vmem:[#allocation2 + $0x3b8] sm:$0xff]
        %v1523 = vld [vmem:[#allocation2 + $0x3c0] sm:$0xff]
        %v1524 = vld [vmem:[#allocation2 + $0x3c8] sm:$0xff]
        %v1525 = vld [vmem:[#allocation2 + $0x3d0] sm:$0xff]
        %v1526 = vld [vmem:[#allocation2 + $0x3d8] sm:$0xff]
        %v1527 = vld [vmem:[#allocation2 + $0x3e0] sm:$0xff]
        %v1528 = vld [vmem:[#allocation2 + $0x3e8] sm:$0xff]
        %v1529 = vld [vmem:[#allocation2 + $0x3f0] sm:$0xff]
        %v1530 = vld [vmem:[#allocation2 + $0x3f8] sm:$0xff]
        %v1531 = vld [vmem:[%s9] sm:$0xf]
        %v1533 = vperm.slane %v1531, 0
        %v1534 = vperm.slane %v1531, 1
        %v1535 = vperm.slane %v1531, 2
        %v1536 = vperm.slane %v1531, 3
        %v1669 = vunpack.c.l.b16 %v1403
        %v1670 = vunpack.c.h.b16 %v1403
        %v1671 = vunpack.c.l.b16 %v1404
        %v1672 = vunpack.c.h.b16 %v1404
        %v1673 = vunpack.c.l.b16 %v1405
        %v1674 = vunpack.c.h.b16 %v1405
        %v1675 = vunpack.c.l.b16 %v1406
        %v1676 = vunpack.c.h.b16 %v1406
        %v1677 = vunpack.c.l.b16 %v1407
        %v1678 = vunpack.c.h.b16 %v1407
        %v1679 = vunpack.c.l.b16 %v1408
        %v1680 = vunpack.c.h.b16 %v1408
        %v1681 = vunpack.c.l.b16 %v1409
        %v1682 = vunpack.c.h.b16 %v1409
        %v1683 = vunpack.c.l.b16 %v1410
        %v1684 = vunpack.c.h.b16 %v1410
        %v1685 = vunpack.c.l.b16 %v1411
        %v1686 = vunpack.c.h.b16 %v1411
        %v1687 = vunpack.c.l.b16 %v1412
        %v1688 = vunpack.c.h.b16 %v1412
        %v1689 = vunpack.c.l.b16 %v1413
        %v1690 = vunpack.c.h.b16 %v1413
        %v1691 = vunpack.c.l.b16 %v1414
        %v1692 = vunpack.c.h.b16 %v1414
        %v1693 = vunpack.c.l.b16 %v1415
        %v1694 = vunpack.c.h.b16 %v1415
        %v1695 = vunpack.c.l.b16 %v1416
        %v1696 = vunpack.c.h.b16 %v1416
        %v1697 = vunpack.c.l.b16 %v1417
        %v1698 = vunpack.c.h.b16 %v1417
        %v1699 = vunpack.c.l.b16 %v1418
        %v1700 = vunpack.c.h.b16 %v1418
        %v1701 = vunpack.c.l.b16 %v1419
        %v1702 = vunpack.c.h.b16 %v1419
        %v1703 = vunpack.c.l.b16 %v1420
        %v1704 = vunpack.c.h.b16 %v1420
        %v1705 = vunpack.c.l.b16 %v1421
        %v1706 = vunpack.c.h.b16 %v1421
        %v1707 = vunpack.c.l.b16 %v1422
        %v1708 = vunpack.c.h.b16 %v1422
        %v1709 = vunpack.c.l.b16 %v1423
        %v1710 = vunpack.c.h.b16 %v1423
        %v1711 = vunpack.c.l.b16 %v1424
        %v1712 = vunpack.c.h.b16 %v1424
        %v1713 = vunpack.c.l.b16 %v1425
        %v1714 = vunpack.c.h.b16 %v1425
        %v1715 = vunpack.c.l.b16 %v1426
        %v1716 = vunpack.c.h.b16 %v1426
        %v1717 = vunpack.c.l.b16 %v1427
        %v1718 = vunpack.c.h.b16 %v1427
        %v1719 = vunpack.c.l.b16 %v1428
        %v1720 = vunpack.c.h.b16 %v1428
        %v1721 = vunpack.c.l.b16 %v1429
        %v1722 = vunpack.c.h.b16 %v1429
        %v1723 = vunpack.c.l.b16 %v1430
        %v1724 = vunpack.c.h.b16 %v1430
        %v1725 = vunpack.c.l.b16 %v1431
        %v1726 = vunpack.c.h.b16 %v1431
        %v1727 = vunpack.c.l.b16 %v1432
        %v1728 = vunpack.c.h.b16 %v1432
        %v1729 = vunpack.c.l.b16 %v1433
        %v1730 = vunpack.c.h.b16 %v1433
        %v1731 = vunpack.c.l.b16 %v1434
        %v1732 = vunpack.c.h.b16 %v1434
        %v1733 = vunpack.c.l.b16 %v1435
        %v1734 = vunpack.c.h.b16 %v1435
        %v1735 = vunpack.c.l.b16 %v1436
        %v1736 = vunpack.c.h.b16 %v1436
        %v1737 = vunpack.c.l.b16 %v1437
        %v1738 = vunpack.c.h.b16 %v1437
        %v1739 = vunpack.c.l.b16 %v1438
        %v1740 = vunpack.c.h.b16 %v1438
        %v1741 = vunpack.c.l.b16 %v1439
        %v1742 = vunpack.c.h.b16 %v1439
        %v1743 = vunpack.c.l.b16 %v1440
        %v1744 = vunpack.c.h.b16 %v1440
        %v1745 = vunpack.c.l.b16 %v1441
        %v1746 = vunpack.c.h.b16 %v1441
        %v1747 = vunpack.c.l.b16 %v1442
        %v1748 = vunpack.c.h.b16 %v1442
        %v1749 = vunpack.c.l.b16 %v1443
        %v1750 = vunpack.c.h.b16 %v1443
        %v1751 = vunpack.c.l.b16 %v1444
        %v1752 = vunpack.c.h.b16 %v1444
        %v1753 = vunpack.c.l.b16 %v1445
        %v1754 = vunpack.c.h.b16 %v1445
        %v1755 = vunpack.c.l.b16 %v1446
        %v1756 = vunpack.c.h.b16 %v1446
        %v1757 = vunpack.c.l.b16 %v1447
        %v1758 = vunpack.c.h.b16 %v1447
        %v1759 = vunpack.c.l.b16 %v1448
        %v1760 = vunpack.c.h.b16 %v1448
        %v1761 = vunpack.c.l.b16 %v1449
        %v1762 = vunpack.c.h.b16 %v1449
        %v1763 = vunpack.c.l.b16 %v1450
        %v1764 = vunpack.c.h.b16 %v1450
        %v1765 = vunpack.c.l.b16 %v1451
        %v1766 = vunpack.c.h.b16 %v1451
        %v1767 = vunpack.c.l.b16 %v1452
        %v1768 = vunpack.c.h.b16 %v1452
        %v1769 = vunpack.c.l.b16 %v1453
        %v1770 = vunpack.c.h.b16 %v1453
        %v1771 = vunpack.c.l.b16 %v1454
        %v1772 = vunpack.c.h.b16 %v1454
        %v1773 = vunpack.c.l.b16 %v1455
        %v1774 = vunpack.c.h.b16 %v1455
        %v1775 = vunpack.c.l.b16 %v1456
        %v1776 = vunpack.c.h.b16 %v1456
        %v1777 = vunpack.c.l.b16 %v1457
        %v1778 = vunpack.c.h.b16 %v1457
        %v1779 = vunpack.c.l.b16 %v1458
        %v1780 = vunpack.c.h.b16 %v1458
        %v1781 = vunpack.c.l.b16 %v1459
        %v1782 = vunpack.c.h.b16 %v1459
        %v1783 = vunpack.c.l.b16 %v1460
        %v1784 = vunpack.c.h.b16 %v1460
        %v1785 = vunpack.c.l.b16 %v1461
        %v1786 = vunpack.c.h.b16 %v1461
        %v1787 = vunpack.c.l.b16 %v1462
        %v1788 = vunpack.c.h.b16 %v1462
        %v1789 = vunpack.c.l.b16 %v1463
        %v1790 = vunpack.c.h.b16 %v1463
        %v1791 = vunpack.c.l.b16 %v1464
        %v1792 = vunpack.c.h.b16 %v1464
        %v1793 = vunpack.c.l.b16 %v1465
        %v1794 = vunpack.c.h.b16 %v1465
        %v1795 = vunpack.c.l.b16 %v1466
        %v1796 = vunpack.c.h.b16 %v1466
        %v1797 = vunpack.c.l.b16 %v1467
        %v1798 = vunpack.c.h.b16 %v1467
        %v1799 = vunpack.c.l.b16 %v1468
        %v1800 = vunpack.c.h.b16 %v1468
        %v1801 = vunpack.c.l.b16 %v1469
        %v1802 = vunpack.c.h.b16 %v1469
        %v1803 = vunpack.c.l.b16 %v1470
        %v1804 = vunpack.c.h.b16 %v1470
        %v1805 = vunpack.c.l.b16 %v1471
        %v1806 = vunpack.c.h.b16 %v1471
        %v1807 = vunpack.c.l.b16 %v1472
        %v1808 = vunpack.c.h.b16 %v1472
        %v1809 = vunpack.c.l.b16 %v1473
        %v1810 = vunpack.c.h.b16 %v1473
        %v1811 = vunpack.c.l.b16 %v1474
        %v1812 = vunpack.c.h.b16 %v1474
        %v1813 = vunpack.c.l.b16 %v1475
        %v1814 = vunpack.c.h.b16 %v1475
        %v1815 = vunpack.c.l.b16 %v1476
        %v1816 = vunpack.c.h.b16 %v1476
        %v1817 = vunpack.c.l.b16 %v1477
        %v1818 = vunpack.c.h.b16 %v1477
        %v1819 = vunpack.c.l.b16 %v1478
        %v1820 = vunpack.c.h.b16 %v1478
        %v1821 = vunpack.c.l.b16 %v1479
        %v1822 = vunpack.c.h.b16 %v1479
        %v1823 = vunpack.c.l.b16 %v1480
        %v1824 = vunpack.c.h.b16 %v1480
        %v1825 = vunpack.c.l.b16 %v1481
        %v1826 = vunpack.c.h.b16 %v1481
        %v1827 = vunpack.c.l.b16 %v1482
        %v1828 = vunpack.c.h.b16 %v1482
        %v1829 = vunpack.c.l.b16 %v1483
        %v1830 = vunpack.c.h.b16 %v1483
        %v1831 = vunpack.c.l.b16 %v1484
        %v1832 = vunpack.c.h.b16 %v1484
        %v1833 = vunpack.c.l.b16 %v1485
        %v1834 = vunpack.c.h.b16 %v1485
        %v1835 = vunpack.c.l.b16 %v1486
        %v1836 = vunpack.c.h.b16 %v1486
        %v1837 = vunpack.c.l.b16 %v1487
        %v1838 = vunpack.c.h.b16 %v1487
        %v1839 = vunpack.c.l.b16 %v1488
        %v1840 = vunpack.c.h.b16 %v1488
        %v1841 = vunpack.c.l.b16 %v1489
        %v1842 = vunpack.c.h.b16 %v1489
        %v1843 = vunpack.c.l.b16 %v1490
        %v1844 = vunpack.c.h.b16 %v1490
        %v1845 = vunpack.c.l.b16 %v1491
        %v1846 = vunpack.c.h.b16 %v1491
        %v1847 = vunpack.c.l.b16 %v1492
        %v1848 = vunpack.c.h.b16 %v1492
        %v1849 = vunpack.c.l.b16 %v1493
        %v1850 = vunpack.c.h.b16 %v1493
        %v1851 = vunpack.c.l.b16 %v1494
        %v1852 = vunpack.c.h.b16 %v1494
        %v1853 = vunpack.c.l.b16 %v1495
        %v1854 = vunpack.c.h.b16 %v1495
        %v1855 = vunpack.c.l.b16 %v1496
        %v1856 = vunpack.c.h.b16 %v1496
        %v1857 = vunpack.c.l.b16 %v1497
        %v1858 = vunpack.c.h.b16 %v1497
        %v1859 = vunpack.c.l.b16 %v1498
        %v1860 = vunpack.c.h.b16 %v1498
        %v1861 = vunpack.c.l.b16 %v1499
        %v1862 = vunpack.c.h.b16 %v1499
        %v1863 = vunpack.c.l.b16 %v1500
        %v1864 = vunpack.c.h.b16 %v1500
        %v1865 = vunpack.c.l.b16 %v1501
        %v1866 = vunpack.c.h.b16 %v1501
        %v1867 = vunpack.c.l.b16 %v1502
        %v1868 = vunpack.c.h.b16 %v1502
        %v1869 = vunpack.c.l.b16 %v1503
        %v1870 = vunpack.c.h.b16 %v1503
        %v1871 = vunpack.c.l.b16 %v1504
        %v1872 = vunpack.c.h.b16 %v1504
        %v1873 = vunpack.c.l.b16 %v1505
        %v1874 = vunpack.c.h.b16 %v1505
        %v1875 = vunpack.c.l.b16 %v1506
        %v1876 = vunpack.c.h.b16 %v1506
        %v1877 = vunpack.c.l.b16 %v1507
        %v1878 = vunpack.c.h.b16 %v1507
        %v1879 = vunpack.c.l.b16 %v1508
        %v1880 = vunpack.c.h.b16 %v1508
        %v1881 = vunpack.c.l.b16 %v1509
        %v1882 = vunpack.c.h.b16 %v1509
        %v1883 = vunpack.c.l.b16 %v1510
        %v1884 = vunpack.c.h.b16 %v1510
        %v1885 = vunpack.c.l.b16 %v1511
        %v1886 = vunpack.c.h.b16 %v1511
        %v1887 = vunpack.c.l.b16 %v1512
        %v1888 = vunpack.c.h.b16 %v1512
        %v1889 = vunpack.c.l.b16 %v1513
        %v1890 = vunpack.c.h.b16 %v1513
        %v1891 = vunpack.c.l.b16 %v1514
        %v1892 = vunpack.c.h.b16 %v1514
        %v1893 = vunpack.c.l.b16 %v1515
        %v1894 = vunpack.c.h.b16 %v1515
        %v1895 = vunpack.c.l.b16 %v1516
        %v1896 = vunpack.c.h.b16 %v1516
        %v1897 = vunpack.c.l.b16 %v1517
        %v1898 = vunpack.c.h.b16 %v1517
        %v1899 = vunpack.c.l.b16 %v1518
        %v1900 = vunpack.c.h.b16 %v1518
        %v1901 = vunpack.c.l.b16 %v1519
        %v1902 = vunpack.c.h.b16 %v1519
        %v1903 = vunpack.c.l.b16 %v1520
        %v1904 = vunpack.c.h.b16 %v1520
        %v1905 = vunpack.c.l.b16 %v1521
        %v1906 = vunpack.c.h.b16 %v1521
        %v1907 = vunpack.c.l.b16 %v1522
        %v1908 = vunpack.c.h.b16 %v1522
        %v1909 = vunpack.c.l.b16 %v1523
        %v1910 = vunpack.c.h.b16 %v1523
        %v1911 = vunpack.c.l.b16 %v1524
        %v1912 = vunpack.c.h.b16 %v1524
        %v1913 = vunpack.c.l.b16 %v1525
        %v1914 = vunpack.c.h.b16 %v1525
        %v1915 = vunpack.c.l.b16 %v1526
        %v1916 = vunpack.c.h.b16 %v1526
        %v1917 = vunpack.c.l.b16 %v1527
        %v1918 = vunpack.c.h.b16 %v1527
        %v1919 = vunpack.c.l.b16 %v1528
        %v1920 = vunpack.c.h.b16 %v1528
        %v1921 = vunpack.c.l.b16 %v1529
        %v1922 = vunpack.c.h.b16 %v1529
        %v1923 = vunpack.c.l.b16 %v1530
        %v1924 = vunpack.c.h.b16 %v1530
        %v1925 = vpack.c.b16 %v1673, %v1669
        %v1926 = vpack.c.b16 %v1674, %v1670
        %v1927 = vpack.c.b16 %v1675, %v1671
        %v1928 = vpack.c.b16 %v1676, %v1672
        %v1929 = vpack.c.b16 %v1681, %v1677
        %v1930 = vpack.c.b16 %v1682, %v1678
        %v1931 = vpack.c.b16 %v1683, %v1679
        %v1932 = vpack.c.b16 %v1684, %v1680
        %v1933 = vpack.c.b16 %v1689, %v1685
        %v1934 = vpack.c.b16 %v1690, %v1686
        %v1935 = vpack.c.b16 %v1691, %v1687
        %v1936 = vpack.c.b16 %v1692, %v1688
        %v1937 = vpack.c.b16 %v1697, %v1693
        %v1938 = vpack.c.b16 %v1698, %v1694
        %v1939 = vpack.c.b16 %v1699, %v1695
        %v1940 = vpack.c.b16 %v1700, %v1696
        %v1941 = vpack.c.b16 %v1705, %v1701
        %v1942 = vpack.c.b16 %v1706, %v1702
        %v1943 = vpack.c.b16 %v1707, %v1703
        %v1944 = vpack.c.b16 %v1708, %v1704
        %v1945 = vpack.c.b16 %v1713, %v1709
        %v1946 = vpack.c.b16 %v1714, %v1710
        %v1947 = vpack.c.b16 %v1715, %v1711
        %v1948 = vpack.c.b16 %v1716, %v1712
        %v1949 = vpack.c.b16 %v1721, %v1717
        %v1950 = vpack.c.b16 %v1722, %v1718
        %v1951 = vpack.c.b16 %v1723, %v1719
        %v1952 = vpack.c.b16 %v1724, %v1720
        %v1953 = vpack.c.b16 %v1729, %v1725
        %v1954 = vpack.c.b16 %v1730, %v1726
        %v1955 = vpack.c.b16 %v1731, %v1727
        %v1956 = vpack.c.b16 %v1732, %v1728
        %v1957 = vpack.c.b16 %v1737, %v1733
        %v1958 = vpack.c.b16 %v1738, %v1734
        %v1959 = vpack.c.b16 %v1739, %v1735
        %v1960 = vpack.c.b16 %v1740, %v1736
        %v1961 = vpack.c.b16 %v1745, %v1741
        %v1962 = vpack.c.b16 %v1746, %v1742
        %v1963 = vpack.c.b16 %v1747, %v1743
        %v1964 = vpack.c.b16 %v1748, %v1744
        %v1965 = vpack.c.b16 %v1753, %v1749
        %v1966 = vpack.c.b16 %v1754, %v1750
        %v1967 = vpack.c.b16 %v1755, %v1751
        %v1968 = vpack.c.b16 %v1756, %v1752
        %v1969 = vpack.c.b16 %v1761, %v1757
        %v1970 = vpack.c.b16 %v1762, %v1758
        %v1971 = vpack.c.b16 %v1763, %v1759
        %v1972 = vpack.c.b16 %v1764, %v1760
        %v1973 = vpack.c.b16 %v1769, %v1765
        %v1974 = vpack.c.b16 %v1770, %v1766
        %v1975 = vpack.c.b16 %v1771, %v1767
        %v1976 = vpack.c.b16 %v1772, %v1768
        %v1977 = vpack.c.b16 %v1777, %v1773
        %v1978 = vpack.c.b16 %v1778, %v1774
        %v1979 = vpack.c.b16 %v1779, %v1775
        %v1980 = vpack.c.b16 %v1780, %v1776
        %v1981 = vpack.c.b16 %v1785, %v1781
        %v1982 = vpack.c.b16 %v1786, %v1782
        %v1983 = vpack.c.b16 %v1787, %v1783
        %v1984 = vpack.c.b16 %v1788, %v1784
        %v1985 = vpack.c.b16 %v1793, %v1789
        %v1986 = vpack.c.b16 %v1794, %v1790
        %v1987 = vpack.c.b16 %v1795, %v1791
        %v1988 = vpack.c.b16 %v1796, %v1792
        %v1989 = vpack.c.b16 %v1801, %v1797
        %v1990 = vpack.c.b16 %v1802, %v1798
        %v1991 = vpack.c.b16 %v1803, %v1799
        %v1992 = vpack.c.b16 %v1804, %v1800
        %v1993 = vpack.c.b16 %v1809, %v1805
        %v1994 = vpack.c.b16 %v1810, %v1806
        %v1995 = vpack.c.b16 %v1811, %v1807
        %v1996 = vpack.c.b16 %v1812, %v1808
        %v1997 = vpack.c.b16 %v1817, %v1813
        %v1998 = vpack.c.b16 %v1818, %v1814
        %v1999 = vpack.c.b16 %v1819, %v1815
        %v2000 = vpack.c.b16 %v1820, %v1816
        %v2001 = vpack.c.b16 %v1825, %v1821
        %v2002 = vpack.c.b16 %v1826, %v1822
        %v2003 = vpack.c.b16 %v1827, %v1823
        %v2004 = vpack.c.b16 %v1828, %v1824
        %v2005 = vpack.c.b16 %v1833, %v1829
        %v2006 = vpack.c.b16 %v1834, %v1830
        %v2007 = vpack.c.b16 %v1835, %v1831
        %v2008 = vpack.c.b16 %v1836, %v1832
        %v2009 = vpack.c.b16 %v1841, %v1837
        %v2010 = vpack.c.b16 %v1842, %v1838
        %v2011 = vpack.c.b16 %v1843, %v1839
        %v2012 = vpack.c.b16 %v1844, %v1840
        %v2013 = vpack.c.b16 %v1849, %v1845
        %v2014 = vpack.c.b16 %v1850, %v1846
        %v2015 = vpack.c.b16 %v1851, %v1847
        %v2016 = vpack.c.b16 %v1852, %v1848
        %v2017 = vpack.c.b16 %v1857, %v1853
        %v2018 = vpack.c.b16 %v1858, %v1854
        %v2019 = vpack.c.b16 %v1859, %v1855
        %v2020 = vpack.c.b16 %v1860, %v1856
        %v2021 = vpack.c.b16 %v1865, %v1861
        %v2022 = vpack.c.b16 %v1866, %v1862
        %v2023 = vpack.c.b16 %v1867, %v1863
        %v2024 = vpack.c.b16 %v1868, %v1864
        %v2025 = vpack.c.b16 %v1873, %v1869
        %v2026 = vpack.c.b16 %v1874, %v1870
        %v2027 = vpack.c.b16 %v1875, %v1871
        %v2028 = vpack.c.b16 %v1876, %v1872
        %v2029 = vpack.c.b16 %v1881, %v1877
        %v2030 = vpack.c.b16 %v1882, %v1878
        %v2031 = vpack.c.b16 %v1883, %v1879
        %v2032 = vpack.c.b16 %v1884, %v1880
        %v2033 = vpack.c.b16 %v1889, %v1885
        %v2034 = vpack.c.b16 %v1890, %v1886
        %v2035 = vpack.c.b16 %v1891, %v1887
        %v2036 = vpack.c.b16 %v1892, %v1888
        %v2037 = vpack.c.b16 %v1897, %v1893
        %v2038 = vpack.c.b16 %v1898, %v1894
        %v2039 = vpack.c.b16 %v1899, %v1895
        %v2040 = vpack.c.b16 %v1900, %v1896
        %v2041 = vpack.c.b16 %v1905, %v1901
        %v2042 = vpack.c.b16 %v1906, %v1902
        %v2043 = vpack.c.b16 %v1907, %v1903
        %v2044 = vpack.c.b16 %v1908, %v1904
        %v2045 = vpack.c.b16 %v1913, %v1909
        %v2046 = vpack.c.b16 %v1914, %v1910
        %v2047 = vpack.c.b16 %v1915, %v1911
        %v2048 = vpack.c.b16 %v1916, %v1912
        %v2049 = vpack.c.b16 %v1921, %v1917
        %v2050 = vpack.c.b16 %v1922, %v1918
        %v2051 = vpack.c.b16 %v1923, %v1919
        %v2052 = vpack.c.b16 %v1924, %v1920
        %2181 = vmatpush.bf16.msra.mxu0 %v1953
        %2182 = vmatpush.bf16.msra.mxu0 %v1949
        %2183 = vmatpush.bf16.msra.mxu0 %v1945
        %2184 = vmatpush.bf16.msra.mxu0 %v1941
        %2185 = vmatpush.bf16.msra.mxu0 %v1937
        %2186 = vmatpush.bf16.msra.mxu0 %v1933
        %2187 = vmatpush.bf16.msra.mxu0 %v1929
        %2188 = vmatpush.bf16.msra.mxu0 %v1925
        %2189 = vmatmul.bf16.gmra.mxu0 %v1371
        %v2190 = vpop.f32.mrf.mxu0
        %v2191 = vadd.f32 %v1533, %v2190
        %v2192 = vpop.f32.mrf.mxu0
        %v2193 = vadd.f32 %v1533, %v2192
        %2194 = vmatmul.bf16.gmra.mxu0 %v1375
        %v2195 = vpop.f32.mrf.mxu0
        %v2196 = vadd.f32 %v1533, %v2195
        %v2197 = vpop.f32.mrf.mxu0
        %v2198 = vadd.f32 %v1533, %v2197
        %2199 = vmatmul.bf16.gmra.mxu0 %v1379
        %v2200 = vpop.f32.mrf.mxu0
        %v2201 = vadd.f32 %v1533, %v2200
        %v2202 = vpop.f32.mrf.mxu0
        %v2203 = vadd.f32 %v1533, %v2202
        %2204 = vmatmul.bf16.gmra.mxu0 %v1383
        %v2205 = vpop.f32.mrf.mxu0
        %v2206 = vadd.f32 %v1533, %v2205
        %v2207 = vpop.f32.mrf.mxu0
        %v2208 = vadd.f32 %v1533, %v2207
        %2209 = vmatmul.bf16.gmra.mxu0 %v1387
        %v2210 = vpop.f32.mrf.mxu0
        %v2211 = vadd.f32 %v1533, %v2210
        %v2212 = vpop.f32.mrf.mxu0
        %v2213 = vadd.f32 %v1533, %v2212
        %2214 = vmatmul.bf16.gmra.mxu0 %v1391
        %v2215 = vpop.f32.mrf.mxu0
        %v2216 = vadd.f32 %v1533, %v2215
        %v2217 = vpop.f32.mrf.mxu0
        %v2218 = vadd.f32 %v1533, %v2217
        %2219 = vmatmul.bf16.gmra.mxu0 %v1395
        %v2220 = vpop.f32.mrf.mxu0
        %v2221 = vadd.f32 %v1533, %v2220
        %v2222 = vpop.f32.mrf.mxu0
        %v2223 = vadd.f32 %v1533, %v2222
        %2224 = vmatmul.bf16.gmra.mxu0 %v1399
        %v2225 = vpop.f32.mrf.mxu0
        %v2226 = vadd.f32 %v1533, %v2225
        %v2227 = vpop.f32.mrf.mxu0
        %v2228 = vadd.f32 %v1533, %v2227
        %2229 = vdwg.mxu0
        %2230 = vmatpush.bf16.msra.mxu0 %v1985
        %2231 = vmatpush.bf16.msra.mxu0 %v1981
        %2232 = vmatpush.bf16.msra.mxu0 %v1977
        %2233 = vmatpush.bf16.msra.mxu0 %v1973
        %2234 = vmatpush.bf16.msra.mxu0 %v1969
        %2235 = vmatpush.bf16.msra.mxu0 %v1965
        %2236 = vmatpush.bf16.msra.mxu0 %v1961
        %2237 = vmatpush.bf16.msra.mxu0 %v1957
        %2238 = vmatmul.bf16.gmra.mxu0 %v1372
        %v2239 = vpop.f32.mrf.mxu0
        %v2240 = vadd.f32 %v2191, %v2239
        %v2241 = vpop.f32.mrf.mxu0
        %v2242 = vadd.f32 %v2193, %v2241
        %2243 = vmatmul.bf16.gmra.mxu0 %v1376
        %v2244 = vpop.f32.mrf.mxu0
        %v2245 = vadd.f32 %v2196, %v2244
        %v2246 = vpop.f32.mrf.mxu0
        %v2247 = vadd.f32 %v2198, %v2246
        %2248 = vmatmul.bf16.gmra.mxu0 %v1380
        %v2249 = vpop.f32.mrf.mxu0
        %v2250 = vadd.f32 %v2201, %v2249
        %v2251 = vpop.f32.mrf.mxu0
        %v2252 = vadd.f32 %v2203, %v2251
        %2253 = vmatmul.bf16.gmra.mxu0 %v1384
        %v2254 = vpop.f32.mrf.mxu0
        %v2255 = vadd.f32 %v2206, %v2254
        %v2256 = vpop.f32.mrf.mxu0
        %v2257 = vadd.f32 %v2208, %v2256
        %2258 = vmatmul.bf16.gmra.mxu0 %v1388
        %v2259 = vpop.f32.mrf.mxu0
        %v2260 = vadd.f32 %v2211, %v2259
        %v2261 = vpop.f32.mrf.mxu0
        %v2262 = vadd.f32 %v2213, %v2261
        %2263 = vmatmul.bf16.gmra.mxu0 %v1392
        %v2264 = vpop.f32.mrf.mxu0
        %v2265 = vadd.f32 %v2216, %v2264
        %v2266 = vpop.f32.mrf.mxu0
        %v2267 = vadd.f32 %v2218, %v2266
        %2268 = vmatmul.bf16.gmra.mxu0 %v1396
        %v2269 = vpop.f32.mrf.mxu0
        %v2270 = vadd.f32 %v2221, %v2269
        %v2271 = vpop.f32.mrf.mxu0
        %v2272 = vadd.f32 %v2223, %v2271
        %2273 = vmatmul.bf16.gmra.mxu0 %v1400
        %v2274 = vpop.f32.mrf.mxu0
        %v2275 = vadd.f32 %v2226, %v2274
        %v2276 = vpop.f32.mrf.mxu0
        %v2277 = vadd.f32 %v2228, %v2276
        %2278 = vdwg.mxu0
        %2279 = vmatpush.bf16.msra.mxu0 %v2017
        %2280 = vmatpush.bf16.msra.mxu0 %v2013
        %2281 = vmatpush.bf16.msra.mxu0 %v2009
        %2282 = vmatpush.bf16.msra.mxu0 %v2005
        %2283 = vmatpush.bf16.msra.mxu0 %v2001
        %2284 = vmatpush.bf16.msra.mxu0 %v1997
        %2285 = vmatpush.bf16.msra.mxu0 %v1993
        %2286 = vmatpush.bf16.msra.mxu0 %v1989
        %2287 = vmatmul.bf16.gmra.mxu0 %v1373
        %v2288 = vpop.f32.mrf.mxu0
        %v2289 = vadd.f32 %v2240, %v2288
        %v2290 = vpop.f32.mrf.mxu0
        %v2291 = vadd.f32 %v2242, %v2290
        %2292 = vmatmul.bf16.gmra.mxu0 %v1377
        %v2293 = vpop.f32.mrf.mxu0
        %v2294 = vadd.f32 %v2245, %v2293
        %v2295 = vpop.f32.mrf.mxu0
        %v2296 = vadd.f32 %v2247, %v2295
        %2297 = vmatmul.bf16.gmra.mxu0 %v1381
        %v2298 = vpop.f32.mrf.mxu0
        %v2299 = vadd.f32 %v2250, %v2298
        %v2300 = vpop.f32.mrf.mxu0
        %v2301 = vadd.f32 %v2252, %v2300
        %2302 = vmatmul.bf16.gmra.mxu0 %v1385
        %v2303 = vpop.f32.mrf.mxu0
        %v2304 = vadd.f32 %v2255, %v2303
        %v2305 = vpop.f32.mrf.mxu0
        %v2306 = vadd.f32 %v2257, %v2305
        %2307 = vmatmul.bf16.gmra.mxu0 %v1389
        %v2308 = vpop.f32.mrf.mxu0
        %v2309 = vadd.f32 %v2260, %v2308
        %v2310 = vpop.f32.mrf.mxu0
        %v2311 = vadd.f32 %v2262, %v2310
        %2312 = vmatmul.bf16.gmra.mxu0 %v1393
        %v2313 = vpop.f32.mrf.mxu0
        %v2314 = vadd.f32 %v2265, %v2313
        %v2315 = vpop.f32.mrf.mxu0
        %v2316 = vadd.f32 %v2267, %v2315
        %2317 = vmatmul.bf16.gmra.mxu0 %v1397
        %v2318 = vpop.f32.mrf.mxu0
        %v2319 = vadd.f32 %v2270, %v2318
        %v2320 = vpop.f32.mrf.mxu0
        %v2321 = vadd.f32 %v2272, %v2320
        %2322 = vmatmul.bf16.gmra.mxu0 %v1401
        %v2323 = vpop.f32.mrf.mxu0
        %v2324 = vadd.f32 %v2275, %v2323
        %v2325 = vpop.f32.mrf.mxu0
        %v2326 = vadd.f32 %v2277, %v2325
        %2327 = vdwg.mxu0
        %2328 = vmatpush.bf16.msra.mxu0 %v2049
        %2329 = vmatpush.bf16.msra.mxu0 %v2045
        %2330 = vmatpush.bf16.msra.mxu0 %v2041
        %2331 = vmatpush.bf16.msra.mxu0 %v2037
        %2332 = vmatpush.bf16.msra.mxu0 %v2033
        %2333 = vmatpush.bf16.msra.mxu0 %v2029
        %2334 = vmatpush.bf16.msra.mxu0 %v2025
        %2335 = vmatpush.bf16.msra.mxu0 %v2021
        %2336 = vmatmul.bf16.gmra.mxu0 %v1374
        %v2337 = vpop.f32.mrf.mxu0
        %v2338 = vadd.f32 %v2289, %v2337
        %v2339 = vpop.f32.mrf.mxu0
        %v2340 = vadd.f32 %v2291, %v2339
        %2341 = vmatmul.bf16.gmra.mxu0 %v1378
        %v2342 = vpop.f32.mrf.mxu0
        %v2343 = vadd.f32 %v2294, %v2342
        %v2344 = vpop.f32.mrf.mxu0
        %v2345 = vadd.f32 %v2296, %v2344
        %2346 = vmatmul.bf16.gmra.mxu0 %v1382
        %v2347 = vpop.f32.mrf.mxu0
        %v2348 = vadd.f32 %v2299, %v2347
        %v2349 = vpop.f32.mrf.mxu0
        %v2350 = vadd.f32 %v2301, %v2349
        %2351 = vmatmul.bf16.gmra.mxu0 %v1386
        %v2352 = vpop.f32.mrf.mxu0
        %v2353 = vadd.f32 %v2304, %v2352
        %v2354 = vpop.f32.mrf.mxu0
        %v2355 = vadd.f32 %v2306, %v2354
        %2356 = vmatmul.bf16.gmra.mxu0 %v1390
        %v2357 = vpop.f32.mrf.mxu0
        %v2358 = vadd.f32 %v2309, %v2357
        %v2359 = vpop.f32.mrf.mxu0
        %v2360 = vadd.f32 %v2311, %v2359
        %2361 = vmatmul.bf16.gmra.mxu0 %v1394
        %v2362 = vpop.f32.mrf.mxu0
        %v2363 = vadd.f32 %v2314, %v2362
        %v2364 = vpop.f32.mrf.mxu0
        %v2365 = vadd.f32 %v2316, %v2364
        %2366 = vmatmul.bf16.gmra.mxu0 %v1398
        %v2367 = vpop.f32.mrf.mxu0
        %v2368 = vadd.f32 %v2319, %v2367
        %v2369 = vpop.f32.mrf.mxu0
        %v2370 = vadd.f32 %v2321, %v2369
        %2371 = vmatmul.bf16.gmra.mxu0 %v1402
        %v2372 = vpop.f32.mrf.mxu0
        %v2373 = vadd.f32 %v2324, %v2372
        %v2374 = vpop.f32.mrf.mxu0
        %v2375 = vadd.f32 %v2326, %v2374
        %2376 = vdwg.mxu0
        %2377 = vmatpush.bf16.msra.mxu0 %v1954
        %2378 = vmatpush.bf16.msra.mxu0 %v1950
        %2379 = vmatpush.bf16.msra.mxu0 %v1946
        %2380 = vmatpush.bf16.msra.mxu0 %v1942
        %2381 = vmatpush.bf16.msra.mxu0 %v1938
        %2382 = vmatpush.bf16.msra.mxu0 %v1934
        %2383 = vmatpush.bf16.msra.mxu0 %v1930
        %2384 = vmatpush.bf16.msra.mxu0 %v1926
        %2385 = vmatmul.bf16.gmra.mxu0 %v1371
        %v2386 = vpop.f32.mrf.mxu0
        %v2387 = vadd.f32 %v1534, %v2386
        %v2388 = vpop.f32.mrf.mxu0
        %v2389 = vadd.f32 %v1534, %v2388
        %2390 = vmatmul.bf16.gmra.mxu0 %v1375
        %v2391 = vpop.f32.mrf.mxu0
        %v2392 = vadd.f32 %v1534, %v2391
        %v2393 = vpop.f32.mrf.mxu0
        %v2394 = vadd.f32 %v1534, %v2393
        %2395 = vmatmul.bf16.gmra.mxu0 %v1379
        %v2396 = vpop.f32.mrf.mxu0
        %v2397 = vadd.f32 %v1534, %v2396
        %v2398 = vpop.f32.mrf.mxu0
        %v2399 = vadd.f32 %v1534, %v2398
        %2400 = vmatmul.bf16.gmra.mxu0 %v1383
        %v2401 = vpop.f32.mrf.mxu0
        %v2402 = vadd.f32 %v1534, %v2401
        %v2403 = vpop.f32.mrf.mxu0
        %v2404 = vadd.f32 %v1534, %v2403
        %2405 = vmatmul.bf16.gmra.mxu0 %v1387
        %v2406 = vpop.f32.mrf.mxu0
        %v2407 = vadd.f32 %v1534, %v2406
        %v2408 = vpop.f32.mrf.mxu0
        %v2409 = vadd.f32 %v1534, %v2408
        %2410 = vmatmul.bf16.gmra.mxu0 %v1391
        %v2411 = vpop.f32.mrf.mxu0
        %v2412 = vadd.f32 %v1534, %v2411
        %v2413 = vpop.f32.mrf.mxu0
        %v2414 = vadd.f32 %v1534, %v2413
        %2415 = vmatmul.bf16.gmra.mxu0 %v1395
        %v2416 = vpop.f32.mrf.mxu0
        %v2417 = vadd.f32 %v1534, %v2416
        %v2418 = vpop.f32.mrf.mxu0
        %v2419 = vadd.f32 %v1534, %v2418
        %2420 = vmatmul.bf16.gmra.mxu0 %v1399
        %v2421 = vpop.f32.mrf.mxu0
        %v2422 = vadd.f32 %v1534, %v2421
        %v2423 = vpop.f32.mrf.mxu0
        %v2424 = vadd.f32 %v1534, %v2423
        %2425 = vdwg.mxu0
        %2426 = vmatpush.bf16.msra.mxu0 %v1986
        %2427 = vmatpush.bf16.msra.mxu0 %v1982
        %2428 = vmatpush.bf16.msra.mxu0 %v1978
        %2429 = vmatpush.bf16.msra.mxu0 %v1974
        %2430 = vmatpush.bf16.msra.mxu0 %v1970
        %2431 = vmatpush.bf16.msra.mxu0 %v1966
        %2432 = vmatpush.bf16.msra.mxu0 %v1962
        %2433 = vmatpush.bf16.msra.mxu0 %v1958
        %2434 = vmatmul.bf16.gmra.mxu0 %v1372
        %v2435 = vpop.f32.mrf.mxu0
        %v2436 = vadd.f32 %v2387, %v2435
        %v2437 = vpop.f32.mrf.mxu0
        %v2438 = vadd.f32 %v2389, %v2437
        %2439 = vmatmul.bf16.gmra.mxu0 %v1376
        %v2440 = vpop.f32.mrf.mxu0
        %v2441 = vadd.f32 %v2392, %v2440
        %v2442 = vpop.f32.mrf.mxu0
        %v2443 = vadd.f32 %v2394, %v2442
        %2444 = vmatmul.bf16.gmra.mxu0 %v1380
        %v2445 = vpop.f32.mrf.mxu0
        %v2446 = vadd.f32 %v2397, %v2445
        %v2447 = vpop.f32.mrf.mxu0
        %v2448 = vadd.f32 %v2399, %v2447
        %2449 = vmatmul.bf16.gmra.mxu0 %v1384
        %v2450 = vpop.f32.mrf.mxu0
        %v2451 = vadd.f32 %v2402, %v2450
        %v2452 = vpop.f32.mrf.mxu0
        %v2453 = vadd.f32 %v2404, %v2452
        %2454 = vmatmul.bf16.gmra.mxu0 %v1388
        %v2455 = vpop.f32.mrf.mxu0
        %v2456 = vadd.f32 %v2407, %v2455
        %v2457 = vpop.f32.mrf.mxu0
        %v2458 = vadd.f32 %v2409, %v2457
        %2459 = vmatmul.bf16.gmra.mxu0 %v1392
        %v2460 = vpop.f32.mrf.mxu0
        %v2461 = vadd.f32 %v2412, %v2460
        %v2462 = vpop.f32.mrf.mxu0
        %v2463 = vadd.f32 %v2414, %v2462
        %2464 = vmatmul.bf16.gmra.mxu0 %v1396
        %v2465 = vpop.f32.mrf.mxu0
        %v2466 = vadd.f32 %v2417, %v2465
        %v2467 = vpop.f32.mrf.mxu0
        %v2468 = vadd.f32 %v2419, %v2467
        %2469 = vmatmul.bf16.gmra.mxu0 %v1400
        %v2470 = vpop.f32.mrf.mxu0
        %v2471 = vadd.f32 %v2422, %v2470
        %v2472 = vpop.f32.mrf.mxu0
        %v2473 = vadd.f32 %v2424, %v2472
        %2474 = vdwg.mxu0
        %2475 = vmatpush.bf16.msra.mxu0 %v2018
        %2476 = vmatpush.bf16.msra.mxu0 %v2014
        %2477 = vmatpush.bf16.msra.mxu0 %v2010
        %2478 = vmatpush.bf16.msra.mxu0 %v2006
        %2479 = vmatpush.bf16.msra.mxu0 %v2002
        %2480 = vmatpush.bf16.msra.mxu0 %v1998
        %2481 = vmatpush.bf16.msra.mxu0 %v1994
        %2482 = vmatpush.bf16.msra.mxu0 %v1990
        %2483 = vmatmul.bf16.gmra.mxu0 %v1373
        %v2484 = vpop.f32.mrf.mxu0
        %v2485 = vadd.f32 %v2436, %v2484
        %v2486 = vpop.f32.mrf.mxu0
        %v2487 = vadd.f32 %v2438, %v2486
        %2488 = vmatmul.bf16.gmra.mxu0 %v1377
        %v2489 = vpop.f32.mrf.mxu0
        %v2490 = vadd.f32 %v2441, %v2489
        %v2491 = vpop.f32.mrf.mxu0
        %v2492 = vadd.f32 %v2443, %v2491
        %2493 = vmatmul.bf16.gmra.mxu0 %v1381
        %v2494 = vpop.f32.mrf.mxu0
        %v2495 = vadd.f32 %v2446, %v2494
        %v2496 = vpop.f32.mrf.mxu0
        %v2497 = vadd.f32 %v2448, %v2496
        %2498 = vmatmul.bf16.gmra.mxu0 %v1385
        %v2499 = vpop.f32.mrf.mxu0
        %v2500 = vadd.f32 %v2451, %v2499
        %v2501 = vpop.f32.mrf.mxu0
        %v2502 = vadd.f32 %v2453, %v2501
        %2503 = vmatmul.bf16.gmra.mxu0 %v1389
        %v2504 = vpop.f32.mrf.mxu0
        %v2505 = vadd.f32 %v2456, %v2504
        %v2506 = vpop.f32.mrf.mxu0
        %v2507 = vadd.f32 %v2458, %v2506
        %2508 = vmatmul.bf16.gmra.mxu0 %v1393
        %v2509 = vpop.f32.mrf.mxu0
        %v2510 = vadd.f32 %v2461, %v2509
        %v2511 = vpop.f32.mrf.mxu0
        %v2512 = vadd.f32 %v2463, %v2511
        %2513 = vmatmul.bf16.gmra.mxu0 %v1397
        %v2514 = vpop.f32.mrf.mxu0
        %v2515 = vadd.f32 %v2466, %v2514
        %v2516 = vpop.f32.mrf.mxu0
        %v2517 = vadd.f32 %v2468, %v2516
        %2518 = vmatmul.bf16.gmra.mxu0 %v1401
        %v2519 = vpop.f32.mrf.mxu0
        %v2520 = vadd.f32 %v2471, %v2519
        %v2521 = vpop.f32.mrf.mxu0
        %v2522 = vadd.f32 %v2473, %v2521
        %2523 = vdwg.mxu0
        %2524 = vmatpush.bf16.msra.mxu0 %v2050
        %2525 = vmatpush.bf16.msra.mxu0 %v2046
        %2526 = vmatpush.bf16.msra.mxu0 %v2042
        %2527 = vmatpush.bf16.msra.mxu0 %v2038
        %2528 = vmatpush.bf16.msra.mxu0 %v2034
        %2529 = vmatpush.bf16.msra.mxu0 %v2030
        %2530 = vmatpush.bf16.msra.mxu0 %v2026
        %2531 = vmatpush.bf16.msra.mxu0 %v2022
        %2532 = vmatmul.bf16.gmra.mxu0 %v1374
        %v2533 = vpop.f32.mrf.mxu0
        %v2534 = vadd.f32 %v2485, %v2533
        %v2535 = vpop.f32.mrf.mxu0
        %v2536 = vadd.f32 %v2487, %v2535
        %2537 = vmatmul.bf16.gmra.mxu0 %v1378
        %v2538 = vpop.f32.mrf.mxu0
        %v2539 = vadd.f32 %v2490, %v2538
        %v2540 = vpop.f32.mrf.mxu0
        %v2541 = vadd.f32 %v2492, %v2540
        %2542 = vmatmul.bf16.gmra.mxu0 %v1382
        %v2543 = vpop.f32.mrf.mxu0
        %v2544 = vadd.f32 %v2495, %v2543
        %v2545 = vpop.f32.mrf.mxu0
        %v2546 = vadd.f32 %v2497, %v2545
        %2547 = vmatmul.bf16.gmra.mxu0 %v1386
        %v2548 = vpop.f32.mrf.mxu0
        %v2549 = vadd.f32 %v2500, %v2548
        %v2550 = vpop.f32.mrf.mxu0
        %v2551 = vadd.f32 %v2502, %v2550
        %2552 = vmatmul.bf16.gmra.mxu0 %v1390
        %v2553 = vpop.f32.mrf.mxu0
        %v2554 = vadd.f32 %v2505, %v2553
        %v2555 = vpop.f32.mrf.mxu0
        %v2556 = vadd.f32 %v2507, %v2555
        %2557 = vmatmul.bf16.gmra.mxu0 %v1394
        %v2558 = vpop.f32.mrf.mxu0
        %v2559 = vadd.f32 %v2510, %v2558
        %v2560 = vpop.f32.mrf.mxu0
        %v2561 = vadd.f32 %v2512, %v2560
        %2562 = vmatmul.bf16.gmra.mxu0 %v1398
        %v2563 = vpop.f32.mrf.mxu0
        %v2564 = vadd.f32 %v2515, %v2563
        %v2565 = vpop.f32.mrf.mxu0
        %v2566 = vadd.f32 %v2517, %v2565
        %2567 = vmatmul.bf16.gmra.mxu0 %v1402
        %v2568 = vpop.f32.mrf.mxu0
        %v2569 = vadd.f32 %v2520, %v2568
        %v2570 = vpop.f32.mrf.mxu0
        %v2571 = vadd.f32 %v2522, %v2570
        %2572 = vdwg.mxu0
        %2573 = vmatpush.bf16.msra.mxu0 %v1955
        %2574 = vmatpush.bf16.msra.mxu0 %v1951
        %2575 = vmatpush.bf16.msra.mxu0 %v1947
        %2576 = vmatpush.bf16.msra.mxu0 %v1943
        %2577 = vmatpush.bf16.msra.mxu0 %v1939
        %2578 = vmatpush.bf16.msra.mxu0 %v1935
        %2579 = vmatpush.bf16.msra.mxu0 %v1931
        %2580 = vmatpush.bf16.msra.mxu0 %v1927
        %2581 = vmatmul.bf16.gmra.mxu0 %v1371
        %v2582 = vpop.f32.mrf.mxu0
        %v2583 = vadd.f32 %v1535, %v2582
        %v2584 = vpop.f32.mrf.mxu0
        %v2585 = vadd.f32 %v1535, %v2584
        %2586 = vmatmul.bf16.gmra.mxu0 %v1375
        %v2587 = vpop.f32.mrf.mxu0
        %v2588 = vadd.f32 %v1535, %v2587
        %v2589 = vpop.f32.mrf.mxu0
        %v2590 = vadd.f32 %v1535, %v2589
        %2591 = vmatmul.bf16.gmra.mxu0 %v1379
        %v2592 = vpop.f32.mrf.mxu0
        %v2593 = vadd.f32 %v1535, %v2592
        %v2594 = vpop.f32.mrf.mxu0
        %v2595 = vadd.f32 %v1535, %v2594
        %2596 = vmatmul.bf16.gmra.mxu0 %v1383
        %v2597 = vpop.f32.mrf.mxu0
        %v2598 = vadd.f32 %v1535, %v2597
        %v2599 = vpop.f32.mrf.mxu0
        %v2600 = vadd.f32 %v1535, %v2599
        %2601 = vmatmul.bf16.gmra.mxu0 %v1387
        %v2602 = vpop.f32.mrf.mxu0
        %v2603 = vadd.f32 %v1535, %v2602
        %v2604 = vpop.f32.mrf.mxu0
        %v2605 = vadd.f32 %v1535, %v2604
        %2606 = vmatmul.bf16.gmra.mxu0 %v1391
        %v2607 = vpop.f32.mrf.mxu0
        %v2608 = vadd.f32 %v1535, %v2607
        %v2609 = vpop.f32.mrf.mxu0
        %v2610 = vadd.f32 %v1535, %v2609
        %2611 = vmatmul.bf16.gmra.mxu0 %v1395
        %v2612 = vpop.f32.mrf.mxu0
        %v2613 = vadd.f32 %v1535, %v2612
        %v2614 = vpop.f32.mrf.mxu0
        %v2615 = vadd.f32 %v1535, %v2614
        %2616 = vmatmul.bf16.gmra.mxu0 %v1399
        %v2617 = vpop.f32.mrf.mxu0
        %v2618 = vadd.f32 %v1535, %v2617
        %v2619 = vpop.f32.mrf.mxu0
        %v2620 = vadd.f32 %v1535, %v2619
        %2621 = vdwg.mxu0
        %2622 = vmatpush.bf16.msra.mxu0 %v1987
        %2623 = vmatpush.bf16.msra.mxu0 %v1983
        %2624 = vmatpush.bf16.msra.mxu0 %v1979
        %2625 = vmatpush.bf16.msra.mxu0 %v1975
        %2626 = vmatpush.bf16.msra.mxu0 %v1971
        %2627 = vmatpush.bf16.msra.mxu0 %v1967
        %2628 = vmatpush.bf16.msra.mxu0 %v1963
        %2629 = vmatpush.bf16.msra.mxu0 %v1959
        %2630 = vmatmul.bf16.gmra.mxu0 %v1372
        %v2631 = vpop.f32.mrf.mxu0
        %v2632 = vadd.f32 %v2583, %v2631
        %v2633 = vpop.f32.mrf.mxu0
        %v2634 = vadd.f32 %v2585, %v2633
        %2635 = vmatmul.bf16.gmra.mxu0 %v1376
        %v2636 = vpop.f32.mrf.mxu0
        %v2637 = vadd.f32 %v2588, %v2636
        %v2638 = vpop.f32.mrf.mxu0
        %v2639 = vadd.f32 %v2590, %v2638
        %2640 = vmatmul.bf16.gmra.mxu0 %v1380
        %v2641 = vpop.f32.mrf.mxu0
        %v2642 = vadd.f32 %v2593, %v2641
        %v2643 = vpop.f32.mrf.mxu0
        %v2644 = vadd.f32 %v2595, %v2643
        %2645 = vmatmul.bf16.gmra.mxu0 %v1384
        %v2646 = vpop.f32.mrf.mxu0
        %v2647 = vadd.f32 %v2598, %v2646
        %v2648 = vpop.f32.mrf.mxu0
        %v2649 = vadd.f32 %v2600, %v2648
        %2650 = vmatmul.bf16.gmra.mxu0 %v1388
        %v2651 = vpop.f32.mrf.mxu0
        %v2652 = vadd.f32 %v2603, %v2651
        %v2653 = vpop.f32.mrf.mxu0
        %v2654 = vadd.f32 %v2605, %v2653
        %2655 = vmatmul.bf16.gmra.mxu0 %v1392
        %v2656 = vpop.f32.mrf.mxu0
        %v2657 = vadd.f32 %v2608, %v2656
        %v2658 = vpop.f32.mrf.mxu0
        %v2659 = vadd.f32 %v2610, %v2658
        %2660 = vmatmul.bf16.gmra.mxu0 %v1396
        %v2661 = vpop.f32.mrf.mxu0
        %v2662 = vadd.f32 %v2613, %v2661
        %v2663 = vpop.f32.mrf.mxu0
        %v2664 = vadd.f32 %v2615, %v2663
        %2665 = vmatmul.bf16.gmra.mxu0 %v1400
        %v2666 = vpop.f32.mrf.mxu0
        %v2667 = vadd.f32 %v2618, %v2666
        %v2668 = vpop.f32.mrf.mxu0
        %v2669 = vadd.f32 %v2620, %v2668
        %2670 = vdwg.mxu0
        %2671 = vmatpush.bf16.msra.mxu0 %v2019
        %2672 = vmatpush.bf16.msra.mxu0 %v2015
        %2673 = vmatpush.bf16.msra.mxu0 %v2011
        %2674 = vmatpush.bf16.msra.mxu0 %v2007
        %2675 = vmatpush.bf16.msra.mxu0 %v2003
        %2676 = vmatpush.bf16.msra.mxu0 %v1999
        %2677 = vmatpush.bf16.msra.mxu0 %v1995
        %2678 = vmatpush.bf16.msra.mxu0 %v1991
        %2679 = vmatmul.bf16.gmra.mxu0 %v1373
        %v2680 = vpop.f32.mrf.mxu0
        %v2681 = vadd.f32 %v2632, %v2680
        %v2682 = vpop.f32.mrf.mxu0
        %v2683 = vadd.f32 %v2634, %v2682
        %2684 = vmatmul.bf16.gmra.mxu0 %v1377
        %v2685 = vpop.f32.mrf.mxu0
        %v2686 = vadd.f32 %v2637, %v2685
        %v2687 = vpop.f32.mrf.mxu0
        %v2688 = vadd.f32 %v2639, %v2687
        %2689 = vmatmul.bf16.gmra.mxu0 %v1381
        %v2690 = vpop.f32.mrf.mxu0
        %v2691 = vadd.f32 %v2642, %v2690
        %v2692 = vpop.f32.mrf.mxu0
        %v2693 = vadd.f32 %v2644, %v2692
        %2694 = vmatmul.bf16.gmra.mxu0 %v1385
        %v2695 = vpop.f32.mrf.mxu0
        %v2696 = vadd.f32 %v2647, %v2695
        %v2697 = vpop.f32.mrf.mxu0
        %v2698 = vadd.f32 %v2649, %v2697
        %2699 = vmatmul.bf16.gmra.mxu0 %v1389
        %v2700 = vpop.f32.mrf.mxu0
        %v2701 = vadd.f32 %v2652, %v2700
        %v2702 = vpop.f32.mrf.mxu0
        %v2703 = vadd.f32 %v2654, %v2702
        %2704 = vmatmul.bf16.gmra.mxu0 %v1393
        %v2705 = vpop.f32.mrf.mxu0
        %v2706 = vadd.f32 %v2657, %v2705
        %v2707 = vpop.f32.mrf.mxu0
        %v2708 = vadd.f32 %v2659, %v2707
        %2709 = vmatmul.bf16.gmra.mxu0 %v1397
        %v2710 = vpop.f32.mrf.mxu0
        %v2711 = vadd.f32 %v2662, %v2710
        %v2712 = vpop.f32.mrf.mxu0
        %v2713 = vadd.f32 %v2664, %v2712
        %2714 = vmatmul.bf16.gmra.mxu0 %v1401
        %v2715 = vpop.f32.mrf.mxu0
        %v2716 = vadd.f32 %v2667, %v2715
        %v2717 = vpop.f32.mrf.mxu0
        %v2718 = vadd.f32 %v2669, %v2717
        %2719 = vdwg.mxu0
        %2720 = vmatpush.bf16.msra.mxu0 %v2051
        %2721 = vmatpush.bf16.msra.mxu0 %v2047
        %2722 = vmatpush.bf16.msra.mxu0 %v2043
        %2723 = vmatpush.bf16.msra.mxu0 %v2039
        %2724 = vmatpush.bf16.msra.mxu0 %v2035
        %2725 = vmatpush.bf16.msra.mxu0 %v2031
        %2726 = vmatpush.bf16.msra.mxu0 %v2027
        %2727 = vmatpush.bf16.msra.mxu0 %v2023
        %2728 = vmatmul.bf16.gmra.mxu0 %v1374
        %v2729 = vpop.f32.mrf.mxu0
        %v2730 = vadd.f32 %v2681, %v2729
        %v2731 = vpop.f32.mrf.mxu0
        %v2732 = vadd.f32 %v2683, %v2731
        %2733 = vmatmul.bf16.gmra.mxu0 %v1378
        %v2734 = vpop.f32.mrf.mxu0
        %v2735 = vadd.f32 %v2686, %v2734
        %v2736 = vpop.f32.mrf.mxu0
        %v2737 = vadd.f32 %v2688, %v2736
        %2738 = vmatmul.bf16.gmra.mxu0 %v1382
        %v2739 = vpop.f32.mrf.mxu0
        %v2740 = vadd.f32 %v2691, %v2739
        %v2741 = vpop.f32.mrf.mxu0
        %v2742 = vadd.f32 %v2693, %v2741
        %2743 = vmatmul.bf16.gmra.mxu0 %v1386
        %v2744 = vpop.f32.mrf.mxu0
        %v2745 = vadd.f32 %v2696, %v2744
        %v2746 = vpop.f32.mrf.mxu0
        %v2747 = vadd.f32 %v2698, %v2746
        %2748 = vmatmul.bf16.gmra.mxu0 %v1390
        %v2749 = vpop.f32.mrf.mxu0
        %v2750 = vadd.f32 %v2701, %v2749
        %v2751 = vpop.f32.mrf.mxu0
        %v2752 = vadd.f32 %v2703, %v2751
        %2753 = vmatmul.bf16.gmra.mxu0 %v1394
        %v2754 = vpop.f32.mrf.mxu0
        %v2755 = vadd.f32 %v2706, %v2754
        %v2756 = vpop.f32.mrf.mxu0
        %v2757 = vadd.f32 %v2708, %v2756
        %2758 = vmatmul.bf16.gmra.mxu0 %v1398
        %v2759 = vpop.f32.mrf.mxu0
        %v2760 = vadd.f32 %v2711, %v2759
        %v2761 = vpop.f32.mrf.mxu0
        %v2762 = vadd.f32 %v2713, %v2761
        %2763 = vmatmul.bf16.gmra.mxu0 %v1402
        %v2764 = vpop.f32.mrf.mxu0
        %v2765 = vadd.f32 %v2716, %v2764
        %v2766 = vpop.f32.mrf.mxu0
        %v2767 = vadd.f32 %v2718, %v2766
        %2768 = vdwg.mxu0
        %2769 = vmatpush.bf16.msra.mxu0 %v1956
        %2770 = vmatpush.bf16.msra.mxu0 %v1952
        %2771 = vmatpush.bf16.msra.mxu0 %v1948
        %2772 = vmatpush.bf16.msra.mxu0 %v1944
        %2773 = vmatpush.bf16.msra.mxu0 %v1940
        %2774 = vmatpush.bf16.msra.mxu0 %v1936
        %2775 = vmatpush.bf16.msra.mxu0 %v1932
        %2776 = vmatpush.bf16.msra.mxu0 %v1928
        %2777 = vmatmul.bf16.gmra.mxu0 %v1371
        %v2778 = vpop.f32.mrf.mxu0
        %v2779 = vadd.f32 %v1536, %v2778
        %v2780 = vpop.f32.mrf.mxu0
        %v2781 = vadd.f32 %v1536, %v2780
        %2782 = vmatmul.bf16.gmra.mxu0 %v1375
        %v2783 = vpop.f32.mrf.mxu0
        %v2784 = vadd.f32 %v1536, %v2783
        %v2785 = vpop.f32.mrf.mxu0
        %v2786 = vadd.f32 %v1536, %v2785
        %2787 = vmatmul.bf16.gmra.mxu0 %v1379
        %v2788 = vpop.f32.mrf.mxu0
        %v2789 = vadd.f32 %v1536, %v2788
        %v2790 = vpop.f32.mrf.mxu0
        %v2791 = vadd.f32 %v1536, %v2790
        %2792 = vmatmul.bf16.gmra.mxu0 %v1383
        %v2793 = vpop.f32.mrf.mxu0
        %v2794 = vadd.f32 %v1536, %v2793
        %v2795 = vpop.f32.mrf.mxu0
        %v2796 = vadd.f32 %v1536, %v2795
        %2797 = vmatmul.bf16.gmra.mxu0 %v1387
        %v2798 = vpop.f32.mrf.mxu0
        %v2799 = vadd.f32 %v1536, %v2798
        %v2800 = vpop.f32.mrf.mxu0
        %v2801 = vadd.f32 %v1536, %v2800
        %2802 = vmatmul.bf16.gmra.mxu0 %v1391
        %v2803 = vpop.f32.mrf.mxu0
        %v2804 = vadd.f32 %v1536, %v2803
        %v2805 = vpop.f32.mrf.mxu0
        %v2806 = vadd.f32 %v1536, %v2805
        %2807 = vmatmul.bf16.gmra.mxu0 %v1395
        %v2808 = vpop.f32.mrf.mxu0
        %v2809 = vadd.f32 %v1536, %v2808
        %v2810 = vpop.f32.mrf.mxu0
        %v2811 = vadd.f32 %v1536, %v2810
        %2812 = vmatmul.bf16.gmra.mxu0 %v1399
        %v2813 = vpop.f32.mrf.mxu0
        %v2814 = vadd.f32 %v1536, %v2813
        %v2815 = vpop.f32.mrf.mxu0
        %v2816 = vadd.f32 %v1536, %v2815
        %2817 = vdwg.mxu0
        %2818 = vmatpush.bf16.msra.mxu0 %v1988
        %2819 = vmatpush.bf16.msra.mxu0 %v1984
        %2820 = vmatpush.bf16.msra.mxu0 %v1980
        %2821 = vmatpush.bf16.msra.mxu0 %v1976
        %2822 = vmatpush.bf16.msra.mxu0 %v1972
        %2823 = vmatpush.bf16.msra.mxu0 %v1968
        %2824 = vmatpush.bf16.msra.mxu0 %v1964
        %2825 = vmatpush.bf16.msra.mxu0 %v1960
        %2826 = vmatmul.bf16.gmra.mxu0 %v1372
        %v2827 = vpop.f32.mrf.mxu0
        %v2828 = vadd.f32 %v2779, %v2827
        %v2829 = vpop.f32.mrf.mxu0
        %v2830 = vadd.f32 %v2781, %v2829
        %2831 = vmatmul.bf16.gmra.mxu0 %v1376
        %v2832 = vpop.f32.mrf.mxu0
        %v2833 = vadd.f32 %v2784, %v2832
        %v2834 = vpop.f32.mrf.mxu0
        %v2835 = vadd.f32 %v2786, %v2834
        %2836 = vmatmul.bf16.gmra.mxu0 %v1380
        %v2837 = vpop.f32.mrf.mxu0
        %v2838 = vadd.f32 %v2789, %v2837
        %v2839 = vpop.f32.mrf.mxu0
        %v2840 = vadd.f32 %v2791, %v2839
        %2841 = vmatmul.bf16.gmra.mxu0 %v1384
        %v2842 = vpop.f32.mrf.mxu0
        %v2843 = vadd.f32 %v2794, %v2842
        %v2844 = vpop.f32.mrf.mxu0
        %v2845 = vadd.f32 %v2796, %v2844
        %2846 = vmatmul.bf16.gmra.mxu0 %v1388
        %v2847 = vpop.f32.mrf.mxu0
        %v2848 = vadd.f32 %v2799, %v2847
        %v2849 = vpop.f32.mrf.mxu0
        %v2850 = vadd.f32 %v2801, %v2849
        %2851 = vmatmul.bf16.gmra.mxu0 %v1392
        %v2852 = vpop.f32.mrf.mxu0
        %v2853 = vadd.f32 %v2804, %v2852
        %v2854 = vpop.f32.mrf.mxu0
        %v2855 = vadd.f32 %v2806, %v2854
        %2856 = vmatmul.bf16.gmra.mxu0 %v1396
        %v2857 = vpop.f32.mrf.mxu0
        %v2858 = vadd.f32 %v2809, %v2857
        %v2859 = vpop.f32.mrf.mxu0
        %v2860 = vadd.f32 %v2811, %v2859
        %2861 = vmatmul.bf16.gmra.mxu0 %v1400
        %v2862 = vpop.f32.mrf.mxu0
        %v2863 = vadd.f32 %v2814, %v2862
        %v2864 = vpop.f32.mrf.mxu0
        %v2865 = vadd.f32 %v2816, %v2864
        %2866 = vdwg.mxu0
        %2867 = vmatpush.bf16.msra.mxu0 %v2020
        %2868 = vmatpush.bf16.msra.mxu0 %v2016
        %2869 = vmatpush.bf16.msra.mxu0 %v2012
        %2870 = vmatpush.bf16.msra.mxu0 %v2008
        %2871 = vmatpush.bf16.msra.mxu0 %v2004
        %2872 = vmatpush.bf16.msra.mxu0 %v2000
        %2873 = vmatpush.bf16.msra.mxu0 %v1996
        %2874 = vmatpush.bf16.msra.mxu0 %v1992
        %2875 = vmatmul.bf16.gmra.mxu0 %v1373
        %v2876 = vpop.f32.mrf.mxu0
        %v2877 = vadd.f32 %v2828, %v2876
        %v2878 = vpop.f32.mrf.mxu0
        %v2879 = vadd.f32 %v2830, %v2878
        %2880 = vmatmul.bf16.gmra.mxu0 %v1377
        %v2881 = vpop.f32.mrf.mxu0
        %v2882 = vadd.f32 %v2833, %v2881
        %v2883 = vpop.f32.mrf.mxu0
        %v2884 = vadd.f32 %v2835, %v2883
        %2885 = vmatmul.bf16.gmra.mxu0 %v1381
        %v2886 = vpop.f32.mrf.mxu0
        %v2887 = vadd.f32 %v2838, %v2886
        %v2888 = vpop.f32.mrf.mxu0
        %v2889 = vadd.f32 %v2840, %v2888
        %2890 = vmatmul.bf16.gmra.mxu0 %v1385
        %v2891 = vpop.f32.mrf.mxu0
        %v2892 = vadd.f32 %v2843, %v2891
        %v2893 = vpop.f32.mrf.mxu0
        %v2894 = vadd.f32 %v2845, %v2893
        %2895 = vmatmul.bf16.gmra.mxu0 %v1389
        %v2896 = vpop.f32.mrf.mxu0
        %v2897 = vadd.f32 %v2848, %v2896
        %v2898 = vpop.f32.mrf.mxu0
        %v2899 = vadd.f32 %v2850, %v2898
        %2900 = vmatmul.bf16.gmra.mxu0 %v1393
        %v2901 = vpop.f32.mrf.mxu0
        %v2902 = vadd.f32 %v2853, %v2901
        %v2903 = vpop.f32.mrf.mxu0
        %v2904 = vadd.f32 %v2855, %v2903
        %2905 = vmatmul.bf16.gmra.mxu0 %v1397
        %v2906 = vpop.f32.mrf.mxu0
        %v2907 = vadd.f32 %v2858, %v2906
        %v2908 = vpop.f32.mrf.mxu0
        %v2909 = vadd.f32 %v2860, %v2908
        %2910 = vmatmul.bf16.gmra.mxu0 %v1401
        %v2911 = vpop.f32.mrf.mxu0
        %v2912 = vadd.f32 %v2863, %v2911
        %v2913 = vpop.f32.mrf.mxu0
        %v2914 = vadd.f32 %v2865, %v2913
        %2915 = vdwg.mxu0
        %2916 = vmatpush.bf16.msra.mxu0 %v2052
        %2917 = vmatpush.bf16.msra.mxu0 %v2048
        %2918 = vmatpush.bf16.msra.mxu0 %v2044
        %2919 = vmatpush.bf16.msra.mxu0 %v2040
        %2920 = vmatpush.bf16.msra.mxu0 %v2036
        %2921 = vmatpush.bf16.msra.mxu0 %v2032
        %2922 = vmatpush.bf16.msra.mxu0 %v2028
        %2923 = vmatpush.bf16.msra.mxu0 %v2024
        %2924 = vmatmul.bf16.gmra.mxu0 %v1374
        %v2925 = vpop.f32.mrf.mxu0
        %v2926 = vadd.f32 %v2877, %v2925
        %v2927 = vpop.f32.mrf.mxu0
        %v2928 = vadd.f32 %v2879, %v2927
        %2929 = vmatmul.bf16.gmra.mxu0 %v1378
        %v2930 = vpop.f32.mrf.mxu0
        %v2931 = vadd.f32 %v2882, %v2930
        %v2932 = vpop.f32.mrf.mxu0
        %v2933 = vadd.f32 %v2884, %v2932
        %2934 = vmatmul.bf16.gmra.mxu0 %v1382
        %v2935 = vpop.f32.mrf.mxu0
        %v2936 = vadd.f32 %v2887, %v2935
        %v2937 = vpop.f32.mrf.mxu0
        %v2938 = vadd.f32 %v2889, %v2937
        %2939 = vmatmul.bf16.gmra.mxu0 %v1386
        %v2940 = vpop.f32.mrf.mxu0
        %v2941 = vadd.f32 %v2892, %v2940
        %v2942 = vpop.f32.mrf.mxu0
        %v2943 = vadd.f32 %v2894, %v2942
        %2944 = vmatmul.bf16.gmra.mxu0 %v1390
        %v2945 = vpop.f32.mrf.mxu0
        %v2946 = vadd.f32 %v2897, %v2945
        %v2947 = vpop.f32.mrf.mxu0
        %v2948 = vadd.f32 %v2899, %v2947
        %2949 = vmatmul.bf16.gmra.mxu0 %v1394
        %v2950 = vpop.f32.mrf.mxu0
        %v2951 = vadd.f32 %v2902, %v2950
        %v2952 = vpop.f32.mrf.mxu0
        %v2953 = vadd.f32 %v2904, %v2952
        %2954 = vmatmul.bf16.gmra.mxu0 %v1398
        %v2955 = vpop.f32.mrf.mxu0
        %v2956 = vadd.f32 %v2907, %v2955
        %v2957 = vpop.f32.mrf.mxu0
        %v2958 = vadd.f32 %v2909, %v2957
        %2959 = vmatmul.bf16.gmra.mxu0 %v1402
        %v2960 = vpop.f32.mrf.mxu0
        %v2961 = vadd.f32 %v2912, %v2960
        %v2962 = vpop.f32.mrf.mxu0
        %v2963 = vadd.f32 %v2914, %v2962
        %2964 = vdwg.mxu0
        %v2965 = vmax.f32 %v2338, %v2730
        %v2966 = vmax.f32 %v2534, %v2926
        %v2967 = vmax.f32 %v2340, %v2732
        %v2968 = vmax.f32 %v2536, %v2928
        %v2969 = vmax.f32 %v2343, %v2735
        %v2970 = vmax.f32 %v2539, %v2931
        %v2971 = vmax.f32 %v2345, %v2737
        %v2972 = vmax.f32 %v2541, %v2933
        %v2973 = vmax.f32 %v2348, %v2740
        %v2974 = vmax.f32 %v2544, %v2936
        %v2975 = vmax.f32 %v2350, %v2742
        %v2976 = vmax.f32 %v2546, %v2938
        %v2977 = vmax.f32 %v2353, %v2745
        %v2978 = vmax.f32 %v2549, %v2941
        %v2979 = vmax.f32 %v2355, %v2747
        %v2980 = vmax.f32 %v2551, %v2943
        %v2981 = vmax.f32 %v2358, %v2750
        %v2982 = vmax.f32 %v2554, %v2946
        %v2983 = vmax.f32 %v2360, %v2752
        %v2984 = vmax.f32 %v2556, %v2948
        %v2985 = vmax.f32 %v2363, %v2755
        %v2986 = vmax.f32 %v2559, %v2951
        %v2987 = vmax.f32 %v2365, %v2757
        %v2988 = vmax.f32 %v2561, %v2953
        %v2989 = vmax.f32 %v2368, %v2760
        %v2990 = vmax.f32 %v2564, %v2956
        %v2991 = vmax.f32 %v2370, %v2762
        %v2992 = vmax.f32 %v2566, %v2958
        %v2993 = vmax.f32 %v2373, %v2765
        %v2994 = vmax.f32 %v2569, %v2961
        %v2995 = vmax.f32 %v2375, %v2767
        %v2996 = vmax.f32 %v2571, %v2963
        %vm2997 = vcmp.gt.f32.partialorder %v2965, 0.0
        %vm2998 = vcmp.gt.f32.partialorder %v2966, 0.0
        %vm2999 = vcmp.gt.f32.partialorder %v2967, 0.0
        %vm3000 = vcmp.gt.f32.partialorder %v2968, 0.0
        %vm3001 = vcmp.gt.f32.partialorder %v2969, 0.0
        %vm3002 = vcmp.gt.f32.partialorder %v2970, 0.0
        %vm3003 = vcmp.gt.f32.partialorder %v2971, 0.0
        %vm3004 = vcmp.gt.f32.partialorder %v2972, 0.0
        %vm3005 = vcmp.gt.f32.partialorder %v2973, 0.0
        %vm3006 = vcmp.gt.f32.partialorder %v2974, 0.0
        %vm3007 = vcmp.gt.f32.partialorder %v2975, 0.0
        %vm3008 = vcmp.gt.f32.partialorder %v2976, 0.0
        %vm3009 = vcmp.gt.f32.partialorder %v2977, 0.0
        %vm3010 = vcmp.gt.f32.partialorder %v2978, 0.0
        %vm3011 = vcmp.gt.f32.partialorder %v2979, 0.0
        %vm3012 = vcmp.gt.f32.partialorder %v2980, 0.0
        %vm3013 = vcmp.gt.f32.partialorder %v2981, 0.0
        %vm3014 = vcmp.gt.f32.partialorder %v2982, 0.0
        %vm3015 = vcmp.gt.f32.partialorder %v2983, 0.0
        %vm3016 = vcmp.gt.f32.partialorder %v2984, 0.0
        %vm3017 = vcmp.gt.f32.partialorder %v2985, 0.0
        %vm3018 = vcmp.gt.f32.partialorder %v2986, 0.0
        %vm3019 = vcmp.gt.f32.partialorder %v2987, 0.0
        %vm3020 = vcmp.gt.f32.partialorder %v2988, 0.0
        %vm3021 = vcmp.gt.f32.partialorder %v2989, 0.0
        %vm3022 = vcmp.gt.f32.partialorder %v2990, 0.0
        %vm3023 = vcmp.gt.f32.partialorder %v2991, 0.0
        %vm3024 = vcmp.gt.f32.partialorder %v2992, 0.0
        %vm3025 = vcmp.gt.f32.partialorder %v2993, 0.0
        %vm3026 = vcmp.gt.f32.partialorder %v2994, 0.0
        %vm3027 = vcmp.gt.f32.partialorder %v2995, 0.0
        %vm3028 = vcmp.gt.f32.partialorder %v2996, 0.0
        %v3029 = vmul.f32 %v2965, 0.01
        %v3030 = vmul.f32 %v2966, 0.01
        %v3031 = vmul.f32 %v2967, 0.01
        %v3032 = vmul.f32 %v2968, 0.01
        %v3033 = vmul.f32 %v2969, 0.01
        %v3034 = vmul.f32 %v2970, 0.01
        %v3035 = vmul.f32 %v2971, 0.01
        %v3036 = vmul.f32 %v2972, 0.01
        %v3037 = vmul.f32 %v2973, 0.01
        %v3038 = vmul.f32 %v2974, 0.01
        %v3039 = vmul.f32 %v2975, 0.01
        %v3040 = vmul.f32 %v2976, 0.01
        %v3041 = vmul.f32 %v2977, 0.01
        %v3042 = vmul.f32 %v2978, 0.01
        %v3043 = vmul.f32 %v2979, 0.01
        %v3044 = vmul.f32 %v2980, 0.01
        %v3045 = vmul.f32 %v2981, 0.01
        %v3046 = vmul.f32 %v2982, 0.01
        %v3047 = vmul.f32 %v2983, 0.01
        %v3048 = vmul.f32 %v2984, 0.01
        %v3049 = vmul.f32 %v2985, 0.01
        %v3050 = vmul.f32 %v2986, 0.01
        %v3051 = vmul.f32 %v2987, 0.01
        %v3052 = vmul.f32 %v2988, 0.01
        %v3053 = vmul.f32 %v2989, 0.01
        %v3054 = vmul.f32 %v2990, 0.01
        %v3055 = vmul.f32 %v2991, 0.01
        %v3056 = vmul.f32 %v2992, 0.01
        %v3057 = vmul.f32 %v2993, 0.01
        %v3058 = vmul.f32 %v2994, 0.01
        %v3059 = vmul.f32 %v2995, 0.01
        %v3060 = vmul.f32 %v2996, 0.01
        %v3061 = vsel %vm2997, %v2965, %v3029
        %v3062 = vsel %vm2998, %v2966, %v3030
        %v3063 = vsel %vm2999, %v2967, %v3031
        %v3064 = vsel %vm3000, %v2968, %v3032
        %v3065 = vsel %vm3001, %v2969, %v3033
        %v3066 = vsel %vm3002, %v2970, %v3034
        %v3067 = vsel %vm3003, %v2971, %v3035
        %v3068 = vsel %vm3004, %v2972, %v3036
        %v3069 = vsel %vm3005, %v2973, %v3037
        %v3070 = vsel %vm3006, %v2974, %v3038
        %v3071 = vsel %vm3007, %v2975, %v3039
        %v3072 = vsel %vm3008, %v2976, %v3040
        %v3073 = vsel %vm3009, %v2977, %v3041
        %v3074 = vsel %vm3010, %v2978, %v3042
        %v3075 = vsel %vm3011, %v2979, %v3043
        %v3076 = vsel %vm3012, %v2980, %v3044
        %v3077 = vsel %vm3013, %v2981, %v3045
        %v3078 = vsel %vm3014, %v2982, %v3046
        %v3079 = vsel %vm3015, %v2983, %v3047
        %v3080 = vsel %vm3016, %v2984, %v3048
        %v3081 = vsel %vm3017, %v2985, %v3049
        %v3082 = vsel %vm3018, %v2986, %v3050
        %v3083 = vsel %vm3019, %v2987, %v3051
        %v3084 = vsel %vm3020, %v2988, %v3052
        %v3085 = vsel %vm3021, %v2989, %v3053
        %v3086 = vsel %vm3022, %v2990, %v3054
        %v3087 = vsel %vm3023, %v2991, %v3055
        %v3088 = vsel %vm3024, %v2992, %v3056
        %v3089 = vsel %vm3025, %v2993, %v3057
        %v3090 = vsel %vm3026, %v2994, %v3058
        %v3091 = vsel %vm3027, %v2995, %v3059
        %v3092 = vsel %vm3028, %v2996, %v3060
        %v3093 = vld [vmem:[%s10] sm:$0xff]
        %v3094 = vld [vmem:[%s10 + $0x8] sm:$0xff]
        %v3095 = vld [vmem:[%s10 + $0x10] sm:$0xff]
        %v3096 = vld [vmem:[%s10 + $0x18] sm:$0xff]
        %v3097 = vld [vmem:[%s10 + $0x20] sm:$0xff]
        %v3098 = vld [vmem:[%s10 + $0x28] sm:$0xff]
        %v3099 = vld [vmem:[%s10 + $0x30] sm:$0xff]
        %v3100 = vld [vmem:[%s10 + $0x38] sm:$0xff]
        %v3101 = vld [vmem:[%s10 + $0x40] sm:$0xff]
        %v3102 = vld [vmem:[%s10 + $0x48] sm:$0xff]
        %v3103 = vld [vmem:[%s10 + $0x50] sm:$0xff]
        %v3104 = vld [vmem:[%s10 + $0x58] sm:$0xff]
        %v3105 = vld [vmem:[%s10 + $0x60] sm:$0xff]
        %v3106 = vld [vmem:[%s10 + $0x68] sm:$0xff]
        %v3107 = vld [vmem:[%s10 + $0x70] sm:$0xff]
        %v3108 = vld [vmem:[%s10 + $0x78] sm:$0xff]
        %v3109 = vld [vmem:[%s10 + $0x80] sm:$0xff]
        %v3110 = vld [vmem:[%s10 + $0x88] sm:$0xff]
        %v3111 = vld [vmem:[%s10 + $0x90] sm:$0xff]
        %v3112 = vld [vmem:[%s10 + $0x98] sm:$0xff]
        %v3113 = vld [vmem:[%s10 + $0xa0] sm:$0xff]
        %v3114 = vld [vmem:[%s10 + $0xa8] sm:$0xff]
        %v3115 = vld [vmem:[%s10 + $0xb0] sm:$0xff]
        %v3116 = vld [vmem:[%s10 + $0xb8] sm:$0xff]
        %v3117 = vld [vmem:[%s10 + $0xc0] sm:$0xff]
        %v3118 = vld [vmem:[%s10 + $0xc8] sm:$0xff]
        %v3119 = vld [vmem:[%s10 + $0xd0] sm:$0xff]
        %v3120 = vld [vmem:[%s10 + $0xd8] sm:$0xff]
        %v3121 = vld [vmem:[%s10 + $0xe0] sm:$0xff]
        %v3122 = vld [vmem:[%s10 + $0xe8] sm:$0xff]
        %v3123 = vld [vmem:[%s10 + $0xf0] sm:$0xff]
        %v3124 = vld [vmem:[%s10 + $0xf8] sm:$0xff]
        %v3125 = vld [vmem:[%s11] sm:$0x1]
        %v3127 = vperm.slane %v3125, 0
        %3129 = vmatpush.msra.mxu0 %v3108
        %3130 = vmatpush.msra.mxu0 %v3107
        %3131 = vmatpush.msra.mxu0 %v3106
        %3132 = vmatpush.msra.mxu0 %v3105
        %3133 = vmatpush.msra.mxu0 %v3104
        %3134 = vmatpush.msra.mxu0 %v3103
        %3135 = vmatpush.msra.mxu0 %v3102
        %3136 = vmatpush.msra.mxu0 %v3101
        %3137 = vmatpush.msra.mxu0 %v3100
        %3138 = vmatpush.msra.mxu0 %v3099
        %3139 = vmatpush.msra.mxu0 %v3098
        %3140 = vmatpush.msra.mxu0 %v3097
        %3141 = vmatpush.msra.mxu0 %v3096
        %3142 = vmatpush.msra.mxu0 %v3095
        %3143 = vmatpush.msra.mxu0 %v3094
        %3144 = vmatpush.msra.mxu0 %v3093
        %3145 = vmatmul.f32.gmra.mxu0 %v3061
        %v3146 = vpop.f32.mrf.mxu0
        %v3147 = vadd.f32 %v3127, %v3146
        %3148 = vmatmul.f32.gmra.mxu0 %v3063
        %v3149 = vpop.f32.mrf.mxu0
        %v3150 = vadd.f32 %v3127, %v3149
        %3151 = vmatmul.f32.gmra.mxu0 %v3065
        %v3152 = vpop.f32.mrf.mxu0
        %v3153 = vadd.f32 %v3127, %v3152
        %3154 = vmatmul.f32.gmra.mxu0 %v3067
        %v3155 = vpop.f32.mrf.mxu0
        %v3156 = vadd.f32 %v3127, %v3155
        %3157 = vmatmul.f32.gmra.mxu0 %v3069
        %v3158 = vpop.f32.mrf.mxu0
        %v3159 = vadd.f32 %v3127, %v3158
        %3160 = vmatmul.f32.gmra.mxu0 %v3071
        %v3161 = vpop.f32.mrf.mxu0
        %v3162 = vadd.f32 %v3127, %v3161
        %3163 = vmatmul.f32.gmra.mxu0 %v3073
        %v3164 = vpop.f32.mrf.mxu0
        %v3165 = vadd.f32 %v3127, %v3164
        %3166 = vmatmul.f32.gmra.mxu0 %v3075
        %v3167 = vpop.f32.mrf.mxu0
        %v3168 = vadd.f32 %v3127, %v3167
        %3169 = vmatmul.f32.gmra.mxu0 %v3077
        %v3170 = vpop.f32.mrf.mxu0
        %v3171 = vadd.f32 %v3127, %v3170
        %3172 = vmatmul.f32.gmra.mxu0 %v3079
        %v3173 = vpop.f32.mrf.mxu0
        %v3174 = vadd.f32 %v3127, %v3173
        %3175 = vmatmul.f32.gmra.mxu0 %v3081
        %v3176 = vpop.f32.mrf.mxu0
        %v3177 = vadd.f32 %v3127, %v3176
        %3178 = vmatmul.f32.gmra.mxu0 %v3083
        %v3179 = vpop.f32.mrf.mxu0
        %v3180 = vadd.f32 %v3127, %v3179
        %3181 = vmatmul.f32.gmra.mxu0 %v3085
        %v3182 = vpop.f32.mrf.mxu0
        %v3183 = vadd.f32 %v3127, %v3182
        %3184 = vmatmul.f32.gmra.mxu0 %v3087
        %v3185 = vpop.f32.mrf.mxu0
        %v3186 = vadd.f32 %v3127, %v3185
        %3187 = vmatmul.f32.gmra.mxu0 %v3089
        %v3188 = vpop.f32.mrf.mxu0
        %v3189 = vadd.f32 %v3127, %v3188
        %3190 = vmatmul.f32.gmra.mxu0 %v3091
        %v3191 = vpop.f32.mrf.mxu0
        %v3192 = vadd.f32 %v3127, %v3191
        %3193 = vdwg.mxu0
        %3194 = vmatpush.msra.mxu0 %v3124
        %3195 = vmatpush.msra.mxu0 %v3123
        %3196 = vmatpush.msra.mxu0 %v3122
        %3197 = vmatpush.msra.mxu0 %v3121
        %3198 = vmatpush.msra.mxu0 %v3120
        %3199 = vmatpush.msra.mxu0 %v3119
        %3200 = vmatpush.msra.mxu0 %v3118
        %3201 = vmatpush.msra.mxu0 %v3117
        %3202 = vmatpush.msra.mxu0 %v3116
        %3203 = vmatpush.msra.mxu0 %v3115
        %3204 = vmatpush.msra.mxu0 %v3114
        %3205 = vmatpush.msra.mxu0 %v3113
        %3206 = vmatpush.msra.mxu0 %v3112
        %3207 = vmatpush.msra.mxu0 %v3111
        %3208 = vmatpush.msra.mxu0 %v3110
        %3209 = vmatpush.msra.mxu0 %v3109
        %3210 = vmatmul.f32.gmra.mxu0 %v3062
        %v3211 = vpop.f32.mrf.mxu0
        %v3212 = vadd.f32 %v3147, %v3211
        %3213 = vmatmul.f32.gmra.mxu0 %v3064
        %v3214 = vpop.f32.mrf.mxu0
        %v3215 = vadd.f32 %v3150, %v3214
        %3216 = vmatmul.f32.gmra.mxu0 %v3066
        %v3217 = vpop.f32.mrf.mxu0
        %v3218 = vadd.f32 %v3153, %v3217
        %3219 = vmatmul.f32.gmra.mxu0 %v3068
        %v3220 = vpop.f32.mrf.mxu0
        %v3221 = vadd.f32 %v3156, %v3220
        %3222 = vmatmul.f32.gmra.mxu0 %v3070
        %v3223 = vpop.f32.mrf.mxu0
        %v3224 = vadd.f32 %v3159, %v3223
        %3225 = vmatmul.f32.gmra.mxu0 %v3072
        %v3226 = vpop.f32.mrf.mxu0
        %v3227 = vadd.f32 %v3162, %v3226
        %3228 = vmatmul.f32.gmra.mxu0 %v3074
        %v3229 = vpop.f32.mrf.mxu0
        %v3230 = vadd.f32 %v3165, %v3229
        %3231 = vmatmul.f32.gmra.mxu0 %v3076
        %v3232 = vpop.f32.mrf.mxu0
        %v3233 = vadd.f32 %v3168, %v3232
        %3234 = vmatmul.f32.gmra.mxu0 %v3078
        %v3235 = vpop.f32.mrf.mxu0
        %v3236 = vadd.f32 %v3171, %v3235
        %3237 = vmatmul.f32.gmra.mxu0 %v3080
        %v3238 = vpop.f32.mrf.mxu0
        %v3239 = vadd.f32 %v3174, %v3238
        %3240 = vmatmul.f32.gmra.mxu0 %v3082
        %v3241 = vpop.f32.mrf.mxu0
        %v3242 = vadd.f32 %v3177, %v3241
        %3243 = vmatmul.f32.gmra.mxu0 %v3084
        %v3244 = vpop.f32.mrf.mxu0
        %v3245 = vadd.f32 %v3180, %v3244
        %3246 = vmatmul.f32.gmra.mxu0 %v3086
        %v3247 = vpop.f32.mrf.mxu0
        %v3248 = vadd.f32 %v3183, %v3247
        %3249 = vmatmul.f32.gmra.mxu0 %v3088
        %v3250 = vpop.f32.mrf.mxu0
        %v3251 = vadd.f32 %v3186, %v3250
        %3252 = vmatmul.f32.gmra.mxu0 %v3090
        %v3253 = vpop.f32.mrf.mxu0
        %v3254 = vadd.f32 %v3189, %v3253
        %3255 = vmatmul.f32.gmra.mxu0 %v3092
        %v3256 = vpop.f32.mrf.mxu0
        %v3257 = vadd.f32 %v3192, %v3256
        %3258 = vdwg.mxu0
        %3259 = vst [vmem:[%s432] sm:$0xff] %v3212
        %3260 = vst [vmem:[%s432 + $0x8] sm:$0xff] %v3215
        %3261 = vst [vmem:[%s432 + $0x10] sm:$0xff] %v3218
        %3262 = vst [vmem:[%s432 + $0x18] sm:$0xff] %v3221
        %3263 = vst [vmem:[%s432 + $0x20] sm:$0xff] %v3224
        %3264 = vst [vmem:[%s432 + $0x28] sm:$0xff] %v3227
        %3265 = vst [vmem:[%s432 + $0x30] sm:$0xff] %v3230
        %3266 = vst [vmem:[%s432 + $0x38] sm:$0xff] %v3233
        %3267 = vst [vmem:[%s432 + $0x40] sm:$0xff] %v3236
        %3268 = vst [vmem:[%s432 + $0x48] sm:$0xff] %v3239
        %3269 = vst [vmem:[%s432 + $0x50] sm:$0xff] %v3242
        %3270 = vst [vmem:[%s432 + $0x58] sm:$0xff] %v3245
        %3271 = vst [vmem:[%s432 + $0x60] sm:$0xff] %v3248
        %3272 = vst [vmem:[%s432 + $0x68] sm:$0xff] %v3251
        %3273 = vst [vmem:[%s432 + $0x70] sm:$0xff] %v3254
        %3274 = vst [vmem:[%s432 + $0x78] sm:$0xff] %v3257
        %s3275 = smul.u32 16, %s24
        %p3276 = scmp.lt.s32.totalorder %s3275, 31
        %s3277 = scalar_select %p3276, %s3275, 31
        %s3278 = smul.addr %s3277, 8
        %s3279 = scalar_lea.vmem %s12, %s3278
        // Predicated region
        $region73: #{cconvsa_forward.1} parent=67 // pred_check
          %p3280 = pneg %p299
        $region74: #{cconvsa_forward.1} parent=67 // pred_check_branch
          %3282 = sbr.rel (%p3280) target = $region76
        $region75: #{cconvsa_forward.1} parent=67 // pred_region
          %s3283 = smul.u32 16, %s24
        $region76: #{cconvsa_forward.1} parent=67 // pred_fallthru
          _
      $region68: #{cconvsa_forward.1} parent=5 // pred_fallthru
        _
      %p3284 = scmp.le.s32.totalorder 2, %s19
      // Predicated region
      $region77: #{cconvsa_forward.1} parent=5 // pred_check
        %p3285 = pneg %p3284
      $region78: #{cconvsa_forward.1} parent=5 // pred_check_branch
        %3287 = sbr.rel (%p3285) target = $region80
      $region79: #{cconvsa_forward.1} parent=5 // pred_region
        %s3288 = ssub.s32 %s19, 2
        // Predicated region
        $region81: #{cconvsa_forward.1} parent=79 // pred_check
          %p3289 = pneg %p305
        $region82: #{cconvsa_forward.1} parent=79 // pred_check_branch
          %3291 = sbr.rel (%p3289) target = $region84
        $region83: #{cconvsa_forward.1} parent=79 // pred_region
          %s3292 = smul.u32 16, %s25
          %p3293 = scmp.lt.s32.totalorder %s3292, 31
          %s3294 = scalar_select %p3293, %s3292, 31
          %s3295 = smul.addr %s3294, 8
          %s3296 = scalar_lea.vmem %s12, %s3295
        $region84: #{cconvsa_forward.1} parent=79 // pred_fallthru
          _
      $region80: #{cconvsa_forward.1} parent=5 // pred_fallthru
        _
    $region6: #{cconvsa_forward.1} parent=1 // loop_footer
      %s23 = sadd.s32 1, %s19
    $region7: #{cconvsa_forward.1} parent=1 // loop_footer_branch
      %18 = sbr.rel target = $region3
    $region8: #{cconvsa_forward.1} parent=1 // loop_exit
      _
    %3297 = vsyncpa [#allocation3], 1
    %s3298 = scalar_lea.sflag [#allocation3], 1
    %3299 = vsyncpa %s3298, 1

</llo_original>
